<compile_context>
chip_gen: v6e
topology: v6e:2x2x1
jax: 0.10.0
libtpu: 0.0.40
codegen_flags: <defaults>
</compile_context>

<pallas_src>
import functools

import jax
import jax.numpy as jnp
from jax import lax
from jax.experimental import pallas as pl
from jax.experimental.pallas import tpu as pltpu

LEAKY_SLOPE = 0.01   # PyTorch LeakyReLU default negative_slope
BN_EPS = 1e-5        # PyTorch BatchNorm2d default eps


# --------------------------------------------------------------------------- #
# Fused kernel
# --------------------------------------------------------------------------- #
def _fused_block_kernel(x_ref, w1_ref, b1_ref, w2_ref, b2_ref, w3_ref, b3_ref,
                        wd_ref, bd_ref, out_ref, pad1_ref, pad2_ref,
                        *, dilation, stride, h, w, ho, wo, use_downsample):
    """Whole AligenResidualBlock for one batch element.

    x_ref      : (1, H, W, Cin)        input tile
    w{1,2,3}   : (9*C, Cout)           depthwise x pointwise x BN-scale folded weights
    b{1,2,3}   : (1, Cout)             pointwise-bias + BN folded bias
    wd, bd     : (Cin, Cout), (1,Cout) 1x1 downsample conv
    out_ref    : (1, Ho, Wo, Cout)
    pad1_ref   : (H+2d, W+2d, Cin)     VMEM halo buffer (padded input / shortcut source)
    pad2_ref   : (H+2d, W+2d, Cout)    VMEM halo buffer (reused for stage-2 and stage-3 input)
    """
    d = dilation
    cin = x_ref.shape[-1]
    cout = out_ref.shape[-1]

    def sep_stage(pad_ref, oh, ow, st, wt_ref, bias_ref):
        """One SparableConv: 9 (possibly strided) taps -> im2col matmul -> bias -> LeakyReLU."""
        taps = []
        for kh in range(3):
            for kw in range(3):
                if st == 1:
                    t = pad_ref[kh * d:kh * d + oh, kw * d:kw * d + ow, :]
                else:
                    t = pad_ref[pl.ds(kh * d, oh, st), pl.ds(kw * d, ow, st), :]
                taps.append(t)
        t = jnp.concatenate(taps, axis=-1).reshape(oh * ow, -1)          # (oh*ow, 9*C)
        y = jnp.dot(t, wt_ref[...], preferred_element_type=jnp.float32)  # MXU
        y = y + bias_ref[...]
        return jnp.where(y > 0, y, LEAKY_SLOPE * y)                      # (oh*ow, Cout)

    # --- Stage 0: zero the halo buffers and place the input tile into its interior ----------
    pad1_ref[...] = jnp.zeros_like(pad1_ref)
    pad2_ref[...] = jnp.zeros_like(pad2_ref)
    pad1_ref[d:d + h, d:d + w, :] = x_ref[0].astype(jnp.float32)

    # --- Stage 1: SparableConv(Cin -> Cout), stride 1 ----------------------------------------
    y1 = sep_stage(pad1_ref, h, w, 1, w1_ref, b1_ref)
    pad2_ref[d:d + h, d:d + w, :] = y1.reshape(h, w, cout)

    # --- Stage 2: SparableConv(Cout -> Cout), stride 1 ---------------------------------------
    # Taps are loaded as values before the store below, so reusing pad2 in-place is safe.
    y2 = sep_stage(pad2_ref, h, w, 1, w2_ref, b2_ref)
    pad2_ref[d:d + h, d:d + w, :] = y2.reshape(h, w, cout)

    # --- Stage 3: SparableConv(Cout -> Cout), stride `stride` --------------------------------
    # Only the strided output positions are gathered and fed to the matmul.
    y3 = sep_stage(pad2_ref, ho, wo, stride, w3_ref, b3_ref)

    # --- Shortcut: 1x1 stride-`stride` conv (or identity) + residual add ---------------------
    if use_downsample:
        if stride == 1:
            sc = pad1_ref[d:d + ho, d:d + wo, :]
        else:
            sc = pad1_ref[pl.ds(d, ho, stride), pl.ds(d, wo, stride), :]
        sc = sc.reshape(ho * wo, cin)
        y_short = jnp.dot(sc, wd_ref[...], preferred_element_type=jnp.float32) + bd_ref[...]
    else:
        # stride == 1 and Cin == Cout: identity shortcut.
        y_short = pad1_ref[d:d + h, d:d + w, :].reshape(ho * wo, cout)

    out = y3 + y_short
    out_ref[...] = out.reshape(1, ho, wo, cout).astype(out_ref.dtype)


# --------------------------------------------------------------------------- #
# Host-side parameter folding (depthwise x pointwise x BN)
# --------------------------------------------------------------------------- #
def _fold_sepconv(dw, pw_w, pw_b, gamma, beta, mean, var):
    """dw (9,Cin), pw_w (Cin,Cout), pw_b/gamma/beta/mean/var (Cout,) ->
       folded weight (9*Cin, Cout) and bias (1, Cout)."""
    cin, cout = pw_w.shape
    scale = gamma / jnp.sqrt(var + BN_EPS)                               # (Cout,)
    wt = dw[:, :, None] * pw_w[None, :, :] * scale[None, None, :]        # (9, Cin, Cout)
    wt = wt.reshape(9 * cin, cout)
    bias = (pw_b * scale + beta - mean * scale).reshape(1, cout)
    return wt.astype(jnp.float32), bias.astype(jnp.float32)


# --------------------------------------------------------------------------- #
# Public wrapper (PyTorch NCHW interface)
# --------------------------------------------------------------------------- #
def aligen_residual_block(x_nchw, params, *, stride=2, dilation=1):
    x = jnp.transpose(x_nchw, (0, 2, 3, 1))                              # NCHW -> NHWC
    n, h, w, cin = x.shape
    d = dilation

    w1, b1 = _fold_sepconv(*params["block1"])
    w2, b2 = _fold_sepconv(*params["block2"])
    w3, b3 = _fold_sepconv(*params["block3"])
    cout = b1.shape[-1]

    ho = (h - 1) // stride + 1
    wo = (w - 1) // stride + 1
    hp, wp = h + 2 * d, w + 2 * d
    use_down = (stride != 1) or (cin != cout)

    wd = params["down_w"].astype(jnp.float32)
    bd = params["down_b"].reshape(1, cout).astype(jnp.float32)

    kernel = functools.partial(
        _fused_block_kernel, dilation=d, stride=stride, h=h, w=w, ho=ho, wo=wo,
        use_downsample=use_down)

    out = pl.pallas_call(
        kernel,
        out_shape=jax.ShapeDtypeStruct((n, ho, wo, cout), x.dtype),
        grid=(n,),
        in_specs=[
            pl.BlockSpec((1, h, w, cin), lambda i: (i, 0, 0, 0)),
            pl.BlockSpec((9 * cin, cout), lambda i: (0, 0)),
            pl.BlockSpec((1, cout), lambda i: (0, 0)),
            pl.BlockSpec((9 * cout, cout), lambda i: (0, 0)),
            pl.BlockSpec((1, cout), lambda i: (0, 0)),
            pl.BlockSpec((9 * cout, cout), lambda i: (0, 0)),
            pl.BlockSpec((1, cout), lambda i: (0, 0)),
            pl.BlockSpec((cin, cout), lambda i: (0, 0)),
            pl.BlockSpec((1, cout), lambda i: (0, 0)),
        ],
        out_specs=pl.BlockSpec((1, ho, wo, cout), lambda i: (i, 0, 0, 0)),
        scratch_shapes=[
            pltpu.VMEM((hp, wp, cin), jnp.float32),
            pltpu.VMEM((hp, wp, cout), jnp.float32),
        ],
        compiler_params=pltpu.CompilerParams(dimension_semantics=("parallel",)),
    )(x, w1, b1, w2, b2, w3, b3, wd, bd)

    return jnp.transpose(out, (0, 3, 1, 2))                              # NHWC -> NCHW


# --------------------------------------------------------------------------- #
# Pure-JAX reference (XLA convs) for a correctness check
# --------------------------------------------------------------------------- #
def _sepconv_ref(x, p, *, stride, dilation):
    dw, pw_w, pw_b, gamma, beta, mean, var = p
    cin = dw.shape[1]
    d = dilation
    dw_k = dw.reshape(3, 3, 1, cin)                                      # HWIO depthwise
    y = lax.conv_general_dilated(
        x, dw_k, window_strides=(stride, stride), padding=[(d, d), (d, d)],
        rhs_dilation=(d, d), dimension_numbers=("NHWC", "HWIO", "NHWC"),
        feature_group_count=cin)
    y = y @ pw_w + pw_b
    y = (y - mean) / jnp.sqrt(var + BN_EPS) * gamma + beta
    return jnp.where(y > 0, y, LEAKY_SLOPE * y)


def aligen_residual_block_ref(x_nchw, params, *, stride=2, dilation=1):
    x = jnp.transpose(x_nchw, (0, 2, 3, 1))
    short = x
    y = _sepconv_ref(x, params["block1"], stride=1, dilation=dilation)
    y = _sepconv_ref(y, params["block2"], stride=1, dilation=dilation)
    y = _sepconv_ref(y, params["block3"], stride=stride, dilation=dilation)
    cin, cout = params["down_w"].shape
    if stride != 1 or cin != cout:
        short = short[:, ::stride, ::stride, :] @ params["down_w"] + params["down_b"]
    return jnp.transpose(y + short, (0, 3, 1, 2))


# --------------------------------------------------------------------------- #
# Deterministic parameter initialization (shapes from the module's __init__)
# --------------------------------------------------------------------------- #
def _init_sepconv(key, cin, cout):
    ks = jax.random.split(key, 7)
    dw = jax.random.normal(ks[0], (9, cin), jnp.float32) * 0.1           # 3x3 depthwise (kh*3+kw, c)
    pw_w = jax.random.normal(ks[1], (cin, cout), jnp.float32) * 0.1      # 1x1 conv weight
    pw_b = jax.random.normal(ks[2], (cout,), jnp.float32) * 0.1
    gamma = jax.random.uniform(ks[3], (cout,), jnp.float32, 0.5, 1.5)
    beta = jax.random.normal(ks[4], (cout,), jnp.float32) * 0.1
    mean = jax.random.normal(ks[5], (cout,), jnp.float32) * 0.1
    var = jax.random.uniform(ks[6], (cout,), jnp.float32, 0.5, 1.5)
    return (dw, pw_w, pw_b, gamma, beta, mean, var)


def init_params(key, in_channel, out_channel):
    k1, k2, k3, k4, k5 = jax.random.split(key, 5)
    return {
        "block1": _init_sepconv(k1, in_channel, out_channel),
        "block2": _init_sepconv(k2, out_channel, out_channel),
        "block3": _init_sepconv(k3, out_channel, out_channel),
        "down_w": jax.random.normal(k4, (in_channel, out_channel), jnp.float32) * 0.1,
        "down_b": jax.random.normal(k5, (out_channel,), jnp.float32) * 0.1,
    }


# --------------------------------------------------------------------------- #
if __name__ == "__main__":
    key = jax.random.PRNGKey(0)
    k_params, k_x = jax.random.split(key)

    N, C_IN, C_OUT, H, W = 2, 4, 8, 16, 16
    STRIDE, DILATION = 2, 1

    params = init_params(k_params, C_IN, C_OUT)
    x = jax.random.normal(k_x, (N, C_IN, H, W), jnp.float32)             # NCHW, like PyTorch

    out = aligen_residual_block(x, params, stride=STRIDE, dilation=DILATION)
    out = jax.block_until_ready(out)

    assert out.shape == (N, C_OUT, H // STRIDE, W // STRIDE), out.shape
    assert jnp.all(jnp.isfinite(out))

    ref = jax.block_until_ready(
        aligen_residual_block_ref(x, params, stride=STRIDE, dilation=DILATION))
    assert jnp.allclose(out, ref, atol=1e-2, rtol=1e-2), float(jnp.max(jnp.abs(out - ref)))

    print("KERNEL_OK")
</pallas_src>

<mosaic_0001>
module attributes {stable_mosaic.version = 11 : i64} {
  func.func @_fused_block_kernel(%arg0: i32, %arg1: memref<1x16x16x4xf32, #tpu.memory_space<vmem>>, %arg2: memref<36x8xf32, #tpu.memory_space<vmem>>, %arg3: memref<1x8xf32, #tpu.memory_space<vmem>>, %arg4: memref<72x8xf32, #tpu.memory_space<vmem>>, %arg5: memref<1x8xf32, #tpu.memory_space<vmem>>, %arg6: memref<72x8xf32, #tpu.memory_space<vmem>>, %arg7: memref<1x8xf32, #tpu.memory_space<vmem>>, %arg8: memref<4x8xf32, #tpu.memory_space<vmem>>, %arg9: memref<1x8xf32, #tpu.memory_space<vmem>>, %arg10: memref<1x8x8x8xf32, #tpu.memory_space<vmem>>, %arg11: memref<18x18x4xf32, #tpu.memory_space<vmem>>, %arg12: memref<18x18x8xf32, #tpu.memory_space<vmem>>) attributes {dimension_semantics = [#tpu.dimension_semantics<parallel>], iteration_bounds = array<i64: 2>, scalar_prefetch = 0 : i64, scratch_operands = 2 : i64, tpu.core_type = #tpu.core_type<tc>, window_params = [{transform_indices = @transform_0, window_bounds = array<i64: 1, 16, 16, 4>}, {pipeline_mode = #tpu.pipeline_mode<synchronous>, transform_indices = @transform_1, window_bounds = array<i64: 36, 8>}, {pipeline_mode = #tpu.pipeline_mode<synchronous>, transform_indices = @transform_2, window_bounds = array<i64: 1, 8>}, {pipeline_mode = #tpu.pipeline_mode<synchronous>, transform_indices = @transform_3, window_bounds = array<i64: 72, 8>}, {pipeline_mode = #tpu.pipeline_mode<synchronous>, transform_indices = @transform_4, window_bounds = array<i64: 1, 8>}, {pipeline_mode = #tpu.pipeline_mode<synchronous>, transform_indices = @transform_5, window_bounds = array<i64: 72, 8>}, {pipeline_mode = #tpu.pipeline_mode<synchronous>, transform_indices = @transform_6, window_bounds = array<i64: 1, 8>}, {pipeline_mode = #tpu.pipeline_mode<synchronous>, transform_indices = @transform_7, window_bounds = array<i64: 4, 8>}, {pipeline_mode = #tpu.pipeline_mode<synchronous>, transform_indices = @transform_8, window_bounds = array<i64: 1, 8>}, {transform_indices = @transform_9, window_bounds = array<i64: 1, 8, 8, 8>}]} {
    %cst = arith.constant 0.000000e+00 : f32
    %0 = vector.broadcast %cst : f32 to vector<18x18x4xf32>
    %c0 = arith.constant 0 : index
    %c0_0 = arith.constant 0 : index
    %c0_1 = arith.constant 0 : index
    %1 = vector.load %arg11[%c0, %c0_0, %c0_1] : memref<18x18x4xf32, #tpu.memory_space<vmem>>, vector<18x18x4xf32>
    tpu.vector_store %arg11[%c0, %c0_0, %c0_1], %0 {strides = array<i32>} : memref<18x18x4xf32, #tpu.memory_space<vmem>>, vector<18x18x4xf32>,
    %cst_2 = arith.constant 0.000000e+00 : f32
    %2 = vector.broadcast %cst_2 : f32 to vector<18x18x8xf32>
    %c0_3 = arith.constant 0 : index
    %c0_4 = arith.constant 0 : index
    %c0_5 = arith.constant 0 : index
    %3 = vector.load %arg12[%c0_3, %c0_4, %c0_5] : memref<18x18x8xf32, #tpu.memory_space<vmem>>, vector<18x18x8xf32>
    tpu.vector_store %arg12[%c0_3, %c0_4, %c0_5], %2 {strides = array<i32>} : memref<18x18x8xf32, #tpu.memory_space<vmem>>, vector<18x18x8xf32>,
    %c0_6 = arith.constant 0 : index
    %c0_7 = arith.constant 0 : index
    %c0_8 = arith.constant 0 : index
    %c0_9 = arith.constant 0 : index
    %4 = vector.load %arg1[%c0_6, %c0_7, %c0_8, %c0_9] : memref<1x16x16x4xf32, #tpu.memory_space<vmem>>, vector<1x16x16x4xf32>
    %5 = vector.shape_cast %4 : vector<1x16x16x4xf32> to vector<16x16x4xf32>
    %c1 = arith.constant 1 : index
    %c1_10 = arith.constant 1 : index
    %c0_11 = arith.constant 0 : index
    %6 = vector.load %arg11[%c1, %c1_10, %c0_11] : memref<18x18x4xf32, #tpu.memory_space<vmem>>, vector<16x16x4xf32>
    tpu.vector_store %arg11[%c1, %c1_10, %c0_11], %5 {strides = array<i32>} : memref<18x18x4xf32, #tpu.memory_space<vmem>>, vector<16x16x4xf32>,
    %c0_12 = arith.constant 0 : index
    %c0_13 = arith.constant 0 : index
    %c0_14 = arith.constant 0 : index
    %7 = vector.load %arg11[%c0_12, %c0_13, %c0_14] : memref<18x18x4xf32, #tpu.memory_space<vmem>>, vector<16x16x4xf32>
    %c0_15 = arith.constant 0 : index
    %c1_16 = arith.constant 1 : index
    %c0_17 = arith.constant 0 : index
    %8 = vector.load %arg11[%c0_15, %c1_16, %c0_17] : memref<18x18x4xf32, #tpu.memory_space<vmem>>, vector<16x16x4xf32>
    %c0_18 = arith.constant 0 : index
    %c2 = arith.constant 2 : index
    %c0_19 = arith.constant 0 : index
    %9 = vector.load %arg11[%c0_18, %c2, %c0_19] : memref<18x18x4xf32, #tpu.memory_space<vmem>>, vector<16x16x4xf32>
    %c1_20 = arith.constant 1 : index
    %c0_21 = arith.constant 0 : index
    %c0_22 = arith.constant 0 : index
    %10 = vector.load %arg11[%c1_20, %c0_21, %c0_22] : memref<18x18x4xf32, #tpu.memory_space<vmem>>, vector<16x16x4xf32>
    %c1_23 = arith.constant 1 : index
    %c1_24 = arith.constant 1 : index
    %c0_25 = arith.constant 0 : index
    %11 = vector.load %arg11[%c1_23, %c1_24, %c0_25] : memref<18x18x4xf32, #tpu.memory_space<vmem>>, vector<16x16x4xf32>
    %c1_26 = arith.constant 1 : index
    %c2_27 = arith.constant 2 : index
    %c0_28 = arith.constant 0 : index
    %12 = vector.load %arg11[%c1_26, %c2_27, %c0_28] : memref<18x18x4xf32, #tpu.memory_space<vmem>>, vector<16x16x4xf32>
    %c2_29 = arith.constant 2 : index
    %c0_30 = arith.constant 0 : index
    %c0_31 = arith.constant 0 : index
    %13 = vector.load %arg11[%c2_29, %c0_30, %c0_31] : memref<18x18x4xf32, #tpu.memory_space<vmem>>, vector<16x16x4xf32>
    %c2_32 = arith.constant 2 : index
    %c1_33 = arith.constant 1 : index
    %c0_34 = arith.constant 0 : index
    %14 = vector.load %arg11[%c2_32, %c1_33, %c0_34] : memref<18x18x4xf32, #tpu.memory_space<vmem>>, vector<16x16x4xf32>
    %c2_35 = arith.constant 2 : index
    %c2_36 = arith.constant 2 : index
    %c0_37 = arith.constant 0 : index
    %15 = vector.load %arg11[%c2_35, %c2_36, %c0_37] : memref<18x18x4xf32, #tpu.memory_space<vmem>>, vector<16x16x4xf32>
    %16 = tpu.concatenate %7, %8, %9, %10, %11, %12, %13, %14, %15 in 2 : vector<16x16x4xf32>, vector<16x16x4xf32>, vector<16x16x4xf32>, vector<16x16x4xf32>, vector<16x16x4xf32>, vector<16x16x4xf32>, vector<16x16x4xf32>, vector<16x16x4xf32>, vector<16x16x4xf32> -> vector<16x16x36xf32>
    %17 = vector.shape_cast %16 : vector<16x16x36xf32> to vector<256x36xf32>
    %c0_38 = arith.constant 0 : index
    %c0_39 = arith.constant 0 : index
    %18 = vector.load %arg2[%c0_38, %c0_39] : memref<36x8xf32, #tpu.memory_space<vmem>>, vector<36x8xf32>
    %cst_40 = arith.constant dense<0.000000e+00> : vector<256x8xf32>
    %19 = tpu.matmul %17, %18, %cst_40 {dimension_numbers = #tpu.dot_dimension_numbers<[1], [0], [0], [1], [0, 0, 1, 1], [], []>} : vector<256x36xf32>, vector<36x8xf32>, vector<256x8xf32> -> vector<256x8xf32>
    %c0_41 = arith.constant 0 : index
    %c0_42 = arith.constant 0 : index
    %20 = vector.load %arg3[%c0_41, %c0_42] : memref<1x8xf32, #tpu.memory_space<vmem>>, vector<1x8xf32>
    %21 = vector.broadcast %20 : vector<1x8xf32> to vector<256x8xf32>
    %22 = arith.addf %19, %21 : vector<256x8xf32>
    %cst_43 = arith.constant 0.000000e+00 : f32
    %23 = vector.broadcast %cst_43 : f32 to vector<256x8xf32>
    %24 = arith.cmpf ogt, %22, %23 : vector<256x8xf32>
    %cst_44 = arith.constant 0.00999999977 : f32
    %25 = vector.broadcast %cst_44 : f32 to vector<256x8xf32>
    %26 = arith.mulf %25, %22 : vector<256x8xf32>
    %27 = arith.select %24, %22, %26 : vector<256x8xi1>, vector<256x8xf32>
    %28 = vector.shape_cast %27 : vector<256x8xf32> to vector<16x16x8xf32>
    %c1_45 = arith.constant 1 : index
    %c1_46 = arith.constant 1 : index
    %c0_47 = arith.constant 0 : index
    %29 = vector.load %arg12[%c1_45, %c1_46, %c0_47] : memref<18x18x8xf32, #tpu.memory_space<vmem>>, vector<16x16x8xf32>
    tpu.vector_store %arg12[%c1_45, %c1_46, %c0_47], %28 {strides = array<i32>} : memref<18x18x8xf32, #tpu.memory_space<vmem>>, vector<16x16x8xf32>,
    %c0_48 = arith.constant 0 : index
    %c0_49 = arith.constant 0 : index
    %c0_50 = arith.constant 0 : index
    %30 = vector.load %arg12[%c0_48, %c0_49, %c0_50] : memref<18x18x8xf32, #tpu.memory_space<vmem>>, vector<16x16x8xf32>
    %c0_51 = arith.constant 0 : index
    %c1_52 = arith.constant 1 : index
    %c0_53 = arith.constant 0 : index
    %31 = vector.load %arg12[%c0_51, %c1_52, %c0_53] : memref<18x18x8xf32, #tpu.memory_space<vmem>>, vector<16x16x8xf32>
    %c0_54 = arith.constant 0 : index
    %c2_55 = arith.constant 2 : index
    %c0_56 = arith.constant 0 : index
    %32 = vector.load %arg12[%c0_54, %c2_55, %c0_56] : memref<18x18x8xf32, #tpu.memory_space<vmem>>, vector<16x16x8xf32>
    %c1_57 = arith.constant 1 : index
    %c0_58 = arith.constant 0 : index
    %c0_59 = arith.constant 0 : index
    %33 = vector.load %arg12[%c1_57, %c0_58, %c0_59] : memref<18x18x8xf32, #tpu.memory_space<vmem>>, vector<16x16x8xf32>
    %c1_60 = arith.constant 1 : index
    %c1_61 = arith.constant 1 : index
    %c0_62 = arith.constant 0 : index
    %34 = vector.load %arg12[%c1_60, %c1_61, %c0_62] : memref<18x18x8xf32, #tpu.memory_space<vmem>>, vector<16x16x8xf32>
    %c1_63 = arith.constant 1 : index
    %c2_64 = arith.constant 2 : index
    %c0_65 = arith.constant 0 : index
    %35 = vector.load %arg12[%c1_63, %c2_64, %c0_65] : memref<18x18x8xf32, #tpu.memory_space<vmem>>, vector<16x16x8xf32>
    %c2_66 = arith.constant 2 : index
    %c0_67 = arith.constant 0 : index
    %c0_68 = arith.constant 0 : index
    %36 = vector.load %arg12[%c2_66, %c0_67, %c0_68] : memref<18x18x8xf32, #tpu.memory_space<vmem>>, vector<16x16x8xf32>
    %c2_69 = arith.constant 2 : index
    %c1_70 = arith.constant 1 : index
    %c0_71 = arith.constant 0 : index
    %37 = vector.load %arg12[%c2_69, %c1_70, %c0_71] : memref<18x18x8xf32, #tpu.memory_space<vmem>>, vector<16x16x8xf32>
    %c2_72 = arith.constant 2 : index
    %c2_73 = arith.constant 2 : index
    %c0_74 = arith.constant 0 : index
    %38 = vector.load %arg12[%c2_72, %c2_73, %c0_74] : memref<18x18x8xf32, #tpu.memory_space<vmem>>, vector<16x16x8xf32>
    %39 = tpu.concatenate %30, %31, %32, %33, %34, %35, %36, %37, %38 in 2 : vector<16x16x8xf32>, vector<16x16x8xf32>, vector<16x16x8xf32>, vector<16x16x8xf32>, vector<16x16x8xf32>, vector<16x16x8xf32>, vector<16x16x8xf32>, vector<16x16x8xf32>, vector<16x16x8xf32> -> vector<16x16x72xf32>
    %40 = vector.shape_cast %39 : vector<16x16x72xf32> to vector<256x72xf32>
    %c0_75 = arith.constant 0 : index
    %c0_76 = arith.constant 0 : index
    %41 = vector.load %arg4[%c0_75, %c0_76] : memref<72x8xf32, #tpu.memory_space<vmem>>, vector<72x8xf32>
    %cst_77 = arith.constant dense<0.000000e+00> : vector<256x8xf32>
    %42 = tpu.matmul %40, %41, %cst_77 {dimension_numbers = #tpu.dot_dimension_numbers<[1], [0], [0], [1], [0, 0, 1, 1], [], []>} : vector<256x72xf32>, vector<72x8xf32>, vector<256x8xf32> -> vector<256x8xf32>
    %c0_78 = arith.constant 0 : index
    %c0_79 = arith.constant 0 : index
    %43 = vector.load %arg5[%c0_78, %c0_79] : memref<1x8xf32, #tpu.memory_space<vmem>>, vector<1x8xf32>
    %44 = vector.broadcast %43 : vector<1x8xf32> to vector<256x8xf32>
    %45 = arith.addf %42, %44 : vector<256x8xf32>
    %cst_80 = arith.constant 0.000000e+00 : f32
    %46 = vector.broadcast %cst_80 : f32 to vector<256x8xf32>
    %47 = arith.cmpf ogt, %45, %46 : vector<256x8xf32>
    %cst_81 = arith.constant 0.00999999977 : f32
    %48 = vector.broadcast %cst_81 : f32 to vector<256x8xf32>
    %49 = arith.mulf %48, %45 : vector<256x8xf32>
    %50 = arith.select %47, %45, %49 : vector<256x8xi1>, vector<256x8xf32>
    %51 = vector.shape_cast %50 : vector<256x8xf32> to vector<16x16x8xf32>
    %c1_82 = arith.constant 1 : index
    %c1_83 = arith.constant 1 : index
    %c0_84 = arith.constant 0 : index
    %52 = vector.load %arg12[%c1_82, %c1_83, %c0_84] : memref<18x18x8xf32, #tpu.memory_space<vmem>>, vector<16x16x8xf32>
    tpu.vector_store %arg12[%c1_82, %c1_83, %c0_84], %51 {strides = array<i32>} : memref<18x18x8xf32, #tpu.memory_space<vmem>>, vector<16x16x8xf32>,
    %c0_85 = arith.constant 0 : index
    %c0_86 = arith.constant 0 : index
    %c0_87 = arith.constant 0 : index
    %53 = tpu.strided_load %arg12[%c0_85, %c0_86, %c0_87] {strides = array<i32: 2, 2, 1>} : memref<18x18x8xf32, #tpu.memory_space<vmem>>, vector<8x8x8xf32>
    %c0_88 = arith.constant 0 : index
    %c1_89 = arith.constant 1 : index
    %c0_90 = arith.constant 0 : index
    %54 = tpu.strided_load %arg12[%c0_88, %c1_89, %c0_90] {strides = array<i32: 2, 2, 1>} : memref<18x18x8xf32, #tpu.memory_space<vmem>>, vector<8x8x8xf32>
    %c0_91 = arith.constant 0 : index
    %c2_92 = arith.constant 2 : index
    %c0_93 = arith.constant 0 : index
    %55 = tpu.strided_load %arg12[%c0_91, %c2_92, %c0_93] {strides = array<i32: 2, 2, 1>} : memref<18x18x8xf32, #tpu.memory_space<vmem>>, vector<8x8x8xf32>
    %c1_94 = arith.constant 1 : index
    %c0_95 = arith.constant 0 : index
    %c0_96 = arith.constant 0 : index
    %56 = tpu.strided_load %arg12[%c1_94, %c0_95, %c0_96] {strides = array<i32: 2, 2, 1>} : memref<18x18x8xf32, #tpu.memory_space<vmem>>, vector<8x8x8xf32>
    %c1_97 = arith.constant 1 : index
    %c1_98 = arith.constant 1 : index
    %c0_99 = arith.constant 0 : index
    %57 = tpu.strided_load %arg12[%c1_97, %c1_98, %c0_99] {strides = array<i32: 2, 2, 1>} : memref<18x18x8xf32, #tpu.memory_space<vmem>>, vector<8x8x8xf32>
    %c1_100 = arith.constant 1 : index
    %c2_101 = arith.constant 2 : index
    %c0_102 = arith.constant 0 : index
    %58 = tpu.strided_load %arg12[%c1_100, %c2_101, %c0_102] {strides = array<i32: 2, 2, 1>} : memref<18x18x8xf32, #tpu.memory_space<vmem>>, vector<8x8x8xf32>
    %c2_103 = arith.constant 2 : index
    %c0_104 = arith.constant 0 : index
    %c0_105 = arith.constant 0 : index
    %59 = tpu.strided_load %arg12[%c2_103, %c0_104, %c0_105] {strides = array<i32: 2, 2, 1>} : memref<18x18x8xf32, #tpu.memory_space<vmem>>, vector<8x8x8xf32>
    %c2_106 = arith.constant 2 : index
    %c1_107 = arith.constant 1 : index
    %c0_108 = arith.constant 0 : index
    %60 = tpu.strided_load %arg12[%c2_106, %c1_107, %c0_108] {strides = array<i32: 2, 2, 1>} : memref<18x18x8xf32, #tpu.memory_space<vmem>>, vector<8x8x8xf32>
    %c2_109 = arith.constant 2 : index
    %c2_110 = arith.constant 2 : index
    %c0_111 = arith.constant 0 : index
    %61 = tpu.strided_load %arg12[%c2_109, %c2_110, %c0_111] {strides = array<i32: 2, 2, 1>} : memref<18x18x8xf32, #tpu.memory_space<vmem>>, vector<8x8x8xf32>
    %62 = tpu.concatenate %53, %54, %55, %56, %57, %58, %59, %60, %61 in 2 : vector<8x8x8xf32>, vector<8x8x8xf32>, vector<8x8x8xf32>, vector<8x8x8xf32>, vector<8x8x8xf32>, vector<8x8x8xf32>, vector<8x8x8xf32>, vector<8x8x8xf32>, vector<8x8x8xf32> -> vector<8x8x72xf32>
    %63 = vector.shape_cast %62 : vector<8x8x72xf32> to vector<64x72xf32>
    %c0_112 = arith.constant 0 : index
    %c0_113 = arith.constant 0 : index
    %64 = vector.load %arg6[%c0_112, %c0_113] : memref<72x8xf32, #tpu.memory_space<vmem>>, vector<72x8xf32>
    %cst_114 = arith.constant dense<0.000000e+00> : vector<64x8xf32>
    %65 = tpu.matmul %63, %64, %cst_114 {dimension_numbers = #tpu.dot_dimension_numbers<[1], [0], [0], [1], [0, 0, 1, 1], [], []>} : vector<64x72xf32>, vector<72x8xf32>, vector<64x8xf32> -> vector<64x8xf32>
    %c0_115 = arith.constant 0 : index
    %c0_116 = arith.constant 0 : index
    %66 = vector.load %arg7[%c0_115, %c0_116] : memref<1x8xf32, #tpu.memory_space<vmem>>, vector<1x8xf32>
    %67 = vector.broadcast %66 : vector<1x8xf32> to vector<64x8xf32>
    %68 = arith.addf %65, %67 : vector<64x8xf32>
    %cst_117 = arith.constant 0.000000e+00 : f32
    %69 = vector.broadcast %cst_117 : f32 to vector<64x8xf32>
    %70 = arith.cmpf ogt, %68, %69 : vector<64x8xf32>
    %cst_118 = arith.constant 0.00999999977 : f32
    %71 = vector.broadcast %cst_118 : f32 to vector<64x8xf32>
    %72 = arith.mulf %71, %68 : vector<64x8xf32>
    %73 = arith.select %70, %68, %72 : vector<64x8xi1>, vector<64x8xf32>
    %c1_119 = arith.constant 1 : index
    %c1_120 = arith.constant 1 : index
    %c0_121 = arith.constant 0 : index
    %74 = tpu.strided_load %arg11[%c1_119, %c1_120, %c0_121] {strides = array<i32: 2, 2, 1>} : memref<18x18x4xf32, #tpu.memory_space<vmem>>, vector<8x8x4xf32>
    %75 = vector.shape_cast %74 : vector<8x8x4xf32> to vector<64x4xf32>
    %c0_122 = arith.constant 0 : index
    %c0_123 = arith.constant 0 : index
    %76 = vector.load %arg8[%c0_122, %c0_123] : memref<4x8xf32, #tpu.memory_space<vmem>>, vector<4x8xf32>
    %cst_124 = arith.constant dense<0.000000e+00> : vector<64x8xf32>
    %77 = tpu.matmul %75, %76, %cst_124 {dimension_numbers = #tpu.dot_dimension_numbers<[1], [0], [0], [1], [0, 0, 1, 1], [], []>} : vector<64x4xf32>, vector<4x8xf32>, vector<64x8xf32> -> vector<64x8xf32>
    %c0_125 = arith.constant 0 : index
    %c0_126 = arith.constant 0 : index
    %78 = vector.load %arg9[%c0_125, %c0_126] : memref<1x8xf32, #tpu.memory_space<vmem>>, vector<1x8xf32>
    %79 = vector.broadcast %78 : vector<1x8xf32> to vector<64x8xf32>
    %80 = arith.addf %77, %79 : vector<64x8xf32>
    %81 = arith.addf %73, %80 : vector<64x8xf32>
    %82 = vector.shape_cast %81 : vector<64x8xf32> to vector<1x8x8x8xf32>
    %c0_127 = arith.constant 0 : index
    %c0_128 = arith.constant 0 : index
    %c0_129 = arith.constant 0 : index
    %c0_130 = arith.constant 0 : index
    %83 = vector.load %arg10[%c0_127, %c0_128, %c0_129, %c0_130] : memref<1x8x8x8xf32, #tpu.memory_space<vmem>>, vector<1x8x8x8xf32>
    tpu.vector_store %arg10[%c0_127, %c0_128, %c0_129, %c0_130], %82 {strides = array<i32>} : memref<1x8x8x8xf32, #tpu.memory_space<vmem>>, vector<1x8x8x8xf32>,
    return
  }
  func.func @transform_0(%arg0: i32) -> (i32, i32, i32, i32) {
    %c0_i32 = arith.constant 0 : i32
    %c0_i32_0 = arith.constant 0 : i32
    %c0_i32_1 = arith.constant 0 : i32
    %c0_i32_2 = arith.constant 0 : i32
    return %arg0, %c0_i32, %c0_i32_0, %c0_i32_1 : i32, i32, i32, i32
  }
  func.func @transform_1(%arg0: i32) -> (i32, i32) {
    %c0_i32 = arith.constant 0 : i32
    %c0_i32_0 = arith.constant 0 : i32
    %c0_i32_1 = arith.constant 0 : i32
    return %c0_i32, %c0_i32_0 : i32, i32
  }
  func.func @transform_2(%arg0: i32) -> (i32, i32) {
    %c0_i32 = arith.constant 0 : i32
    %c0_i32_0 = arith.constant 0 : i32
    %c0_i32_1 = arith.constant 0 : i32
    return %c0_i32, %c0_i32_0 : i32, i32
  }
  func.func @transform_3(%arg0: i32) -> (i32, i32) {
    %c0_i32 = arith.constant 0 : i32
    %c0_i32_0 = arith.constant 0 : i32
    %c0_i32_1 = arith.constant 0 : i32
    return %c0_i32, %c0_i32_0 : i32, i32
  }
  func.func @transform_4(%arg0: i32) -> (i32, i32) {
    %c0_i32 = arith.constant 0 : i32
    %c0_i32_0 = arith.constant 0 : i32
    %c0_i32_1 = arith.constant 0 : i32
    return %c0_i32, %c0_i32_0 : i32, i32
  }
  func.func @transform_5(%arg0: i32) -> (i32, i32) {
    %c0_i32 = arith.constant 0 : i32
    %c0_i32_0 = arith.constant 0 : i32
    %c0_i32_1 = arith.constant 0 : i32
    return %c0_i32, %c0_i32_0 : i32, i32
  }
  func.func @transform_6(%arg0: i32) -> (i32, i32) {
    %c0_i32 = arith.constant 0 : i32
    %c0_i32_0 = arith.constant 0 : i32
    %c0_i32_1 = arith.constant 0 : i32
    return %c0_i32, %c0_i32_0 : i32, i32
  }
  func.func @transform_7(%arg0: i32) -> (i32, i32) {
    %c0_i32 = arith.constant 0 : i32
    %c0_i32_0 = arith.constant 0 : i32
    %c0_i32_1 = arith.constant 0 : i32
    return %c0_i32, %c0_i32_0 : i32, i32
  }
  func.func @transform_8(%arg0: i32) -> (i32, i32) {
    %c0_i32 = arith.constant 0 : i32
    %c0_i32_0 = arith.constant 0 : i32
    %c0_i32_1 = arith.constant 0 : i32
    return %c0_i32, %c0_i32_0 : i32, i32
  }
  func.func @transform_9(%arg0: i32) -> (i32, i32, i32, i32) {
    %c0_i32 = arith.constant 0 : i32
    %c0_i32_0 = arith.constant 0 : i32
    %c0_i32_1 = arith.constant 0 : i32
    %c0_i32_2 = arith.constant 0 : i32
    return %arg0, %c0_i32, %c0_i32_0, %c0_i32_1 : i32, i32, i32, i32
  }
}

</mosaic_0001>

<llo_original>
// kernel: tpu_custom_call.1
$region0: #{tpu_custom_call.1}
  #allocation0 [shape = 'u32[]', space=smem, size = 0x4, offset = 0x4, fixed_abs, tag = 'smem constant byte address 0x4 - core index']
  #allocation1 [shape = 'u32[144,128]{1,0:T(1,128)}', space=vmem, size = 0x12000, scoped, tag = 'internal scratch']
  #allocation2 [shape = 'f32[18,18,4]{2,1,0:T(8,128)}', space=vmem, size = 0x36000, scoped, tag = 'scratch operand']
  #allocation3 [shape = 'f32[18,18,8]{2,1,0:T(8,128)}', space=vmem, size = 0x36000, scoped, tag = 'scratch operand']
  %s0 = inlined_call_operand.vmem [shape: f32[2,16,16,4], index: 0, kind: input, shape index: {}]
  %s1 = inlined_call_operand.vmem [shape: f32[36,8], index: 1, kind: input, shape index: {}]
  %s2 = inlined_call_operand.vmem [shape: f32[1,8], index: 2, kind: input, shape index: {}]
  %s3 = inlined_call_operand.vmem [shape: f32[72,8], index: 3, kind: input, shape index: {}]
  %s4 = inlined_call_operand.vmem [shape: f32[1,8], index: 4, kind: input, shape index: {}]
  %s5 = inlined_call_operand.vmem [shape: f32[72,8], index: 5, kind: input, shape index: {}]
  %s6 = inlined_call_operand.vmem [shape: f32[1,8], index: 6, kind: input, shape index: {}]
  %s7 = inlined_call_operand.vmem [shape: f32[4,8], index: 7, kind: input, shape index: {}]
  %s8 = inlined_call_operand.vmem [shape: f32[1,8], index: 8, kind: input, shape index: {}]
  %s9 = inlined_call_operand.hbm [shape: f32[2,8,8,8], index: 9, kind: output, shape index: {}]
  %s10 = sld [smem:[#allocation0]]
  $region69: #{tpu_custom_call.1} parent=0
    _
  %s12 = ssub.s32 1, %s10
  %s13 = scalar_select 0, %s12, %s10
  $region1: #{tpu_custom_call.1} parent=0
    #allocation4 [shape = 'u8[65536]{0}', space=vmem, size = 0x10000, scoped, tag = 'output window, operand 0']
    #allocation5 [shape = 's32[2]{0}', space=sflag, size = 0x8, scoped, tag = 'scoped memory for tpu_custom_call.1']
    %14 = vsyncpa [#allocation5], 0
    %s15 = scalar_lea.sflag [#allocation5], 1
    %16 = vsyncpa %s15, 0
    loop: start=0, step=1, limit=4
    $region2: #{tpu_custom_call.1} parent=1 // loop_pre_header
      _
    $region3: #{tpu_custom_call.1} parent=1 // loop_header
      %s18 = sphi 0, %s22
      %p19 = scmp.ge.s32.totalorder %s18, 4
      %s28 = sphi 0, %s30
      %s31 = sphi 0, %s28
      %s32 = sphi 0, %s31
      %s48 = sphi 0, %s32
      %s52 = sphi 0, %s52
      %s54 = sphi 0, %s52
      %s55 = sphi 0, %s54
      %s69 = sphi 0, %s55
      %s73 = sphi 0, %s73
      %s75 = sphi 0, %s73
      %s76 = sphi 0, %s75
      %s90 = sphi 0, %s76
      %s94 = sphi 0, %s94
      %s96 = sphi 0, %s94
      %s97 = sphi 0, %s96
      %s111 = sphi 0, %s97
      %s115 = sphi 0, %s115
      %s117 = sphi 0, %s115
      %s118 = sphi 0, %s117
      %s132 = sphi 0, %s118
      %s136 = sphi 0, %s136
      %s138 = sphi 0, %s136
      %s139 = sphi 0, %s138
      %s153 = sphi 0, %s139
      %s157 = sphi 0, %s157
      %s159 = sphi 0, %s157
      %s160 = sphi 0, %s159
      %s174 = sphi 0, %s160
      %s178 = sphi 0, %s178
      %s180 = sphi 0, %s178
      %s181 = sphi 0, %s180
      %s195 = sphi 0, %s181
      %s199 = sphi 0, %s199
      %s201 = sphi 0, %s199
      %s202 = sphi 0, %s201
      %s216 = sphi 0, %s202
      %s222 = sphi 0, %s224
      %s225 = sphi 0, %s222
      %s226 = sphi 0, %s225
      %s242 = sphi 0, %s226
    $region4: #{tpu_custom_call.1} parent=1 // loop_header_branch
      %21 = sbr.rel (%p19) target = $region8
    $region5: #{tpu_custom_call.1} parent=1 // loop_body
      %s23 = ssub.s32 %s18, 1
      %s24 = ssub.s32 %s18, 2
      %s25 = sadd.s32 %s18, 1
      %s26 = ssub.s32 %s18, %s25
      %p27 = scmp.eq.s32.totalorder %s26, 0
      %s29 = sadd.s32 %s28, 1
      %s30 = scalar_select %p27, %s28, %s29
      %p33 = pneg %p27
      %p34 = scmp.eq.s32.totalorder %s18, 1
      %p35 = por %p33, %p34
      %p36 = scmp.ne.s32.totalorder %s28, %s31
      %p37 = scmp.eq.s32.totalorder %s18, 0
      %p38 = por %p36, %p37
      %p39 = scmp.ne.s32.totalorder %s28, %s31
      %p40 = scmp.eq.s32.totalorder %s23, 1
      %p41 = por %p39, %p40
      %p42 = scmp.ne.s32.totalorder %s31, %s32
      %p43 = scmp.eq.s32.totalorder %s23, 0
      %p44 = por %p42, %p43
      %p45 = scmp.ne.s32.totalorder %s31, %s32
      %p46 = scmp.eq.s32.totalorder %s24, 1
      %p47 = por %p45, %p46
      %p49 = scmp.ne.s32.totalorder %s32, %s48
      %p50 = scmp.eq.s32.totalorder %s24, 0
      %p51 = por %p49, %p50
      %s53 = sadd.s32 %s52, 1
      %p56 = scmp.eq.s32.totalorder %s18, 1
      %p57 = scmp.ne.s32.totalorder %s52, %s54
      %p58 = scmp.eq.s32.totalorder %s18, 0
      %p59 = por %p57, %p58
      %p60 = scmp.ne.s32.totalorder %s52, %s54
      %p61 = scmp.eq.s32.totalorder %s23, 1
      %p62 = por %p60, %p61
      %p63 = scmp.ne.s32.totalorder %s54, %s55
      %p64 = scmp.eq.s32.totalorder %s23, 0
      %p65 = por %p63, %p64
      %p66 = scmp.ne.s32.totalorder %s54, %s55
      %p67 = scmp.eq.s32.totalorder %s24, 1
      %p68 = por %p66, %p67
      %p70 = scmp.ne.s32.totalorder %s55, %s69
      %p71 = scmp.eq.s32.totalorder %s24, 0
      %p72 = por %p70, %p71
      %s74 = sadd.s32 %s73, 1
      %p77 = scmp.eq.s32.totalorder %s18, 1
      %p78 = scmp.ne.s32.totalorder %s73, %s75
      %p79 = scmp.eq.s32.totalorder %s18, 0
      %p80 = por %p78, %p79
      %p81 = scmp.ne.s32.totalorder %s73, %s75
      %p82 = scmp.eq.s32.totalorder %s23, 1
      %p83 = por %p81, %p82
      %p84 = scmp.ne.s32.totalorder %s75, %s76
      %p85 = scmp.eq.s32.totalorder %s23, 0
      %p86 = por %p84, %p85
      %p87 = scmp.ne.s32.totalorder %s75, %s76
      %p88 = scmp.eq.s32.totalorder %s24, 1
      %p89 = por %p87, %p88
      %p91 = scmp.ne.s32.totalorder %s76, %s90
      %p92 = scmp.eq.s32.totalorder %s24, 0
      %p93 = por %p91, %p92
      %s95 = sadd.s32 %s94, 1
      %p98 = scmp.eq.s32.totalorder %s18, 1
      %p99 = scmp.ne.s32.totalorder %s94, %s96
      %p100 = scmp.eq.s32.totalorder %s18, 0
      %p101 = por %p99, %p100
      %p102 = scmp.ne.s32.totalorder %s94, %s96
      %p103 = scmp.eq.s32.totalorder %s23, 1
      %p104 = por %p102, %p103
      %p105 = scmp.ne.s32.totalorder %s96, %s97
      %p106 = scmp.eq.s32.totalorder %s23, 0
      %p107 = por %p105, %p106
      %p108 = scmp.ne.s32.totalorder %s96, %s97
      %p109 = scmp.eq.s32.totalorder %s24, 1
      %p110 = por %p108, %p109
      %p112 = scmp.ne.s32.totalorder %s97, %s111
      %p113 = scmp.eq.s32.totalorder %s24, 0
      %p114 = por %p112, %p113
      %s116 = sadd.s32 %s115, 1
      %p119 = scmp.eq.s32.totalorder %s18, 1
      %p120 = scmp.ne.s32.totalorder %s115, %s117
      %p121 = scmp.eq.s32.totalorder %s18, 0
      %p122 = por %p120, %p121
      %p123 = scmp.ne.s32.totalorder %s115, %s117
      %p124 = scmp.eq.s32.totalorder %s23, 1
      %p125 = por %p123, %p124
      %p126 = scmp.ne.s32.totalorder %s117, %s118
      %p127 = scmp.eq.s32.totalorder %s23, 0
      %p128 = por %p126, %p127
      %p129 = scmp.ne.s32.totalorder %s117, %s118
      %p130 = scmp.eq.s32.totalorder %s24, 1
      %p131 = por %p129, %p130
      %p133 = scmp.ne.s32.totalorder %s118, %s132
      %p134 = scmp.eq.s32.totalorder %s24, 0
      %p135 = por %p133, %p134
      %s137 = sadd.s32 %s136, 1
      %p140 = scmp.eq.s32.totalorder %s18, 1
      %p141 = scmp.ne.s32.totalorder %s136, %s138
      %p142 = scmp.eq.s32.totalorder %s18, 0
      %p143 = por %p141, %p142
      %p144 = scmp.ne.s32.totalorder %s136, %s138
      %p145 = scmp.eq.s32.totalorder %s23, 1
      %p146 = por %p144, %p145
      %p147 = scmp.ne.s32.totalorder %s138, %s139
      %p148 = scmp.eq.s32.totalorder %s23, 0
      %p149 = por %p147, %p148
      %p150 = scmp.ne.s32.totalorder %s138, %s139
      %p151 = scmp.eq.s32.totalorder %s24, 1
      %p152 = por %p150, %p151
      %p154 = scmp.ne.s32.totalorder %s139, %s153
      %p155 = scmp.eq.s32.totalorder %s24, 0
      %p156 = por %p154, %p155
      %s158 = sadd.s32 %s157, 1
      %p161 = scmp.eq.s32.totalorder %s18, 1
      %p162 = scmp.ne.s32.totalorder %s157, %s159
      %p163 = scmp.eq.s32.totalorder %s18, 0
      %p164 = por %p162, %p163
      %p165 = scmp.ne.s32.totalorder %s157, %s159
      %p166 = scmp.eq.s32.totalorder %s23, 1
      %p167 = por %p165, %p166
      %p168 = scmp.ne.s32.totalorder %s159, %s160
      %p169 = scmp.eq.s32.totalorder %s23, 0
      %p170 = por %p168, %p169
      %p171 = scmp.ne.s32.totalorder %s159, %s160
      %p172 = scmp.eq.s32.totalorder %s24, 1
      %p173 = por %p171, %p172
      %p175 = scmp.ne.s32.totalorder %s160, %s174
      %p176 = scmp.eq.s32.totalorder %s24, 0
      %p177 = por %p175, %p176
      %s179 = sadd.s32 %s178, 1
      %p182 = scmp.eq.s32.totalorder %s18, 1
      %p183 = scmp.ne.s32.totalorder %s178, %s180
      %p184 = scmp.eq.s32.totalorder %s18, 0
      %p185 = por %p183, %p184
      %p186 = scmp.ne.s32.totalorder %s178, %s180
      %p187 = scmp.eq.s32.totalorder %s23, 1
      %p188 = por %p186, %p187
      %p189 = scmp.ne.s32.totalorder %s180, %s181
      %p190 = scmp.eq.s32.totalorder %s23, 0
      %p191 = por %p189, %p190
      %p192 = scmp.ne.s32.totalorder %s180, %s181
      %p193 = scmp.eq.s32.totalorder %s24, 1
      %p194 = por %p192, %p193
      %p196 = scmp.ne.s32.totalorder %s181, %s195
      %p197 = scmp.eq.s32.totalorder %s24, 0
      %p198 = por %p196, %p197
      %s200 = sadd.s32 %s199, 1
      %p203 = scmp.eq.s32.totalorder %s18, 1
      %p204 = scmp.ne.s32.totalorder %s199, %s201
      %p205 = scmp.eq.s32.totalorder %s18, 0
      %p206 = por %p204, %p205
      %p207 = scmp.ne.s32.totalorder %s199, %s201
      %p208 = scmp.eq.s32.totalorder %s23, 1
      %p209 = por %p207, %p208
      %p210 = scmp.ne.s32.totalorder %s201, %s202
      %p211 = scmp.eq.s32.totalorder %s23, 0
      %p212 = por %p210, %p211
      %p213 = scmp.ne.s32.totalorder %s201, %s202
      %p214 = scmp.eq.s32.totalorder %s24, 1
      %p215 = por %p213, %p214
      %p217 = scmp.ne.s32.totalorder %s202, %s216
      %p218 = scmp.eq.s32.totalorder %s24, 0
      %p219 = por %p217, %p218
      %s220 = ssub.s32 %s18, %s25
      %p221 = scmp.eq.s32.totalorder %s220, 0
      %s223 = sadd.s32 %s222, 1
      %s224 = scalar_select %p221, %s222, %s223
      %p227 = pneg %p221
      %p228 = scmp.eq.s32.totalorder %s18, 1
      %p229 = por %p227, %p228
      %p230 = scmp.ne.s32.totalorder %s222, %s225
      %p231 = scmp.eq.s32.totalorder %s18, 0
      %p232 = por %p230, %p231
      %p233 = scmp.ne.s32.totalorder %s222, %s225
      %p234 = scmp.eq.s32.totalorder %s23, 1
      %p235 = por %p233, %p234
      %p236 = scmp.ne.s32.totalorder %s225, %s226
      %p237 = scmp.eq.s32.totalorder %s23, 0
      %p238 = por %p236, %p237
      %p239 = scmp.ne.s32.totalorder %s225, %s226
      %p240 = scmp.eq.s32.totalorder %s24, 1
      %p241 = por %p239, %p240
      %p243 = scmp.ne.s32.totalorder %s226, %s242
      %p244 = scmp.eq.s32.totalorder %s24, 0
      %p245 = por %p243, %p244
      %p246 = scmp.le.s32.totalorder 1, %s18
      %p247 = scmp.lt.s32.totalorder %s18, 3
      %p248 = pnand %p246, %p247
      %p249 = pneg %p248
      // Predicated region
      $region9: #{tpu_custom_call.1} parent=5 // pred_check
        _
      $region10: #{tpu_custom_call.1} parent=5 // pred_check_branch
        %251 = sbr.rel (%p248) target = $region12
      $region11: #{tpu_custom_call.1} parent=5 // pred_region
        %s252 = ssub.s32 %s18, 1
        // Predicated region
        $region13: #{tpu_custom_call.1} parent=11 // pred_check
          %p253 = pneg %p65
        $region14: #{tpu_custom_call.1} parent=11 // pred_check_branch
          %255 = sbr.rel (%p253) target = $region16
        $region15: #{tpu_custom_call.1} parent=11 // pred_region
          _
        $region16: #{tpu_custom_call.1} parent=11 // pred_fallthru
          _
        // Predicated region
        $region17: #{tpu_custom_call.1} parent=11 // pred_check
          %p256 = pneg %p86
        $region18: #{tpu_custom_call.1} parent=11 // pred_check_branch
          %258 = sbr.rel (%p256) target = $region20
        $region19: #{tpu_custom_call.1} parent=11 // pred_region
          _
        $region20: #{tpu_custom_call.1} parent=11 // pred_fallthru
          _
        // Predicated region
        $region21: #{tpu_custom_call.1} parent=11 // pred_check
          %p259 = pneg %p107
        $region22: #{tpu_custom_call.1} parent=11 // pred_check_branch
          %261 = sbr.rel (%p259) target = $region24
        $region23: #{tpu_custom_call.1} parent=11 // pred_region
          _
        $region24: #{tpu_custom_call.1} parent=11 // pred_fallthru
          _
        // Predicated region
        $region25: #{tpu_custom_call.1} parent=11 // pred_check
          %p262 = pneg %p128
        $region26: #{tpu_custom_call.1} parent=11 // pred_check_branch
          %264 = sbr.rel (%p262) target = $region28
        $region27: #{tpu_custom_call.1} parent=11 // pred_region
          _
        $region28: #{tpu_custom_call.1} parent=11 // pred_fallthru
          _
        // Predicated region
        $region29: #{tpu_custom_call.1} parent=11 // pred_check
          %p265 = pneg %p149
        $region30: #{tpu_custom_call.1} parent=11 // pred_check_branch
          %267 = sbr.rel (%p265) target = $region32
        $region31: #{tpu_custom_call.1} parent=11 // pred_region
          _
        $region32: #{tpu_custom_call.1} parent=11 // pred_fallthru
          _
        // Predicated region
        $region33: #{tpu_custom_call.1} parent=11 // pred_check
          %p268 = pneg %p170
        $region34: #{tpu_custom_call.1} parent=11 // pred_check_branch
          %270 = sbr.rel (%p268) target = $region36
        $region35: #{tpu_custom_call.1} parent=11 // pred_region
          _
        $region36: #{tpu_custom_call.1} parent=11 // pred_fallthru
          _
        // Predicated region
        $region37: #{tpu_custom_call.1} parent=11 // pred_check
          %p271 = pneg %p191
        $region38: #{tpu_custom_call.1} parent=11 // pred_check_branch
          %273 = sbr.rel (%p271) target = $region40
        $region39: #{tpu_custom_call.1} parent=11 // pred_region
          _
        $region40: #{tpu_custom_call.1} parent=11 // pred_fallthru
          _
        // Predicated region
        $region41: #{tpu_custom_call.1} parent=11 // pred_check
          %p274 = pneg %p212
        $region42: #{tpu_custom_call.1} parent=11 // pred_check_branch
          %276 = sbr.rel (%p274) target = $region44
        $region43: #{tpu_custom_call.1} parent=11 // pred_region
          _
        $region44: #{tpu_custom_call.1} parent=11 // pred_fallthru
          _
      $region12: #{tpu_custom_call.1} parent=5 // pred_fallthru
        _
      %p277 = scmp.lt.s32.totalorder %s18, 2
      // Predicated region
      $region45: #{tpu_custom_call.1} parent=5 // pred_check
        %p278 = pneg %p277
      $region46: #{tpu_custom_call.1} parent=5 // pred_check_branch
        %280 = sbr.rel (%p278) target = $region48
      $region47: #{tpu_custom_call.1} parent=5 // pred_region
        // Predicated region
        $region49: #{tpu_custom_call.1} parent=47 // pred_check
          %p281 = pneg %p38
        $region50: #{tpu_custom_call.1} parent=47 // pred_check_branch
          %283 = sbr.rel (%p281) target = $region52
        $region51: #{tpu_custom_call.1} parent=47 // pred_region
          %p284 = scmp.lt.s32.totalorder %s18, 1
          %s285 = scalar_select %p284, %s18, 1
          %s286 = smul.addr %s285, 32
          %s287 = smul.addr %s286, 8
          %s288 = scalar_lea.vmem %s0, %s287
        $region52: #{tpu_custom_call.1} parent=47 // pred_fallthru
          _
      $region48: #{tpu_custom_call.1} parent=5 // pred_fallthru
        _
      %p289 = scmp.le.s32.totalorder 1, %s18
      %p290 = scmp.lt.s32.totalorder %s18, 3
      %p291 = pnand %p289, %p290
      %p292 = pneg %p291
      // Predicated region
      $region53: #{tpu_custom_call.1} parent=5 // pred_check
        _
      $region54: #{tpu_custom_call.1} parent=5 // pred_check_branch
        %294 = sbr.rel (%p291) target = $region56
      $region55: #{tpu_custom_call.1} parent=5 // pred_region
        %s295 = ssub.s32 %s18, 1
        %p296 = scmp.lt.s32.totalorder %s23, 1
        %s297 = scalar_select %p296, %s23, 1
        %s298 = smul.addr %s297, 32
        %s299 = smul.addr %s298, 8
        %s300 = scalar_lea.vmem %s0, %s299
        %p301 = pneg %p44
        %p302 = pneg %p41
        %p303 = pneg %p65
        %p304 = pneg %p62
        %p305 = pneg %p86
        %p306 = pneg %p83
        %p307 = pneg %p107
        %p308 = pneg %p104
        %p309 = pneg %p128
        %p310 = pneg %p125
        %p311 = pneg %p149
        %p312 = pneg %p146
        %p313 = pneg %p170
        %p314 = pneg %p167
        %p315 = pneg %p191
        %p316 = pneg %p188
        %p317 = pneg %p212
        %p318 = pneg %p209
        %p319 = pneg %p238
        %p320 = pneg %p235
        %s321 = sand.u32 %s225, 1
        %s322 = scalar_lea.sflag [#allocation5], %s321
        %s323 = sand.u32 %s225, 1
        %s324 = smul.addr %s323, 64
        %s325 = scalar_lea.vmem [#allocation4], %s324
        %p326 = scmp.lt.s32.totalorder %s23, 1
        %s327 = scalar_select %p326, %s23, 1
        %s328 = smul.addr %s327, 32
        %s329 = smul.addr %s328, 8
        %s330 = scalar_lea.vmem %s0, %s329
        %vm331 = vcmask 31744
        %332 = vst.msk [vmem:[#allocation2] sm:$0xff] %vm331, 0.0
        %333 = vst.msk [vmem:[#allocation2 + $0x8] sm:$0xff] %vm331, 0.0
        %vm334 = vcmask 25600
        %335 = vst.msk [vmem:[#allocation2 + $0x10] sm:$0x3] %vm334, 0.0
        %336 = vst.msk [vmem:[#allocation2 + $0x18] sm:$0xff] %vm331, 0.0
        %337 = vst.msk [vmem:[#allocation2 + $0x20] sm:$0xff] %vm331, 0.0
        %338 = vst.msk [vmem:[#allocation2 + $0x28] sm:$0x3] %vm334, 0.0
        %339 = vst.msk [vmem:[#allocation2 + $0x30] sm:$0xff] %vm331, 0.0
        %340 = vst.msk [vmem:[#allocation2 + $0x38] sm:$0xff] %vm331, 0.0
        %341 = vst.msk [vmem:[#allocation2 + $0x40] sm:$0x3] %vm334, 0.0
        %342 = vst.msk [vmem:[#allocation2 + $0x48] sm:$0xff] %vm331, 0.0
        %343 = vst.msk [vmem:[#allocation2 + $0x50] sm:$0xff] %vm331, 0.0
        %344 = vst.msk [vmem:[#allocation2 + $0x58] sm:$0x3] %vm334, 0.0
        %345 = vst.msk [vmem:[#allocation2 + $0x60] sm:$0xff] %vm331, 0.0
        %346 = vst.msk [vmem:[#allocation2 + $0x68] sm:$0xff] %vm331, 0.0
        %347 = vst.msk [vmem:[#allocation2 + $0x70] sm:$0x3] %vm334, 0.0
        %348 = vst.msk [vmem:[#allocation2 + $0x78] sm:$0xff] %vm331, 0.0
        %349 = vst.msk [vmem:[#allocation2 + $0x80] sm:$0xff] %vm331, 0.0
        %350 = vst.msk [vmem:[#allocation2 + $0x88] sm:$0x3] %vm334, 0.0
        %351 = vst.msk [vmem:[#allocation2 + $0x90] sm:$0xff] %vm331, 0.0
        %352 = vst.msk [vmem:[#allocation2 + $0x98] sm:$0xff] %vm331, 0.0
        %353 = vst.msk [vmem:[#allocation2 + $0xa0] sm:$0x3] %vm334, 0.0
        %354 = vst.msk [vmem:[#allocation2 + $0xa8] sm:$0xff] %vm331, 0.0
        %355 = vst.msk [vmem:[#allocation2 + $0xb0] sm:$0xff] %vm331, 0.0
        %356 = vst.msk [vmem:[#allocation2 + $0xb8] sm:$0x3] %vm334, 0.0
        %357 = vst.msk [vmem:[#allocation2 + $0xc0] sm:$0xff] %vm331, 0.0
        %358 = vst.msk [vmem:[#allocation2 + $0xc8] sm:$0xff] %vm331, 0.0
        %359 = vst.msk [vmem:[#allocation2 + $0xd0] sm:$0x3] %vm334, 0.0
        %360 = vst.msk [vmem:[#allocation2 + $0xd8] sm:$0xff] %vm331, 0.0
        %361 = vst.msk [vmem:[#allocation2 + $0xe0] sm:$0xff] %vm331, 0.0
        %362 = vst.msk [vmem:[#allocation2 + $0xe8] sm:$0x3] %vm334, 0.0
        %363 = vst.msk [vmem:[#allocation2 + $0xf0] sm:$0xff] %vm331, 0.0
        %364 = vst.msk [vmem:[#allocation2 + $0xf8] sm:$0xff] %vm331, 0.0
        %365 = vst.msk [vmem:[#allocation2 + $0x100] sm:$0x3] %vm334, 0.0
        %366 = vst.msk [vmem:[#allocation2 + $0x108] sm:$0xff] %vm331, 0.0
        %367 = vst.msk [vmem:[#allocation2 + $0x110] sm:$0xff] %vm331, 0.0
        %368 = vst.msk [vmem:[#allocation2 + $0x118] sm:$0x3] %vm334, 0.0
        %369 = vst.msk [vmem:[#allocation2 + $0x120] sm:$0xff] %vm331, 0.0
        %370 = vst.msk [vmem:[#allocation2 + $0x128] sm:$0xff] %vm331, 0.0
        %371 = vst.msk [vmem:[#allocation2 + $0x130] sm:$0x3] %vm334, 0.0
        %372 = vst.msk [vmem:[#allocation2 + $0x138] sm:$0xff] %vm331, 0.0
        %373 = vst.msk [vmem:[#allocation2 + $0x140] sm:$0xff] %vm331, 0.0
        %374 = vst.msk [vmem:[#allocation2 + $0x148] sm:$0x3] %vm334, 0.0
        %375 = vst.msk [vmem:[#allocation2 + $0x150] sm:$0xff] %vm331, 0.0
        %376 = vst.msk [vmem:[#allocation2 + $0x158] sm:$0xff] %vm331, 0.0
        %377 = vst.msk [vmem:[#allocation2 + $0x160] sm:$0x3] %vm334, 0.0
        %378 = vst.msk [vmem:[#allocation2 + $0x168] sm:$0xff] %vm331, 0.0
        %379 = vst.msk [vmem:[#allocation2 + $0x170] sm:$0xff] %vm331, 0.0
        %380 = vst.msk [vmem:[#allocation2 + $0x178] sm:$0x3] %vm334, 0.0
        %381 = vst.msk [vmem:[#allocation2 + $0x180] sm:$0xff] %vm331, 0.0
        %382 = vst.msk [vmem:[#allocation2 + $0x188] sm:$0xff] %vm331, 0.0
        %383 = vst.msk [vmem:[#allocation2 + $0x190] sm:$0x3] %vm334, 0.0
        %384 = vst.msk [vmem:[#allocation2 + $0x198] sm:$0xff] %vm331, 0.0
        %385 = vst.msk [vmem:[#allocation2 + $0x1a0] sm:$0xff] %vm331, 0.0
        %386 = vst.msk [vmem:[#allocation2 + $0x1a8] sm:$0x3] %vm334, 0.0
        %vm387 = vcmask 64512
        %388 = vst.msk [vmem:[#allocation3] sm:$0xff] %vm387, 0.0
        %389 = vst.msk [vmem:[#allocation3 + $0x8] sm:$0xff] %vm387, 0.0
        %vm390 = vcmask 58368
        %391 = vst.msk [vmem:[#allocation3 + $0x10] sm:$0x3] %vm390, 0.0
        %392 = vst.msk [vmem:[#allocation3 + $0x18] sm:$0xff] %vm387, 0.0
        %393 = vst.msk [vmem:[#allocation3 + $0x20] sm:$0xff] %vm387, 0.0
        %394 = vst.msk [vmem:[#allocation3 + $0x28] sm:$0x3] %vm390, 0.0
        %395 = vst.msk [vmem:[#allocation3 + $0x30] sm:$0xff] %vm387, 0.0
        %396 = vst.msk [vmem:[#allocation3 + $0x38] sm:$0xff] %vm387, 0.0
        %397 = vst.msk [vmem:[#allocation3 + $0x40] sm:$0x3] %vm390, 0.0
        %398 = vst.msk [vmem:[#allocation3 + $0x48] sm:$0xff] %vm387, 0.0
        %399 = vst.msk [vmem:[#allocation3 + $0x50] sm:$0xff] %vm387, 0.0
        %400 = vst.msk [vmem:[#allocation3 + $0x58] sm:$0x3] %vm390, 0.0
        %401 = vst.msk [vmem:[#allocation3 + $0x60] sm:$0xff] %vm387, 0.0
        %402 = vst.msk [vmem:[#allocation3 + $0x68] sm:$0xff] %vm387, 0.0
        %403 = vst.msk [vmem:[#allocation3 + $0x70] sm:$0x3] %vm390, 0.0
        %404 = vst.msk [vmem:[#allocation3 + $0x78] sm:$0xff] %vm387, 0.0
        %405 = vst.msk [vmem:[#allocation3 + $0x80] sm:$0xff] %vm387, 0.0
        %406 = vst.msk [vmem:[#allocation3 + $0x88] sm:$0x3] %vm390, 0.0
        %407 = vst.msk [vmem:[#allocation3 + $0x90] sm:$0xff] %vm387, 0.0
        %408 = vst.msk [vmem:[#allocation3 + $0x98] sm:$0xff] %vm387, 0.0
        %409 = vst.msk [vmem:[#allocation3 + $0xa0] sm:$0x3] %vm390, 0.0
        %410 = vst.msk [vmem:[#allocation3 + $0xa8] sm:$0xff] %vm387, 0.0
        %411 = vst.msk [vmem:[#allocation3 + $0xb0] sm:$0xff] %vm387, 0.0
        %412 = vst.msk [vmem:[#allocation3 + $0xb8] sm:$0x3] %vm390, 0.0
        %413 = vst.msk [vmem:[#allocation3 + $0xc0] sm:$0xff] %vm387, 0.0
        %414 = vst.msk [vmem:[#allocation3 + $0xc8] sm:$0xff] %vm387, 0.0
        %415 = vst.msk [vmem:[#allocation3 + $0xd0] sm:$0x3] %vm390, 0.0
        %416 = vst.msk [vmem:[#allocation3 + $0xd8] sm:$0xff] %vm387, 0.0
        %417 = vst.msk [vmem:[#allocation3 + $0xe0] sm:$0xff] %vm387, 0.0
        %418 = vst.msk [vmem:[#allocation3 + $0xe8] sm:$0x3] %vm390, 0.0
        %419 = vst.msk [vmem:[#allocation3 + $0xf0] sm:$0xff] %vm387, 0.0
        %420 = vst.msk [vmem:[#allocation3 + $0xf8] sm:$0xff] %vm387, 0.0
        %421 = vst.msk [vmem:[#allocation3 + $0x100] sm:$0x3] %vm390, 0.0
        %422 = vst.msk [vmem:[#allocation3 + $0x108] sm:$0xff] %vm387, 0.0
        %423 = vst.msk [vmem:[#allocation3 + $0x110] sm:$0xff] %vm387, 0.0
        %424 = vst.msk [vmem:[#allocation3 + $0x118] sm:$0x3] %vm390, 0.0
        %425 = vst.msk [vmem:[#allocation3 + $0x120] sm:$0xff] %vm387, 0.0
        %426 = vst.msk [vmem:[#allocation3 + $0x128] sm:$0xff] %vm387, 0.0
        %427 = vst.msk [vmem:[#allocation3 + $0x130] sm:$0x3] %vm390, 0.0
        %428 = vst.msk [vmem:[#allocation3 + $0x138] sm:$0xff] %vm387, 0.0
        %429 = vst.msk [vmem:[#allocation3 + $0x140] sm:$0xff] %vm387, 0.0
        %430 = vst.msk [vmem:[#allocation3 + $0x148] sm:$0x3] %vm390, 0.0
        %431 = vst.msk [vmem:[#allocation3 + $0x150] sm:$0xff] %vm387, 0.0
        %432 = vst.msk [vmem:[#allocation3 + $0x158] sm:$0xff] %vm387, 0.0
        %433 = vst.msk [vmem:[#allocation3 + $0x160] sm:$0x3] %vm390, 0.0
        %434 = vst.msk [vmem:[#allocation3 + $0x168] sm:$0xff] %vm387, 0.0
        %435 = vst.msk [vmem:[#allocation3 + $0x170] sm:$0xff] %vm387, 0.0
        %436 = vst.msk [vmem:[#allocation3 + $0x178] sm:$0x3] %vm390, 0.0
        %437 = vst.msk [vmem:[#allocation3 + $0x180] sm:$0xff] %vm387, 0.0
        %438 = vst.msk [vmem:[#allocation3 + $0x188] sm:$0xff] %vm387, 0.0
        %439 = vst.msk [vmem:[#allocation3 + $0x190] sm:$0x3] %vm390, 0.0
        %440 = vst.msk [vmem:[#allocation3 + $0x198] sm:$0xff] %vm387, 0.0
        %441 = vst.msk [vmem:[#allocation3 + $0x1a0] sm:$0xff] %vm387, 0.0
        %442 = vst.msk [vmem:[#allocation3 + $0x1a8] sm:$0x3] %vm390, 0.0
        %v443 = vld [vmem:[%s330] sm:$0xff]
        %v444 = vld [vmem:[%s330 + $0x8] sm:$0xff]
        %v445 = vld [vmem:[%s330 + $0x10] sm:$0xff]
        %v446 = vld [vmem:[%s330 + $0x18] sm:$0xff]
        %v447 = vld [vmem:[%s330 + $0x20] sm:$0xff]
        %v448 = vld [vmem:[%s330 + $0x28] sm:$0xff]
        %v449 = vld [vmem:[%s330 + $0x30] sm:$0xff]
        %v450 = vld [vmem:[%s330 + $0x38] sm:$0xff]
        %v451 = vld [vmem:[%s330 + $0x40] sm:$0xff]
        %v452 = vld [vmem:[%s330 + $0x48] sm:$0xff]
        %v453 = vld [vmem:[%s330 + $0x50] sm:$0xff]
        %v454 = vld [vmem:[%s330 + $0x58] sm:$0xff]
        %v455 = vld [vmem:[%s330 + $0x60] sm:$0xff]
        %v456 = vld [vmem:[%s330 + $0x68] sm:$0xff]
        %v457 = vld [vmem:[%s330 + $0x70] sm:$0xff]
        %v458 = vld [vmem:[%s330 + $0x78] sm:$0xff]
        %v459 = vld [vmem:[%s330 + $0x80] sm:$0xff]
        %v460 = vld [vmem:[%s330 + $0x88] sm:$0xff]
        %v461 = vld [vmem:[%s330 + $0x90] sm:$0xff]
        %v462 = vld [vmem:[%s330 + $0x98] sm:$0xff]
        %v463 = vld [vmem:[%s330 + $0xa0] sm:$0xff]
        %v464 = vld [vmem:[%s330 + $0xa8] sm:$0xff]
        %v465 = vld [vmem:[%s330 + $0xb0] sm:$0xff]
        %v466 = vld [vmem:[%s330 + $0xb8] sm:$0xff]
        %v467 = vld [vmem:[%s330 + $0xc0] sm:$0xff]
        %v468 = vld [vmem:[%s330 + $0xc8] sm:$0xff]
        %v469 = vld [vmem:[%s330 + $0xd0] sm:$0xff]
        %v470 = vld [vmem:[%s330 + $0xd8] sm:$0xff]
        %v471 = vld [vmem:[%s330 + $0xe0] sm:$0xff]
        %v472 = vld [vmem:[%s330 + $0xe8] sm:$0xff]
        %v473 = vld [vmem:[%s330 + $0xf0] sm:$0xff]
        %v474 = vld [vmem:[%s330 + $0xf8] sm:$0xff]
        %s475 = scalar_lea.vmem [#allocation2], 24
        %476 = vst.msk [vmem:[%s475 + $0x1] sm:$0xff] %vm331, %v443
        %477 = vst.msk [vmem:[%s475 + $0x9] sm:$0xff] %vm331, %v444
        %478 = vst.msk [vmem:[%s475 + $0x19] sm:$0xff] %vm331, %v445
        %479 = vst.msk [vmem:[%s475 + $0x21] sm:$0xff] %vm331, %v446
        %480 = vst.msk [vmem:[%s475 + $0x31] sm:$0xff] %vm331, %v447
        %481 = vst.msk [vmem:[%s475 + $0x39] sm:$0xff] %vm331, %v448
        %482 = vst.msk [vmem:[%s475 + $0x49] sm:$0xff] %vm331, %v449
        %483 = vst.msk [vmem:[%s475 + $0x51] sm:$0xff] %vm331, %v450
        %484 = vst.msk [vmem:[%s475 + $0x61] sm:$0xff] %vm331, %v451
        %485 = vst.msk [vmem:[%s475 + $0x69] sm:$0xff] %vm331, %v452
        %486 = vst.msk [vmem:[%s475 + $0x79] sm:$0xff] %vm331, %v453
        %487 = vst.msk [vmem:[%s475 + $0x81] sm:$0xff] %vm331, %v454
        %488 = vst.msk [vmem:[%s475 + $0x91] sm:$0xff] %vm331, %v455
        %489 = vst.msk [vmem:[%s475 + $0x99] sm:$0xff] %vm331, %v456
        %490 = vst.msk [vmem:[%s475 + $0xa9] sm:$0xff] %vm331, %v457
        %491 = vst.msk [vmem:[%s475 + $0xb1] sm:$0xff] %vm331, %v458
        %492 = vst.msk [vmem:[%s475 + $0xc1] sm:$0xff] %vm331, %v459
        %493 = vst.msk [vmem:[%s475 + $0xc9] sm:$0xff] %vm331, %v460
        %494 = vst.msk [vmem:[%s475 + $0xd9] sm:$0xff] %vm331, %v461
        %495 = vst.msk [vmem:[%s475 + $0xe1] sm:$0xff] %vm331, %v462
        %496 = vst.msk [vmem:[%s475 + $0xf1] sm:$0xff] %vm331, %v463
        %497 = vst.msk [vmem:[%s475 + $0xf9] sm:$0xff] %vm331, %v464
        %498 = vst.msk [vmem:[%s475 + $0x109] sm:$0xff] %vm331, %v465
        %499 = vst.msk [vmem:[%s475 + $0x111] sm:$0xff] %vm331, %v466
        %500 = vst.msk [vmem:[%s475 + $0x121] sm:$0xff] %vm331, %v467
        %501 = vst.msk [vmem:[%s475 + $0x129] sm:$0xff] %vm331, %v468
        %502 = vst.msk [vmem:[%s475 + $0x139] sm:$0xff] %vm331, %v469
        %503 = vst.msk [vmem:[%s475 + $0x141] sm:$0xff] %vm331, %v470
        %504 = vst.msk [vmem:[%s475 + $0x151] sm:$0xff] %vm331, %v471
        %505 = vst.msk [vmem:[%s475 + $0x159] sm:$0xff] %vm331, %v472
        %506 = vst.msk [vmem:[%s475 + $0x169] sm:$0xff] %vm331, %v473
        %507 = vst.msk [vmem:[%s475 + $0x171] sm:$0xff] %vm331, %v474
        %v508 = vld [vmem:[#allocation2] sm:$0xff]
        %v509 = vld [vmem:[#allocation2 + $0x8] sm:$0xff]
        %v510 = vld [vmem:[#allocation2 + $0x18] sm:$0xff]
        %v511 = vld [vmem:[#allocation2 + $0x20] sm:$0xff]
        %v512 = vld [vmem:[#allocation2 + $0x30] sm:$0xff]
        %v513 = vld [vmem:[#allocation2 + $0x38] sm:$0xff]
        %v514 = vld [vmem:[#allocation2 + $0x48] sm:$0xff]
        %v515 = vld [vmem:[#allocation2 + $0x50] sm:$0xff]
        %v516 = vld [vmem:[#allocation2 + $0x60] sm:$0xff]
        %v517 = vld [vmem:[#allocation2 + $0x68] sm:$0xff]
        %v518 = vld [vmem:[#allocation2 + $0x78] sm:$0xff]
        %v519 = vld [vmem:[#allocation2 + $0x80] sm:$0xff]
        %v520 = vld [vmem:[#allocation2 + $0x90] sm:$0xff]
        %v521 = vld [vmem:[#allocation2 + $0x98] sm:$0xff]
        %v522 = vld [vmem:[#allocation2 + $0xa8] sm:$0xff]
        %v523 = vld [vmem:[#allocation2 + $0xb0] sm:$0xff]
        %v524 = vld [vmem:[#allocation2 + $0xc0] sm:$0xff]
        %v525 = vld [vmem:[#allocation2 + $0xc8] sm:$0xff]
        %v526 = vld [vmem:[#allocation2 + $0xd8] sm:$0xff]
        %v527 = vld [vmem:[#allocation2 + $0xe0] sm:$0xff]
        %v528 = vld [vmem:[#allocation2 + $0xf0] sm:$0xff]
        %v529 = vld [vmem:[#allocation2 + $0xf8] sm:$0xff]
        %v530 = vld [vmem:[#allocation2 + $0x108] sm:$0xff]
        %v531 = vld [vmem:[#allocation2 + $0x110] sm:$0xff]
        %v532 = vld [vmem:[#allocation2 + $0x120] sm:$0xff]
        %v533 = vld [vmem:[#allocation2 + $0x128] sm:$0xff]
        %v534 = vld [vmem:[#allocation2 + $0x138] sm:$0xff]
        %v535 = vld [vmem:[#allocation2 + $0x140] sm:$0xff]
        %v536 = vld [vmem:[#allocation2 + $0x150] sm:$0xff]
        %v537 = vld [vmem:[#allocation2 + $0x158] sm:$0xff]
        %v538 = vld [vmem:[#allocation2 + $0x168] sm:$0xff]
        %v539 = vld [vmem:[#allocation2 + $0x170] sm:$0xff]
        %v540 = vld [vmem:[#allocation2 + $0x1] sm:$0xff]
        %v541 = vld [vmem:[#allocation2 + $0x9] sm:$0xff]
        %v542 = vld [vmem:[#allocation2 + $0x19] sm:$0xff]
        %v543 = vld [vmem:[#allocation2 + $0x21] sm:$0xff]
        %v544 = vld [vmem:[#allocation2 + $0x31] sm:$0xff]
        %v545 = vld [vmem:[#allocation2 + $0x39] sm:$0xff]
        %v546 = vld [vmem:[#allocation2 + $0x49] sm:$0xff]
        %v547 = vld [vmem:[#allocation2 + $0x51] sm:$0xff]
        %v548 = vld [vmem:[#allocation2 + $0x61] sm:$0xff]
        %v549 = vld [vmem:[#allocation2 + $0x69] sm:$0xff]
        %v550 = vld [vmem:[#allocation2 + $0x79] sm:$0xff]
        %v551 = vld [vmem:[#allocation2 + $0x81] sm:$0xff]
        %v552 = vld [vmem:[#allocation2 + $0x91] sm:$0xff]
        %v553 = vld [vmem:[#allocation2 + $0x99] sm:$0xff]
        %v554 = vld [vmem:[#allocation2 + $0xa9] sm:$0xff]
        %v555 = vld [vmem:[#allocation2 + $0xb1] sm:$0xff]
        %v556 = vld [vmem:[#allocation2 + $0xc1] sm:$0xff]
        %v557 = vld [vmem:[#allocation2 + $0xc9] sm:$0xff]
        %v558 = vld [vmem:[#allocation2 + $0xd9] sm:$0xff]
        %v559 = vld [vmem:[#allocation2 + $0xe1] sm:$0xff]
        %v560 = vld [vmem:[#allocation2 + $0xf1] sm:$0xff]
        %v561 = vld [vmem:[#allocation2 + $0xf9] sm:$0xff]
        %v562 = vld [vmem:[#allocation2 + $0x109] sm:$0xff]
        %v563 = vld [vmem:[#allocation2 + $0x111] sm:$0xff]
        %v564 = vld [vmem:[#allocation2 + $0x121] sm:$0xff]
        %v565 = vld [vmem:[#allocation2 + $0x129] sm:$0xff]
        %v566 = vld [vmem:[#allocation2 + $0x139] sm:$0xff]
        %v567 = vld [vmem:[#allocation2 + $0x141] sm:$0xff]
        %v568 = vld [vmem:[#allocation2 + $0x151] sm:$0xff]
        %v569 = vld [vmem:[#allocation2 + $0x159] sm:$0xff]
        %v570 = vld [vmem:[#allocation2 + $0x169] sm:$0xff]
        %v571 = vld [vmem:[#allocation2 + $0x171] sm:$0xff]
        %v572 = vld [vmem:[#allocation2 + $0x2] sm:$0xff]
        %v573 = vld [vmem:[#allocation2 + $0xa] sm:$0xff]
        %v574 = vld [vmem:[#allocation2 + $0x1a] sm:$0xff]
        %v575 = vld [vmem:[#allocation2 + $0x22] sm:$0xff]
        %v576 = vld [vmem:[#allocation2 + $0x32] sm:$0xff]
        %v577 = vld [vmem:[#allocation2 + $0x3a] sm:$0xff]
        %v578 = vld [vmem:[#allocation2 + $0x4a] sm:$0xff]
        %v579 = vld [vmem:[#allocation2 + $0x52] sm:$0xff]
        %v580 = vld [vmem:[#allocation2 + $0x62] sm:$0xff]
        %v581 = vld [vmem:[#allocation2 + $0x6a] sm:$0xff]
        %v582 = vld [vmem:[#allocation2 + $0x7a] sm:$0xff]
        %v583 = vld [vmem:[#allocation2 + $0x82] sm:$0xff]
        %v584 = vld [vmem:[#allocation2 + $0x92] sm:$0xff]
        %v585 = vld [vmem:[#allocation2 + $0x9a] sm:$0xff]
        %v586 = vld [vmem:[#allocation2 + $0xaa] sm:$0xff]
        %v587 = vld [vmem:[#allocation2 + $0xb2] sm:$0xff]
        %v588 = vld [vmem:[#allocation2 + $0xc2] sm:$0xff]
        %v589 = vld [vmem:[#allocation2 + $0xca] sm:$0xff]
        %v590 = vld [vmem:[#allocation2 + $0xda] sm:$0xff]
        %v591 = vld [vmem:[#allocation2 + $0xe2] sm:$0xff]
        %v592 = vld [vmem:[#allocation2 + $0xf2] sm:$0xff]
        %v593 = vld [vmem:[#allocation2 + $0xfa] sm:$0xff]
        %v594 = vld [vmem:[#allocation2 + $0x10a] sm:$0xff]
        %v595 = vld [vmem:[#allocation2 + $0x112] sm:$0xff]
        %v596 = vld [vmem:[#allocation2 + $0x122] sm:$0xff]
        %v597 = vld [vmem:[#allocation2 + $0x12a] sm:$0xff]
        %v598 = vld [vmem:[#allocation2 + $0x13a] sm:$0xff]
        %v599 = vld [vmem:[#allocation2 + $0x142] sm:$0xff]
        %v600 = vld [vmem:[#allocation2 + $0x152] sm:$0xff]
        %v601 = vld [vmem:[#allocation2 + $0x15a] sm:$0xff]
        %v602 = vld [vmem:[#allocation2 + $0x16a] sm:$0xff]
        %v603 = vld [vmem:[#allocation2 + $0x172] sm:$0xff]
        %v604 = vld [vmem:[%s475] sm:$0xff]
        %v605 = vld [vmem:[%s475 + $0x8] sm:$0xff]
        %v606 = vld [vmem:[%s475 + $0x18] sm:$0xff]
        %v607 = vld [vmem:[%s475 + $0x20] sm:$0xff]
        %v608 = vld [vmem:[%s475 + $0x30] sm:$0xff]
        %v609 = vld [vmem:[%s475 + $0x38] sm:$0xff]
        %v610 = vld [vmem:[%s475 + $0x48] sm:$0xff]
        %v611 = vld [vmem:[%s475 + $0x50] sm:$0xff]
        %v612 = vld [vmem:[%s475 + $0x60] sm:$0xff]
        %v613 = vld [vmem:[%s475 + $0x68] sm:$0xff]
        %v614 = vld [vmem:[%s475 + $0x78] sm:$0xff]
        %v615 = vld [vmem:[%s475 + $0x80] sm:$0xff]
        %v616 = vld [vmem:[%s475 + $0x90] sm:$0xff]
        %v617 = vld [vmem:[%s475 + $0x98] sm:$0xff]
        %v618 = vld [vmem:[%s475 + $0xa8] sm:$0xff]
        %v619 = vld [vmem:[%s475 + $0xb0] sm:$0xff]
        %v620 = vld [vmem:[%s475 + $0xc0] sm:$0xff]
        %v621 = vld [vmem:[%s475 + $0xc8] sm:$0xff]
        %v622 = vld [vmem:[%s475 + $0xd8] sm:$0xff]
        %v623 = vld [vmem:[%s475 + $0xe0] sm:$0xff]
        %v624 = vld [vmem:[%s475 + $0xf0] sm:$0xff]
        %v625 = vld [vmem:[%s475 + $0xf8] sm:$0xff]
        %v626 = vld [vmem:[%s475 + $0x108] sm:$0xff]
        %v627 = vld [vmem:[%s475 + $0x110] sm:$0xff]
        %v628 = vld [vmem:[%s475 + $0x120] sm:$0xff]
        %v629 = vld [vmem:[%s475 + $0x128] sm:$0xff]
        %v630 = vld [vmem:[%s475 + $0x138] sm:$0xff]
        %v631 = vld [vmem:[%s475 + $0x140] sm:$0xff]
        %v632 = vld [vmem:[%s475 + $0x150] sm:$0xff]
        %v633 = vld [vmem:[%s475 + $0x158] sm:$0xff]
        %v634 = vld [vmem:[%s475 + $0x168] sm:$0xff]
        %v635 = vld [vmem:[%s475 + $0x170] sm:$0xff]
        %v636 = vld [vmem:[%s475 + $0x1] sm:$0xff]
        %v637 = vld [vmem:[%s475 + $0x9] sm:$0xff]
        %v638 = vld [vmem:[%s475 + $0x19] sm:$0xff]
        %v639 = vld [vmem:[%s475 + $0x21] sm:$0xff]
        %v640 = vld [vmem:[%s475 + $0x31] sm:$0xff]
        %v641 = vld [vmem:[%s475 + $0x39] sm:$0xff]
        %v642 = vld [vmem:[%s475 + $0x49] sm:$0xff]
        %v643 = vld [vmem:[%s475 + $0x51] sm:$0xff]
        %v644 = vld [vmem:[%s475 + $0x61] sm:$0xff]
        %v645 = vld [vmem:[%s475 + $0x69] sm:$0xff]
        %v646 = vld [vmem:[%s475 + $0x79] sm:$0xff]
        %v647 = vld [vmem:[%s475 + $0x81] sm:$0xff]
        %v648 = vld [vmem:[%s475 + $0x91] sm:$0xff]
        %v649 = vld [vmem:[%s475 + $0x99] sm:$0xff]
        %v650 = vld [vmem:[%s475 + $0xa9] sm:$0xff]
        %v651 = vld [vmem:[%s475 + $0xb1] sm:$0xff]
        %v652 = vld [vmem:[%s475 + $0xc1] sm:$0xff]
        %v653 = vld [vmem:[%s475 + $0xc9] sm:$0xff]
        %v654 = vld [vmem:[%s475 + $0xd9] sm:$0xff]
        %v655 = vld [vmem:[%s475 + $0xe1] sm:$0xff]
        %v656 = vld [vmem:[%s475 + $0xf1] sm:$0xff]
        %v657 = vld [vmem:[%s475 + $0xf9] sm:$0xff]
        %v658 = vld [vmem:[%s475 + $0x109] sm:$0xff]
        %v659 = vld [vmem:[%s475 + $0x111] sm:$0xff]
        %v660 = vld [vmem:[%s475 + $0x121] sm:$0xff]
        %v661 = vld [vmem:[%s475 + $0x129] sm:$0xff]
        %v662 = vld [vmem:[%s475 + $0x139] sm:$0xff]
        %v663 = vld [vmem:[%s475 + $0x141] sm:$0xff]
        %v664 = vld [vmem:[%s475 + $0x151] sm:$0xff]
        %v665 = vld [vmem:[%s475 + $0x159] sm:$0xff]
        %v666 = vld [vmem:[%s475 + $0x169] sm:$0xff]
        %v667 = vld [vmem:[%s475 + $0x171] sm:$0xff]
        %v668 = vld [vmem:[%s475 + $0x2] sm:$0xff]
        %v669 = vld [vmem:[%s475 + $0xa] sm:$0xff]
        %v670 = vld [vmem:[%s475 + $0x1a] sm:$0xff]
        %v671 = vld [vmem:[%s475 + $0x22] sm:$0xff]
        %v672 = vld [vmem:[%s475 + $0x32] sm:$0xff]
        %v673 = vld [vmem:[%s475 + $0x3a] sm:$0xff]
        %v674 = vld [vmem:[%s475 + $0x4a] sm:$0xff]
        %v675 = vld [vmem:[%s475 + $0x52] sm:$0xff]
        %v676 = vld [vmem:[%s475 + $0x62] sm:$0xff]
        %v677 = vld [vmem:[%s475 + $0x6a] sm:$0xff]
        %v678 = vld [vmem:[%s475 + $0x7a] sm:$0xff]
        %v679 = vld [vmem:[%s475 + $0x82] sm:$0xff]
        %v680 = vld [vmem:[%s475 + $0x92] sm:$0xff]
        %v681 = vld [vmem:[%s475 + $0x9a] sm:$0xff]
        %v682 = vld [vmem:[%s475 + $0xaa] sm:$0xff]
        %v683 = vld [vmem:[%s475 + $0xb2] sm:$0xff]
        %v684 = vld [vmem:[%s475 + $0xc2] sm:$0xff]
        %v685 = vld [vmem:[%s475 + $0xca] sm:$0xff]
        %v686 = vld [vmem:[%s475 + $0xda] sm:$0xff]
        %v687 = vld [vmem:[%s475 + $0xe2] sm:$0xff]
        %v688 = vld [vmem:[%s475 + $0xf2] sm:$0xff]
        %v689 = vld [vmem:[%s475 + $0xfa] sm:$0xff]
        %v690 = vld [vmem:[%s475 + $0x10a] sm:$0xff]
        %v691 = vld [vmem:[%s475 + $0x112] sm:$0xff]
        %v692 = vld [vmem:[%s475 + $0x122] sm:$0xff]
        %v693 = vld [vmem:[%s475 + $0x12a] sm:$0xff]
        %v694 = vld [vmem:[%s475 + $0x13a] sm:$0xff]
        %v695 = vld [vmem:[%s475 + $0x142] sm:$0xff]
        %v696 = vld [vmem:[%s475 + $0x152] sm:$0xff]
        %v697 = vld [vmem:[%s475 + $0x15a] sm:$0xff]
        %v698 = vld [vmem:[%s475 + $0x16a] sm:$0xff]
        %v699 = vld [vmem:[%s475 + $0x172] sm:$0xff]
        %s700 = scalar_lea.vmem [#allocation2], 48
        %v701 = vld [vmem:[%s700] sm:$0xff]
        %v702 = vld [vmem:[%s700 + $0x8] sm:$0xff]
        %v703 = vld [vmem:[%s700 + $0x18] sm:$0xff]
        %v704 = vld [vmem:[%s700 + $0x20] sm:$0xff]
        %v705 = vld [vmem:[%s700 + $0x30] sm:$0xff]
        %v706 = vld [vmem:[%s700 + $0x38] sm:$0xff]
        %v707 = vld [vmem:[%s700 + $0x48] sm:$0xff]
        %v708 = vld [vmem:[%s700 + $0x50] sm:$0xff]
        %v709 = vld [vmem:[%s700 + $0x60] sm:$0xff]
        %v710 = vld [vmem:[%s700 + $0x68] sm:$0xff]
        %v711 = vld [vmem:[%s700 + $0x78] sm:$0xff]
        %v712 = vld [vmem:[%s700 + $0x80] sm:$0xff]
        %v713 = vld [vmem:[%s700 + $0x90] sm:$0xff]
        %v714 = vld [vmem:[%s700 + $0x98] sm:$0xff]
        %v715 = vld [vmem:[%s700 + $0xa8] sm:$0xff]
        %v716 = vld [vmem:[%s700 + $0xb0] sm:$0xff]
        %v717 = vld [vmem:[%s700 + $0xc0] sm:$0xff]
        %v718 = vld [vmem:[%s700 + $0xc8] sm:$0xff]
        %v719 = vld [vmem:[%s700 + $0xd8] sm:$0xff]
        %v720 = vld [vmem:[%s700 + $0xe0] sm:$0xff]
        %v721 = vld [vmem:[%s700 + $0xf0] sm:$0xff]
        %v722 = vld [vmem:[%s700 + $0xf8] sm:$0xff]
        %v723 = vld [vmem:[%s700 + $0x108] sm:$0xff]
        %v724 = vld [vmem:[%s700 + $0x110] sm:$0xff]
        %v725 = vld [vmem:[%s700 + $0x120] sm:$0xff]
        %v726 = vld [vmem:[%s700 + $0x128] sm:$0xff]
        %v727 = vld [vmem:[%s700 + $0x138] sm:$0xff]
        %v728 = vld [vmem:[%s700 + $0x140] sm:$0xff]
        %v729 = vld [vmem:[%s700 + $0x150] sm:$0xff]
        %v730 = vld [vmem:[%s700 + $0x158] sm:$0xff]
        %v731 = vld [vmem:[%s700 + $0x168] sm:$0xff]
        %v732 = vld [vmem:[%s700 + $0x170] sm:$0xff]
        %v733 = vld [vmem:[%s700 + $0x1] sm:$0xff]
        %v734 = vld [vmem:[%s700 + $0x9] sm:$0xff]
        %v735 = vld [vmem:[%s700 + $0x19] sm:$0xff]
        %v736 = vld [vmem:[%s700 + $0x21] sm:$0xff]
        %v737 = vld [vmem:[%s700 + $0x31] sm:$0xff]
        %v738 = vld [vmem:[%s700 + $0x39] sm:$0xff]
        %v739 = vld [vmem:[%s700 + $0x49] sm:$0xff]
        %v740 = vld [vmem:[%s700 + $0x51] sm:$0xff]
        %v741 = vld [vmem:[%s700 + $0x61] sm:$0xff]
        %v742 = vld [vmem:[%s700 + $0x69] sm:$0xff]
        %v743 = vld [vmem:[%s700 + $0x79] sm:$0xff]
        %v744 = vld [vmem:[%s700 + $0x81] sm:$0xff]
        %v745 = vld [vmem:[%s700 + $0x91] sm:$0xff]
        %v746 = vld [vmem:[%s700 + $0x99] sm:$0xff]
        %v747 = vld [vmem:[%s700 + $0xa9] sm:$0xff]
        %v748 = vld [vmem:[%s700 + $0xb1] sm:$0xff]
        %v749 = vld [vmem:[%s700 + $0xc1] sm:$0xff]
        %v750 = vld [vmem:[%s700 + $0xc9] sm:$0xff]
        %v751 = vld [vmem:[%s700 + $0xd9] sm:$0xff]
        %v752 = vld [vmem:[%s700 + $0xe1] sm:$0xff]
        %v753 = vld [vmem:[%s700 + $0xf1] sm:$0xff]
        %v754 = vld [vmem:[%s700 + $0xf9] sm:$0xff]
        %v755 = vld [vmem:[%s700 + $0x109] sm:$0xff]
        %v756 = vld [vmem:[%s700 + $0x111] sm:$0xff]
        %v757 = vld [vmem:[%s700 + $0x121] sm:$0xff]
        %v758 = vld [vmem:[%s700 + $0x129] sm:$0xff]
        %v759 = vld [vmem:[%s700 + $0x139] sm:$0xff]
        %v760 = vld [vmem:[%s700 + $0x141] sm:$0xff]
        %v761 = vld [vmem:[%s700 + $0x151] sm:$0xff]
        %v762 = vld [vmem:[%s700 + $0x159] sm:$0xff]
        %v763 = vld [vmem:[%s700 + $0x169] sm:$0xff]
        %v764 = vld [vmem:[%s700 + $0x171] sm:$0xff]
        %v765 = vld [vmem:[%s700 + $0x2] sm:$0xff]
        %v766 = vld [vmem:[%s700 + $0xa] sm:$0xff]
        %v767 = vld [vmem:[%s700 + $0x1a] sm:$0xff]
        %v768 = vld [vmem:[%s700 + $0x22] sm:$0xff]
        %v769 = vld [vmem:[%s700 + $0x32] sm:$0xff]
        %v770 = vld [vmem:[%s700 + $0x3a] sm:$0xff]
        %v771 = vld [vmem:[%s700 + $0x4a] sm:$0xff]
        %v772 = vld [vmem:[%s700 + $0x52] sm:$0xff]
        %v773 = vld [vmem:[%s700 + $0x62] sm:$0xff]
        %v774 = vld [vmem:[%s700 + $0x6a] sm:$0xff]
        %v775 = vld [vmem:[%s700 + $0x7a] sm:$0xff]
        %v776 = vld [vmem:[%s700 + $0x82] sm:$0xff]
        %v777 = vld [vmem:[%s700 + $0x92] sm:$0xff]
        %v778 = vld [vmem:[%s700 + $0x9a] sm:$0xff]
        %v779 = vld [vmem:[%s700 + $0xaa] sm:$0xff]
        %v780 = vld [vmem:[%s700 + $0xb2] sm:$0xff]
        %v781 = vld [vmem:[%s700 + $0xc2] sm:$0xff]
        %v782 = vld [vmem:[%s700 + $0xca] sm:$0xff]
        %v783 = vld [vmem:[%s700 + $0xda] sm:$0xff]
        %v784 = vld [vmem:[%s700 + $0xe2] sm:$0xff]
        %v785 = vld [vmem:[%s700 + $0xf2] sm:$0xff]
        %v786 = vld [vmem:[%s700 + $0xfa] sm:$0xff]
        %v787 = vld [vmem:[%s700 + $0x10a] sm:$0xff]
        %v788 = vld [vmem:[%s700 + $0x112] sm:$0xff]
        %v789 = vld [vmem:[%s700 + $0x122] sm:$0xff]
        %v790 = vld [vmem:[%s700 + $0x12a] sm:$0xff]
        %v791 = vld [vmem:[%s700 + $0x13a] sm:$0xff]
        %v792 = vld [vmem:[%s700 + $0x142] sm:$0xff]
        %v793 = vld [vmem:[%s700 + $0x152] sm:$0xff]
        %v794 = vld [vmem:[%s700 + $0x15a] sm:$0xff]
        %v795 = vld [vmem:[%s700 + $0x16a] sm:$0xff]
        %v796 = vld [vmem:[%s700 + $0x172] sm:$0xff]
        %829 = vrot.lane.b32.xlu0 %v540, 4
        %v830 = vpop.permute.xlu0 %829
        %831 = vrot.lane.b32.xlu0 %v541, 4
        %v832 = vpop.permute.xlu0 %831
        %833 = vrot.lane.b32.xlu0 %v542, 4
        %v834 = vpop.permute.xlu0 %833
        %835 = vrot.lane.b32.xlu0 %v543, 4
        %v836 = vpop.permute.xlu0 %835
        %837 = vrot.lane.b32.xlu0 %v544, 4
        %v838 = vpop.permute.xlu0 %837
        %839 = vrot.lane.b32.xlu0 %v545, 4
        %v840 = vpop.permute.xlu0 %839
        %841 = vrot.lane.b32.xlu0 %v546, 4
        %v842 = vpop.permute.xlu0 %841
        %843 = vrot.lane.b32.xlu0 %v547, 4
        %v844 = vpop.permute.xlu0 %843
        %845 = vrot.lane.b32.xlu0 %v548, 4
        %v846 = vpop.permute.xlu0 %845
        %847 = vrot.lane.b32.xlu0 %v549, 4
        %v848 = vpop.permute.xlu0 %847
        %849 = vrot.lane.b32.xlu0 %v550, 4
        %v850 = vpop.permute.xlu0 %849
        %851 = vrot.lane.b32.xlu0 %v551, 4
        %v852 = vpop.permute.xlu0 %851
        %853 = vrot.lane.b32.xlu0 %v552, 4
        %v854 = vpop.permute.xlu0 %853
        %855 = vrot.lane.b32.xlu0 %v553, 4
        %v856 = vpop.permute.xlu0 %855
        %857 = vrot.lane.b32.xlu0 %v554, 4
        %v858 = vpop.permute.xlu0 %857
        %859 = vrot.lane.b32.xlu0 %v555, 4
        %v860 = vpop.permute.xlu0 %859
        %861 = vrot.lane.b32.xlu0 %v556, 4
        %v862 = vpop.permute.xlu0 %861
        %863 = vrot.lane.b32.xlu0 %v557, 4
        %v864 = vpop.permute.xlu0 %863
        %865 = vrot.lane.b32.xlu0 %v558, 4
        %v866 = vpop.permute.xlu0 %865
        %867 = vrot.lane.b32.xlu0 %v559, 4
        %v868 = vpop.permute.xlu0 %867
        %869 = vrot.lane.b32.xlu0 %v560, 4
        %v870 = vpop.permute.xlu0 %869
        %871 = vrot.lane.b32.xlu0 %v561, 4
        %v872 = vpop.permute.xlu0 %871
        %873 = vrot.lane.b32.xlu0 %v562, 4
        %v874 = vpop.permute.xlu0 %873
        %875 = vrot.lane.b32.xlu0 %v563, 4
        %v876 = vpop.permute.xlu0 %875
        %877 = vrot.lane.b32.xlu0 %v564, 4
        %v878 = vpop.permute.xlu0 %877
        %879 = vrot.lane.b32.xlu0 %v565, 4
        %v880 = vpop.permute.xlu0 %879
        %881 = vrot.lane.b32.xlu0 %v566, 4
        %v882 = vpop.permute.xlu0 %881
        %883 = vrot.lane.b32.xlu0 %v567, 4
        %v884 = vpop.permute.xlu0 %883
        %885 = vrot.lane.b32.xlu0 %v568, 4
        %v886 = vpop.permute.xlu0 %885
        %887 = vrot.lane.b32.xlu0 %v569, 4
        %v888 = vpop.permute.xlu0 %887
        %889 = vrot.lane.b32.xlu0 %v570, 4
        %v890 = vpop.permute.xlu0 %889
        %891 = vrot.lane.b32.xlu0 %v571, 4
        %v892 = vpop.permute.xlu0 %891
        %957 = vrot.lane.b32.xlu0 %v572, 8
        %v958 = vpop.permute.xlu0 %957
        %959 = vrot.lane.b32.xlu0 %v573, 8
        %v960 = vpop.permute.xlu0 %959
        %961 = vrot.lane.b32.xlu0 %v574, 8
        %v962 = vpop.permute.xlu0 %961
        %963 = vrot.lane.b32.xlu0 %v575, 8
        %v964 = vpop.permute.xlu0 %963
        %965 = vrot.lane.b32.xlu0 %v576, 8
        %v966 = vpop.permute.xlu0 %965
        %967 = vrot.lane.b32.xlu0 %v577, 8
        %v968 = vpop.permute.xlu0 %967
        %969 = vrot.lane.b32.xlu0 %v578, 8
        %v970 = vpop.permute.xlu0 %969
        %971 = vrot.lane.b32.xlu0 %v579, 8
        %v972 = vpop.permute.xlu0 %971
        %973 = vrot.lane.b32.xlu0 %v580, 8
        %v974 = vpop.permute.xlu0 %973
        %975 = vrot.lane.b32.xlu0 %v581, 8
        %v976 = vpop.permute.xlu0 %975
        %977 = vrot.lane.b32.xlu0 %v582, 8
        %v978 = vpop.permute.xlu0 %977
        %979 = vrot.lane.b32.xlu0 %v583, 8
        %v980 = vpop.permute.xlu0 %979
        %981 = vrot.lane.b32.xlu0 %v584, 8
        %v982 = vpop.permute.xlu0 %981
        %983 = vrot.lane.b32.xlu0 %v585, 8
        %v984 = vpop.permute.xlu0 %983
        %985 = vrot.lane.b32.xlu0 %v586, 8
        %v986 = vpop.permute.xlu0 %985
        %987 = vrot.lane.b32.xlu0 %v587, 8
        %v988 = vpop.permute.xlu0 %987
        %989 = vrot.lane.b32.xlu0 %v588, 8
        %v990 = vpop.permute.xlu0 %989
        %991 = vrot.lane.b32.xlu0 %v589, 8
        %v992 = vpop.permute.xlu0 %991
        %993 = vrot.lane.b32.xlu0 %v590, 8
        %v994 = vpop.permute.xlu0 %993
        %995 = vrot.lane.b32.xlu0 %v591, 8
        %v996 = vpop.permute.xlu0 %995
        %997 = vrot.lane.b32.xlu0 %v592, 8
        %v998 = vpop.permute.xlu0 %997
        %999 = vrot.lane.b32.xlu0 %v593, 8
        %v1000 = vpop.permute.xlu0 %999
        %1001 = vrot.lane.b32.xlu0 %v594, 8
        %v1002 = vpop.permute.xlu0 %1001
        %1003 = vrot.lane.b32.xlu0 %v595, 8
        %v1004 = vpop.permute.xlu0 %1003
        %1005 = vrot.lane.b32.xlu0 %v596, 8
        %v1006 = vpop.permute.xlu0 %1005
        %1007 = vrot.lane.b32.xlu0 %v597, 8
        %v1008 = vpop.permute.xlu0 %1007
        %1009 = vrot.lane.b32.xlu0 %v598, 8
        %v1010 = vpop.permute.xlu0 %1009
        %1011 = vrot.lane.b32.xlu0 %v599, 8
        %v1012 = vpop.permute.xlu0 %1011
        %1013 = vrot.lane.b32.xlu0 %v600, 8
        %v1014 = vpop.permute.xlu0 %1013
        %1015 = vrot.lane.b32.xlu0 %v601, 8
        %v1016 = vpop.permute.xlu0 %1015
        %1017 = vrot.lane.b32.xlu0 %v602, 8
        %v1018 = vpop.permute.xlu0 %1017
        %1019 = vrot.lane.b32.xlu0 %v603, 8
        %v1020 = vpop.permute.xlu0 %1019
        %1085 = vrot.lane.b32.xlu0 %v604, 12
        %v1086 = vpop.permute.xlu0 %1085
        %1087 = vrot.lane.b32.xlu0 %v605, 12
        %v1088 = vpop.permute.xlu0 %1087
        %1089 = vrot.lane.b32.xlu0 %v606, 12
        %v1090 = vpop.permute.xlu0 %1089
        %1091 = vrot.lane.b32.xlu0 %v607, 12
        %v1092 = vpop.permute.xlu0 %1091
        %1093 = vrot.lane.b32.xlu0 %v608, 12
        %v1094 = vpop.permute.xlu0 %1093
        %1095 = vrot.lane.b32.xlu0 %v609, 12
        %v1096 = vpop.permute.xlu0 %1095
        %1097 = vrot.lane.b32.xlu0 %v610, 12
        %v1098 = vpop.permute.xlu0 %1097
        %1099 = vrot.lane.b32.xlu0 %v611, 12
        %v1100 = vpop.permute.xlu0 %1099
        %1101 = vrot.lane.b32.xlu0 %v612, 12
        %v1102 = vpop.permute.xlu0 %1101
        %1103 = vrot.lane.b32.xlu0 %v613, 12
        %v1104 = vpop.permute.xlu0 %1103
        %1105 = vrot.lane.b32.xlu0 %v614, 12
        %v1106 = vpop.permute.xlu0 %1105
        %1107 = vrot.lane.b32.xlu0 %v615, 12
        %v1108 = vpop.permute.xlu0 %1107
        %1109 = vrot.lane.b32.xlu0 %v616, 12
        %v1110 = vpop.permute.xlu0 %1109
        %1111 = vrot.lane.b32.xlu0 %v617, 12
        %v1112 = vpop.permute.xlu0 %1111
        %1113 = vrot.lane.b32.xlu0 %v618, 12
        %v1114 = vpop.permute.xlu0 %1113
        %1115 = vrot.lane.b32.xlu0 %v619, 12
        %v1116 = vpop.permute.xlu0 %1115
        %1117 = vrot.lane.b32.xlu0 %v620, 12
        %v1118 = vpop.permute.xlu0 %1117
        %1119 = vrot.lane.b32.xlu0 %v621, 12
        %v1120 = vpop.permute.xlu0 %1119
        %1121 = vrot.lane.b32.xlu0 %v622, 12
        %v1122 = vpop.permute.xlu0 %1121
        %1123 = vrot.lane.b32.xlu0 %v623, 12
        %v1124 = vpop.permute.xlu0 %1123
        %1125 = vrot.lane.b32.xlu0 %v624, 12
        %v1126 = vpop.permute.xlu0 %1125
        %1127 = vrot.lane.b32.xlu0 %v625, 12
        %v1128 = vpop.permute.xlu0 %1127
        %1129 = vrot.lane.b32.xlu0 %v626, 12
        %v1130 = vpop.permute.xlu0 %1129
        %1131 = vrot.lane.b32.xlu0 %v627, 12
        %v1132 = vpop.permute.xlu0 %1131
        %1133 = vrot.lane.b32.xlu0 %v628, 12
        %v1134 = vpop.permute.xlu0 %1133
        %1135 = vrot.lane.b32.xlu0 %v629, 12
        %v1136 = vpop.permute.xlu0 %1135
        %1137 = vrot.lane.b32.xlu0 %v630, 12
        %v1138 = vpop.permute.xlu0 %1137
        %1139 = vrot.lane.b32.xlu0 %v631, 12
        %v1140 = vpop.permute.xlu0 %1139
        %1141 = vrot.lane.b32.xlu0 %v632, 12
        %v1142 = vpop.permute.xlu0 %1141
        %1143 = vrot.lane.b32.xlu0 %v633, 12
        %v1144 = vpop.permute.xlu0 %1143
        %1145 = vrot.lane.b32.xlu0 %v634, 12
        %v1146 = vpop.permute.xlu0 %1145
        %1147 = vrot.lane.b32.xlu0 %v635, 12
        %v1148 = vpop.permute.xlu0 %1147
        %1213 = vrot.lane.b32.xlu0 %v636, 16
        %v1214 = vpop.permute.xlu0 %1213
        %1215 = vrot.lane.b32.xlu0 %v637, 16
        %v1216 = vpop.permute.xlu0 %1215
        %1217 = vrot.lane.b32.xlu0 %v638, 16
        %v1218 = vpop.permute.xlu0 %1217
        %1219 = vrot.lane.b32.xlu0 %v639, 16
        %v1220 = vpop.permute.xlu0 %1219
        %1221 = vrot.lane.b32.xlu0 %v640, 16
        %v1222 = vpop.permute.xlu0 %1221
        %1223 = vrot.lane.b32.xlu0 %v641, 16
        %v1224 = vpop.permute.xlu0 %1223
        %1225 = vrot.lane.b32.xlu0 %v642, 16
        %v1226 = vpop.permute.xlu0 %1225
        %1227 = vrot.lane.b32.xlu0 %v643, 16
        %v1228 = vpop.permute.xlu0 %1227
        %1229 = vrot.lane.b32.xlu0 %v644, 16
        %v1230 = vpop.permute.xlu0 %1229
        %1231 = vrot.lane.b32.xlu0 %v645, 16
        %v1232 = vpop.permute.xlu0 %1231
        %1233 = vrot.lane.b32.xlu0 %v646, 16
        %v1234 = vpop.permute.xlu0 %1233
        %1235 = vrot.lane.b32.xlu0 %v647, 16
        %v1236 = vpop.permute.xlu0 %1235
        %1237 = vrot.lane.b32.xlu0 %v648, 16
        %v1238 = vpop.permute.xlu0 %1237
        %1239 = vrot.lane.b32.xlu0 %v649, 16
        %v1240 = vpop.permute.xlu0 %1239
        %1241 = vrot.lane.b32.xlu0 %v650, 16
        %v1242 = vpop.permute.xlu0 %1241
        %1243 = vrot.lane.b32.xlu0 %v651, 16
        %v1244 = vpop.permute.xlu0 %1243
        %1245 = vrot.lane.b32.xlu0 %v652, 16
        %v1246 = vpop.permute.xlu0 %1245
        %1247 = vrot.lane.b32.xlu0 %v653, 16
        %v1248 = vpop.permute.xlu0 %1247
        %1249 = vrot.lane.b32.xlu0 %v654, 16
        %v1250 = vpop.permute.xlu0 %1249
        %1251 = vrot.lane.b32.xlu0 %v655, 16
        %v1252 = vpop.permute.xlu0 %1251
        %1253 = vrot.lane.b32.xlu0 %v656, 16
        %v1254 = vpop.permute.xlu0 %1253
        %1255 = vrot.lane.b32.xlu0 %v657, 16
        %v1256 = vpop.permute.xlu0 %1255
        %1257 = vrot.lane.b32.xlu0 %v658, 16
        %v1258 = vpop.permute.xlu0 %1257
        %1259 = vrot.lane.b32.xlu0 %v659, 16
        %v1260 = vpop.permute.xlu0 %1259
        %1261 = vrot.lane.b32.xlu0 %v660, 16
        %v1262 = vpop.permute.xlu0 %1261
        %1263 = vrot.lane.b32.xlu0 %v661, 16
        %v1264 = vpop.permute.xlu0 %1263
        %1265 = vrot.lane.b32.xlu0 %v662, 16
        %v1266 = vpop.permute.xlu0 %1265
        %1267 = vrot.lane.b32.xlu0 %v663, 16
        %v1268 = vpop.permute.xlu0 %1267
        %1269 = vrot.lane.b32.xlu0 %v664, 16
        %v1270 = vpop.permute.xlu0 %1269
        %1271 = vrot.lane.b32.xlu0 %v665, 16
        %v1272 = vpop.permute.xlu0 %1271
        %1273 = vrot.lane.b32.xlu0 %v666, 16
        %v1274 = vpop.permute.xlu0 %1273
        %1275 = vrot.lane.b32.xlu0 %v667, 16
        %v1276 = vpop.permute.xlu0 %1275
        %1341 = vrot.lane.b32.xlu0 %v668, 20
        %v1342 = vpop.permute.xlu0 %1341
        %1343 = vrot.lane.b32.xlu0 %v669, 20
        %v1344 = vpop.permute.xlu0 %1343
        %1345 = vrot.lane.b32.xlu0 %v670, 20
        %v1346 = vpop.permute.xlu0 %1345
        %1347 = vrot.lane.b32.xlu0 %v671, 20
        %v1348 = vpop.permute.xlu0 %1347
        %1349 = vrot.lane.b32.xlu0 %v672, 20
        %v1350 = vpop.permute.xlu0 %1349
        %1351 = vrot.lane.b32.xlu0 %v673, 20
        %v1352 = vpop.permute.xlu0 %1351
        %1353 = vrot.lane.b32.xlu0 %v674, 20
        %v1354 = vpop.permute.xlu0 %1353
        %1355 = vrot.lane.b32.xlu0 %v675, 20
        %v1356 = vpop.permute.xlu0 %1355
        %1357 = vrot.lane.b32.xlu0 %v676, 20
        %v1358 = vpop.permute.xlu0 %1357
        %1359 = vrot.lane.b32.xlu0 %v677, 20
        %v1360 = vpop.permute.xlu0 %1359
        %1361 = vrot.lane.b32.xlu0 %v678, 20
        %v1362 = vpop.permute.xlu0 %1361
        %1363 = vrot.lane.b32.xlu0 %v679, 20
        %v1364 = vpop.permute.xlu0 %1363
        %1365 = vrot.lane.b32.xlu0 %v680, 20
        %v1366 = vpop.permute.xlu0 %1365
        %1367 = vrot.lane.b32.xlu0 %v681, 20
        %v1368 = vpop.permute.xlu0 %1367
        %1369 = vrot.lane.b32.xlu0 %v682, 20
        %v1370 = vpop.permute.xlu0 %1369
        %1371 = vrot.lane.b32.xlu0 %v683, 20
        %v1372 = vpop.permute.xlu0 %1371
        %1373 = vrot.lane.b32.xlu0 %v684, 20
        %v1374 = vpop.permute.xlu0 %1373
        %1375 = vrot.lane.b32.xlu0 %v685, 20
        %v1376 = vpop.permute.xlu0 %1375
        %1377 = vrot.lane.b32.xlu0 %v686, 20
        %v1378 = vpop.permute.xlu0 %1377
        %1379 = vrot.lane.b32.xlu0 %v687, 20
        %v1380 = vpop.permute.xlu0 %1379
        %1381 = vrot.lane.b32.xlu0 %v688, 20
        %v1382 = vpop.permute.xlu0 %1381
        %1383 = vrot.lane.b32.xlu0 %v689, 20
        %v1384 = vpop.permute.xlu0 %1383
        %1385 = vrot.lane.b32.xlu0 %v690, 20
        %v1386 = vpop.permute.xlu0 %1385
        %1387 = vrot.lane.b32.xlu0 %v691, 20
        %v1388 = vpop.permute.xlu0 %1387
        %1389 = vrot.lane.b32.xlu0 %v692, 20
        %v1390 = vpop.permute.xlu0 %1389
        %1391 = vrot.lane.b32.xlu0 %v693, 20
        %v1392 = vpop.permute.xlu0 %1391
        %1393 = vrot.lane.b32.xlu0 %v694, 20
        %v1394 = vpop.permute.xlu0 %1393
        %1395 = vrot.lane.b32.xlu0 %v695, 20
        %v1396 = vpop.permute.xlu0 %1395
        %1397 = vrot.lane.b32.xlu0 %v696, 20
        %v1398 = vpop.permute.xlu0 %1397
        %1399 = vrot.lane.b32.xlu0 %v697, 20
        %v1400 = vpop.permute.xlu0 %1399
        %1401 = vrot.lane.b32.xlu0 %v698, 20
        %v1402 = vpop.permute.xlu0 %1401
        %1403 = vrot.lane.b32.xlu0 %v699, 20
        %v1404 = vpop.permute.xlu0 %1403
        %1469 = vrot.lane.b32.xlu0 %v701, 24
        %v1470 = vpop.permute.xlu0 %1469
        %1471 = vrot.lane.b32.xlu0 %v702, 24
        %v1472 = vpop.permute.xlu0 %1471
        %1473 = vrot.lane.b32.xlu0 %v703, 24
        %v1474 = vpop.permute.xlu0 %1473
        %1475 = vrot.lane.b32.xlu0 %v704, 24
        %v1476 = vpop.permute.xlu0 %1475
        %1477 = vrot.lane.b32.xlu0 %v705, 24
        %v1478 = vpop.permute.xlu0 %1477
        %1479 = vrot.lane.b32.xlu0 %v706, 24
        %v1480 = vpop.permute.xlu0 %1479
        %1481 = vrot.lane.b32.xlu0 %v707, 24
        %v1482 = vpop.permute.xlu0 %1481
        %1483 = vrot.lane.b32.xlu0 %v708, 24
        %v1484 = vpop.permute.xlu0 %1483
        %1485 = vrot.lane.b32.xlu0 %v709, 24
        %v1486 = vpop.permute.xlu0 %1485
        %1487 = vrot.lane.b32.xlu0 %v710, 24
        %v1488 = vpop.permute.xlu0 %1487
        %1489 = vrot.lane.b32.xlu0 %v711, 24
        %v1490 = vpop.permute.xlu0 %1489
        %1491 = vrot.lane.b32.xlu0 %v712, 24
        %v1492 = vpop.permute.xlu0 %1491
        %1493 = vrot.lane.b32.xlu0 %v713, 24
        %v1494 = vpop.permute.xlu0 %1493
        %1495 = vrot.lane.b32.xlu0 %v714, 24
        %v1496 = vpop.permute.xlu0 %1495
        %1497 = vrot.lane.b32.xlu0 %v715, 24
        %v1498 = vpop.permute.xlu0 %1497
        %1499 = vrot.lane.b32.xlu0 %v716, 24
        %v1500 = vpop.permute.xlu0 %1499
        %1501 = vrot.lane.b32.xlu0 %v717, 24
        %v1502 = vpop.permute.xlu0 %1501
        %1503 = vrot.lane.b32.xlu0 %v718, 24
        %v1504 = vpop.permute.xlu0 %1503
        %1505 = vrot.lane.b32.xlu0 %v719, 24
        %v1506 = vpop.permute.xlu0 %1505
        %1507 = vrot.lane.b32.xlu0 %v720, 24
        %v1508 = vpop.permute.xlu0 %1507
        %1509 = vrot.lane.b32.xlu0 %v721, 24
        %v1510 = vpop.permute.xlu0 %1509
        %1511 = vrot.lane.b32.xlu0 %v722, 24
        %v1512 = vpop.permute.xlu0 %1511
        %1513 = vrot.lane.b32.xlu0 %v723, 24
        %v1514 = vpop.permute.xlu0 %1513
        %1515 = vrot.lane.b32.xlu0 %v724, 24
        %v1516 = vpop.permute.xlu0 %1515
        %1517 = vrot.lane.b32.xlu0 %v725, 24
        %v1518 = vpop.permute.xlu0 %1517
        %1519 = vrot.lane.b32.xlu0 %v726, 24
        %v1520 = vpop.permute.xlu0 %1519
        %1521 = vrot.lane.b32.xlu0 %v727, 24
        %v1522 = vpop.permute.xlu0 %1521
        %1523 = vrot.lane.b32.xlu0 %v728, 24
        %v1524 = vpop.permute.xlu0 %1523
        %1525 = vrot.lane.b32.xlu0 %v729, 24
        %v1526 = vpop.permute.xlu0 %1525
        %1527 = vrot.lane.b32.xlu0 %v730, 24
        %v1528 = vpop.permute.xlu0 %1527
        %1529 = vrot.lane.b32.xlu0 %v731, 24
        %v1530 = vpop.permute.xlu0 %1529
        %1531 = vrot.lane.b32.xlu0 %v732, 24
        %v1532 = vpop.permute.xlu0 %1531
        %1597 = vrot.lane.b32.xlu0 %v733, 28
        %v1598 = vpop.permute.xlu0 %1597
        %1599 = vrot.lane.b32.xlu0 %v734, 28
        %v1600 = vpop.permute.xlu0 %1599
        %1601 = vrot.lane.b32.xlu0 %v735, 28
        %v1602 = vpop.permute.xlu0 %1601
        %1603 = vrot.lane.b32.xlu0 %v736, 28
        %v1604 = vpop.permute.xlu0 %1603
        %1605 = vrot.lane.b32.xlu0 %v737, 28
        %v1606 = vpop.permute.xlu0 %1605
        %1607 = vrot.lane.b32.xlu0 %v738, 28
        %v1608 = vpop.permute.xlu0 %1607
        %1609 = vrot.lane.b32.xlu0 %v739, 28
        %v1610 = vpop.permute.xlu0 %1609
        %1611 = vrot.lane.b32.xlu0 %v740, 28
        %v1612 = vpop.permute.xlu0 %1611
        %1613 = vrot.lane.b32.xlu0 %v741, 28
        %v1614 = vpop.permute.xlu0 %1613
        %1615 = vrot.lane.b32.xlu0 %v742, 28
        %v1616 = vpop.permute.xlu0 %1615
        %1617 = vrot.lane.b32.xlu0 %v743, 28
        %v1618 = vpop.permute.xlu0 %1617
        %1619 = vrot.lane.b32.xlu0 %v744, 28
        %v1620 = vpop.permute.xlu0 %1619
        %1621 = vrot.lane.b32.xlu0 %v745, 28
        %v1622 = vpop.permute.xlu0 %1621
        %1623 = vrot.lane.b32.xlu0 %v746, 28
        %v1624 = vpop.permute.xlu0 %1623
        %1625 = vrot.lane.b32.xlu0 %v747, 28
        %v1626 = vpop.permute.xlu0 %1625
        %1627 = vrot.lane.b32.xlu0 %v748, 28
        %v1628 = vpop.permute.xlu0 %1627
        %1629 = vrot.lane.b32.xlu0 %v749, 28
        %v1630 = vpop.permute.xlu0 %1629
        %1631 = vrot.lane.b32.xlu0 %v750, 28
        %v1632 = vpop.permute.xlu0 %1631
        %1633 = vrot.lane.b32.xlu0 %v751, 28
        %v1634 = vpop.permute.xlu0 %1633
        %1635 = vrot.lane.b32.xlu0 %v752, 28
        %v1636 = vpop.permute.xlu0 %1635
        %1637 = vrot.lane.b32.xlu0 %v753, 28
        %v1638 = vpop.permute.xlu0 %1637
        %1639 = vrot.lane.b32.xlu0 %v754, 28
        %v1640 = vpop.permute.xlu0 %1639
        %1641 = vrot.lane.b32.xlu0 %v755, 28
        %v1642 = vpop.permute.xlu0 %1641
        %1643 = vrot.lane.b32.xlu0 %v756, 28
        %v1644 = vpop.permute.xlu0 %1643
        %1645 = vrot.lane.b32.xlu0 %v757, 28
        %v1646 = vpop.permute.xlu0 %1645
        %1647 = vrot.lane.b32.xlu0 %v758, 28
        %v1648 = vpop.permute.xlu0 %1647
        %1649 = vrot.lane.b32.xlu0 %v759, 28
        %v1650 = vpop.permute.xlu0 %1649
        %1651 = vrot.lane.b32.xlu0 %v760, 28
        %v1652 = vpop.permute.xlu0 %1651
        %1653 = vrot.lane.b32.xlu0 %v761, 28
        %v1654 = vpop.permute.xlu0 %1653
        %1655 = vrot.lane.b32.xlu0 %v762, 28
        %v1656 = vpop.permute.xlu0 %1655
        %1657 = vrot.lane.b32.xlu0 %v763, 28
        %v1658 = vpop.permute.xlu0 %1657
        %1659 = vrot.lane.b32.xlu0 %v764, 28
        %v1660 = vpop.permute.xlu0 %1659
        %1725 = vrot.lane.b32.xlu0 %v765, 32
        %v1726 = vpop.permute.xlu0 %1725
        %1727 = vrot.lane.b32.xlu0 %v766, 32
        %v1728 = vpop.permute.xlu0 %1727
        %1729 = vrot.lane.b32.xlu0 %v767, 32
        %v1730 = vpop.permute.xlu0 %1729
        %1731 = vrot.lane.b32.xlu0 %v768, 32
        %v1732 = vpop.permute.xlu0 %1731
        %1733 = vrot.lane.b32.xlu0 %v769, 32
        %v1734 = vpop.permute.xlu0 %1733
        %1735 = vrot.lane.b32.xlu0 %v770, 32
        %v1736 = vpop.permute.xlu0 %1735
        %1737 = vrot.lane.b32.xlu0 %v771, 32
        %v1738 = vpop.permute.xlu0 %1737
        %1739 = vrot.lane.b32.xlu0 %v772, 32
        %v1740 = vpop.permute.xlu0 %1739
        %1741 = vrot.lane.b32.xlu0 %v773, 32
        %v1742 = vpop.permute.xlu0 %1741
        %1743 = vrot.lane.b32.xlu0 %v774, 32
        %v1744 = vpop.permute.xlu0 %1743
        %1745 = vrot.lane.b32.xlu0 %v775, 32
        %v1746 = vpop.permute.xlu0 %1745
        %1747 = vrot.lane.b32.xlu0 %v776, 32
        %v1748 = vpop.permute.xlu0 %1747
        %1749 = vrot.lane.b32.xlu0 %v777, 32
        %v1750 = vpop.permute.xlu0 %1749
        %1751 = vrot.lane.b32.xlu0 %v778, 32
        %v1752 = vpop.permute.xlu0 %1751
        %1753 = vrot.lane.b32.xlu0 %v779, 32
        %v1754 = vpop.permute.xlu0 %1753
        %1755 = vrot.lane.b32.xlu0 %v780, 32
        %v1756 = vpop.permute.xlu0 %1755
        %1757 = vrot.lane.b32.xlu0 %v781, 32
        %v1758 = vpop.permute.xlu0 %1757
        %1759 = vrot.lane.b32.xlu0 %v782, 32
        %v1760 = vpop.permute.xlu0 %1759
        %1761 = vrot.lane.b32.xlu0 %v783, 32
        %v1762 = vpop.permute.xlu0 %1761
        %1763 = vrot.lane.b32.xlu0 %v784, 32
        %v1764 = vpop.permute.xlu0 %1763
        %1765 = vrot.lane.b32.xlu0 %v785, 32
        %v1766 = vpop.permute.xlu0 %1765
        %1767 = vrot.lane.b32.xlu0 %v786, 32
        %v1768 = vpop.permute.xlu0 %1767
        %1769 = vrot.lane.b32.xlu0 %v787, 32
        %v1770 = vpop.permute.xlu0 %1769
        %1771 = vrot.lane.b32.xlu0 %v788, 32
        %v1772 = vpop.permute.xlu0 %1771
        %1773 = vrot.lane.b32.xlu0 %v789, 32
        %v1774 = vpop.permute.xlu0 %1773
        %1775 = vrot.lane.b32.xlu0 %v790, 32
        %v1776 = vpop.permute.xlu0 %1775
        %1777 = vrot.lane.b32.xlu0 %v791, 32
        %v1778 = vpop.permute.xlu0 %1777
        %1779 = vrot.lane.b32.xlu0 %v792, 32
        %v1780 = vpop.permute.xlu0 %1779
        %1781 = vrot.lane.b32.xlu0 %v793, 32
        %v1782 = vpop.permute.xlu0 %1781
        %1783 = vrot.lane.b32.xlu0 %v794, 32
        %v1784 = vpop.permute.xlu0 %1783
        %1785 = vrot.lane.b32.xlu0 %v795, 32
        %v1786 = vpop.permute.xlu0 %1785
        %1787 = vrot.lane.b32.xlu0 %v796, 32
        %v1788 = vpop.permute.xlu0 %1787
        %v1821 = vsel %vm331, %v508, %v830
        %v1822 = vsel %vm331, %v509, %v832
        %v1823 = vsel %vm331, %v510, %v834
        %v1824 = vsel %vm331, %v511, %v836
        %v1825 = vsel %vm331, %v512, %v838
        %v1826 = vsel %vm331, %v513, %v840
        %v1827 = vsel %vm331, %v514, %v842
        %v1828 = vsel %vm331, %v515, %v844
        %v1829 = vsel %vm331, %v516, %v846
        %v1830 = vsel %vm331, %v517, %v848
        %v1831 = vsel %vm331, %v518, %v850
        %v1832 = vsel %vm331, %v519, %v852
        %v1833 = vsel %vm331, %v520, %v854
        %v1834 = vsel %vm331, %v521, %v856
        %v1835 = vsel %vm331, %v522, %v858
        %v1836 = vsel %vm331, %v523, %v860
        %v1837 = vsel %vm331, %v524, %v862
        %v1838 = vsel %vm331, %v525, %v864
        %v1839 = vsel %vm331, %v526, %v866
        %v1840 = vsel %vm331, %v527, %v868
        %v1841 = vsel %vm331, %v528, %v870
        %v1842 = vsel %vm331, %v529, %v872
        %v1843 = vsel %vm331, %v530, %v874
        %v1844 = vsel %vm331, %v531, %v876
        %v1845 = vsel %vm331, %v532, %v878
        %v1846 = vsel %vm331, %v533, %v880
        %v1847 = vsel %vm331, %v534, %v882
        %v1848 = vsel %vm331, %v535, %v884
        %v1849 = vsel %vm331, %v536, %v886
        %v1850 = vsel %vm331, %v537, %v888
        %v1851 = vsel %vm331, %v538, %v890
        %v1852 = vsel %vm331, %v539, %v892
        %v1853 = vsel %vm387, %v1821, %v958
        %v1854 = vsel %vm387, %v1822, %v960
        %v1855 = vsel %vm387, %v1823, %v962
        %v1856 = vsel %vm387, %v1824, %v964
        %v1857 = vsel %vm387, %v1825, %v966
        %v1858 = vsel %vm387, %v1826, %v968
        %v1859 = vsel %vm387, %v1827, %v970
        %v1860 = vsel %vm387, %v1828, %v972
        %v1861 = vsel %vm387, %v1829, %v974
        %v1862 = vsel %vm387, %v1830, %v976
        %v1863 = vsel %vm387, %v1831, %v978
        %v1864 = vsel %vm387, %v1832, %v980
        %v1865 = vsel %vm387, %v1833, %v982
        %v1866 = vsel %vm387, %v1834, %v984
        %v1867 = vsel %vm387, %v1835, %v986
        %v1868 = vsel %vm387, %v1836, %v988
        %v1869 = vsel %vm387, %v1837, %v990
        %v1870 = vsel %vm387, %v1838, %v992
        %v1871 = vsel %vm387, %v1839, %v994
        %v1872 = vsel %vm387, %v1840, %v996
        %v1873 = vsel %vm387, %v1841, %v998
        %v1874 = vsel %vm387, %v1842, %v1000
        %v1875 = vsel %vm387, %v1843, %v1002
        %v1876 = vsel %vm387, %v1844, %v1004
        %v1877 = vsel %vm387, %v1845, %v1006
        %v1878 = vsel %vm387, %v1846, %v1008
        %v1879 = vsel %vm387, %v1847, %v1010
        %v1880 = vsel %vm387, %v1848, %v1012
        %v1881 = vsel %vm387, %v1849, %v1014
        %v1882 = vsel %vm387, %v1850, %v1016
        %v1883 = vsel %vm387, %v1851, %v1018
        %v1884 = vsel %vm387, %v1852, %v1020
        %vm1885 = vcmask 97280
        %v1886 = vsel %vm1885, %v1853, %v1086
        %v1887 = vsel %vm1885, %v1854, %v1088
        %v1888 = vsel %vm1885, %v1855, %v1090
        %v1889 = vsel %vm1885, %v1856, %v1092
        %v1890 = vsel %vm1885, %v1857, %v1094
        %v1891 = vsel %vm1885, %v1858, %v1096
        %v1892 = vsel %vm1885, %v1859, %v1098
        %v1893 = vsel %vm1885, %v1860, %v1100
        %v1894 = vsel %vm1885, %v1861, %v1102
        %v1895 = vsel %vm1885, %v1862, %v1104
        %v1896 = vsel %vm1885, %v1863, %v1106
        %v1897 = vsel %vm1885, %v1864, %v1108
        %v1898 = vsel %vm1885, %v1865, %v1110
        %v1899 = vsel %vm1885, %v1866, %v1112
        %v1900 = vsel %vm1885, %v1867, %v1114
        %v1901 = vsel %vm1885, %v1868, %v1116
        %v1902 = vsel %vm1885, %v1869, %v1118
        %v1903 = vsel %vm1885, %v1870, %v1120
        %v1904 = vsel %vm1885, %v1871, %v1122
        %v1905 = vsel %vm1885, %v1872, %v1124
        %v1906 = vsel %vm1885, %v1873, %v1126
        %v1907 = vsel %vm1885, %v1874, %v1128
        %v1908 = vsel %vm1885, %v1875, %v1130
        %v1909 = vsel %vm1885, %v1876, %v1132
        %v1910 = vsel %vm1885, %v1877, %v1134
        %v1911 = vsel %vm1885, %v1878, %v1136
        %v1912 = vsel %vm1885, %v1879, %v1138
        %v1913 = vsel %vm1885, %v1880, %v1140
        %v1914 = vsel %vm1885, %v1881, %v1142
        %v1915 = vsel %vm1885, %v1882, %v1144
        %v1916 = vsel %vm1885, %v1883, %v1146
        %v1917 = vsel %vm1885, %v1884, %v1148
        %vm1918 = vcmask 130048
        %v1919 = vsel %vm1918, %v1886, %v1214
        %v1920 = vsel %vm1918, %v1887, %v1216
        %v1921 = vsel %vm1918, %v1888, %v1218
        %v1922 = vsel %vm1918, %v1889, %v1220
        %v1923 = vsel %vm1918, %v1890, %v1222
        %v1924 = vsel %vm1918, %v1891, %v1224
        %v1925 = vsel %vm1918, %v1892, %v1226
        %v1926 = vsel %vm1918, %v1893, %v1228
        %v1927 = vsel %vm1918, %v1894, %v1230
        %v1928 = vsel %vm1918, %v1895, %v1232
        %v1929 = vsel %vm1918, %v1896, %v1234
        %v1930 = vsel %vm1918, %v1897, %v1236
        %v1931 = vsel %vm1918, %v1898, %v1238
        %v1932 = vsel %vm1918, %v1899, %v1240
        %v1933 = vsel %vm1918, %v1900, %v1242
        %v1934 = vsel %vm1918, %v1901, %v1244
        %v1935 = vsel %vm1918, %v1902, %v1246
        %v1936 = vsel %vm1918, %v1903, %v1248
        %v1937 = vsel %vm1918, %v1904, %v1250
        %v1938 = vsel %vm1918, %v1905, %v1252
        %v1939 = vsel %vm1918, %v1906, %v1254
        %v1940 = vsel %vm1918, %v1907, %v1256
        %v1941 = vsel %vm1918, %v1908, %v1258
        %v1942 = vsel %vm1918, %v1909, %v1260
        %v1943 = vsel %vm1918, %v1910, %v1262
        %v1944 = vsel %vm1918, %v1911, %v1264
        %v1945 = vsel %vm1918, %v1912, %v1266
        %v1946 = vsel %vm1918, %v1913, %v1268
        %v1947 = vsel %vm1918, %v1914, %v1270
        %v1948 = vsel %vm1918, %v1915, %v1272
        %v1949 = vsel %vm1918, %v1916, %v1274
        %v1950 = vsel %vm1918, %v1917, %v1276
        %vm1951 = vcmask 162816
        %v1952 = vsel %vm1951, %v1919, %v1342
        %v1953 = vsel %vm1951, %v1920, %v1344
        %v1954 = vsel %vm1951, %v1921, %v1346
        %v1955 = vsel %vm1951, %v1922, %v1348
        %v1956 = vsel %vm1951, %v1923, %v1350
        %v1957 = vsel %vm1951, %v1924, %v1352
        %v1958 = vsel %vm1951, %v1925, %v1354
        %v1959 = vsel %vm1951, %v1926, %v1356
        %v1960 = vsel %vm1951, %v1927, %v1358
        %v1961 = vsel %vm1951, %v1928, %v1360
        %v1962 = vsel %vm1951, %v1929, %v1362
        %v1963 = vsel %vm1951, %v1930, %v1364
        %v1964 = vsel %vm1951, %v1931, %v1366
        %v1965 = vsel %vm1951, %v1932, %v1368
        %v1966 = vsel %vm1951, %v1933, %v1370
        %v1967 = vsel %vm1951, %v1934, %v1372
        %v1968 = vsel %vm1951, %v1935, %v1374
        %v1969 = vsel %vm1951, %v1936, %v1376
        %v1970 = vsel %vm1951, %v1937, %v1378
        %v1971 = vsel %vm1951, %v1938, %v1380
        %v1972 = vsel %vm1951, %v1939, %v1382
        %v1973 = vsel %vm1951, %v1940, %v1384
        %v1974 = vsel %vm1951, %v1941, %v1386
        %v1975 = vsel %vm1951, %v1942, %v1388
        %v1976 = vsel %vm1951, %v1943, %v1390
        %v1977 = vsel %vm1951, %v1944, %v1392
        %v1978 = vsel %vm1951, %v1945, %v1394
        %v1979 = vsel %vm1951, %v1946, %v1396
        %v1980 = vsel %vm1951, %v1947, %v1398
        %v1981 = vsel %vm1951, %v1948, %v1400
        %v1982 = vsel %vm1951, %v1949, %v1402
        %v1983 = vsel %vm1951, %v1950, %v1404
        %vm1984 = vcmask 195584
        %v1985 = vsel %vm1984, %v1952, %v1470
        %v1986 = vsel %vm1984, %v1953, %v1472
        %v1987 = vsel %vm1984, %v1954, %v1474
        %v1988 = vsel %vm1984, %v1955, %v1476
        %v1989 = vsel %vm1984, %v1956, %v1478
        %v1990 = vsel %vm1984, %v1957, %v1480
        %v1991 = vsel %vm1984, %v1958, %v1482
        %v1992 = vsel %vm1984, %v1959, %v1484
        %v1993 = vsel %vm1984, %v1960, %v1486
        %v1994 = vsel %vm1984, %v1961, %v1488
        %v1995 = vsel %vm1984, %v1962, %v1490
        %v1996 = vsel %vm1984, %v1963, %v1492
        %v1997 = vsel %vm1984, %v1964, %v1494
        %v1998 = vsel %vm1984, %v1965, %v1496
        %v1999 = vsel %vm1984, %v1966, %v1498
        %v2000 = vsel %vm1984, %v1967, %v1500
        %v2001 = vsel %vm1984, %v1968, %v1502
        %v2002 = vsel %vm1984, %v1969, %v1504
        %v2003 = vsel %vm1984, %v1970, %v1506
        %v2004 = vsel %vm1984, %v1971, %v1508
        %v2005 = vsel %vm1984, %v1972, %v1510
        %v2006 = vsel %vm1984, %v1973, %v1512
        %v2007 = vsel %vm1984, %v1974, %v1514
        %v2008 = vsel %vm1984, %v1975, %v1516
        %v2009 = vsel %vm1984, %v1976, %v1518
        %v2010 = vsel %vm1984, %v1977, %v1520
        %v2011 = vsel %vm1984, %v1978, %v1522
        %v2012 = vsel %vm1984, %v1979, %v1524
        %v2013 = vsel %vm1984, %v1980, %v1526
        %v2014 = vsel %vm1984, %v1981, %v1528
        %v2015 = vsel %vm1984, %v1982, %v1530
        %v2016 = vsel %vm1984, %v1983, %v1532
        %vm2017 = vcmask 228352
        %v2018 = vsel %vm2017, %v1985, %v1598
        %v2019 = vsel %vm2017, %v1986, %v1600
        %v2020 = vsel %vm2017, %v1987, %v1602
        %v2021 = vsel %vm2017, %v1988, %v1604
        %v2022 = vsel %vm2017, %v1989, %v1606
        %v2023 = vsel %vm2017, %v1990, %v1608
        %v2024 = vsel %vm2017, %v1991, %v1610
        %v2025 = vsel %vm2017, %v1992, %v1612
        %v2026 = vsel %vm2017, %v1993, %v1614
        %v2027 = vsel %vm2017, %v1994, %v1616
        %v2028 = vsel %vm2017, %v1995, %v1618
        %v2029 = vsel %vm2017, %v1996, %v1620
        %v2030 = vsel %vm2017, %v1997, %v1622
        %v2031 = vsel %vm2017, %v1998, %v1624
        %v2032 = vsel %vm2017, %v1999, %v1626
        %v2033 = vsel %vm2017, %v2000, %v1628
        %v2034 = vsel %vm2017, %v2001, %v1630
        %v2035 = vsel %vm2017, %v2002, %v1632
        %v2036 = vsel %vm2017, %v2003, %v1634
        %v2037 = vsel %vm2017, %v2004, %v1636
        %v2038 = vsel %vm2017, %v2005, %v1638
        %v2039 = vsel %vm2017, %v2006, %v1640
        %v2040 = vsel %vm2017, %v2007, %v1642
        %v2041 = vsel %vm2017, %v2008, %v1644
        %v2042 = vsel %vm2017, %v2009, %v1646
        %v2043 = vsel %vm2017, %v2010, %v1648
        %v2044 = vsel %vm2017, %v2011, %v1650
        %v2045 = vsel %vm2017, %v2012, %v1652
        %v2046 = vsel %vm2017, %v2013, %v1654
        %v2047 = vsel %vm2017, %v2014, %v1656
        %v2048 = vsel %vm2017, %v2015, %v1658
        %v2049 = vsel %vm2017, %v2016, %v1660
        %vm2050 = vcmask 261120
        %v2051 = vsel %vm2050, %v2018, %v1726
        %v2052 = vsel %vm2050, %v2019, %v1728
        %v2053 = vsel %vm2050, %v2020, %v1730
        %v2054 = vsel %vm2050, %v2021, %v1732
        %v2055 = vsel %vm2050, %v2022, %v1734
        %v2056 = vsel %vm2050, %v2023, %v1736
        %v2057 = vsel %vm2050, %v2024, %v1738
        %v2058 = vsel %vm2050, %v2025, %v1740
        %v2059 = vsel %vm2050, %v2026, %v1742
        %v2060 = vsel %vm2050, %v2027, %v1744
        %v2061 = vsel %vm2050, %v2028, %v1746
        %v2062 = vsel %vm2050, %v2029, %v1748
        %v2063 = vsel %vm2050, %v2030, %v1750
        %v2064 = vsel %vm2050, %v2031, %v1752
        %v2065 = vsel %vm2050, %v2032, %v1754
        %v2066 = vsel %vm2050, %v2033, %v1756
        %v2067 = vsel %vm2050, %v2034, %v1758
        %v2068 = vsel %vm2050, %v2035, %v1760
        %v2069 = vsel %vm2050, %v2036, %v1762
        %v2070 = vsel %vm2050, %v2037, %v1764
        %v2071 = vsel %vm2050, %v2038, %v1766
        %v2072 = vsel %vm2050, %v2039, %v1768
        %v2073 = vsel %vm2050, %v2040, %v1770
        %v2074 = vsel %vm2050, %v2041, %v1772
        %v2075 = vsel %vm2050, %v2042, %v1774
        %v2076 = vsel %vm2050, %v2043, %v1776
        %v2077 = vsel %vm2050, %v2044, %v1778
        %v2078 = vsel %vm2050, %v2045, %v1780
        %v2079 = vsel %vm2050, %v2046, %v1782
        %v2080 = vsel %vm2050, %v2047, %v1784
        %v2081 = vsel %vm2050, %v2048, %v1786
        %v2082 = vsel %vm2050, %v2049, %v1788
        %v2083 = vld [vmem:[%s1] sm:$0xff]
        %v2084 = vld [vmem:[%s1 + $0x8] sm:$0xff]
        %v2085 = vld [vmem:[%s1 + $0x10] sm:$0xff]
        %v2086 = vld [vmem:[%s1 + $0x18] sm:$0xff]
        %v2087 = vld [vmem:[%s1 + $0x20] sm:$0xf]
        %v2088 = vld [vmem:[%s2] sm:$0x1]
        %v2090 = vlaneseq
        %v2091 = vshrl.u32 %v2090, 7
        %v2092 = vsub.s32 0, %v2091
        %v2093 = vrot.slane %v2088, %v2092
        %vm2095 = vcmask 293888
        %v2097 = vsel %vm2095, %v2051, 0
        %v2100 = vsel %vm2095, %v2052, 0
        %v2103 = vsel %vm2095, %v2053, 0
        %v2106 = vsel %vm2095, %v2054, 0
        %v2109 = vsel %vm2095, %v2055, 0
        %v2112 = vsel %vm2095, %v2056, 0
        %v2115 = vsel %vm2095, %v2057, 0
        %v2118 = vsel %vm2095, %v2058, 0
        %v2121 = vsel %vm2095, %v2059, 0
        %v2124 = vsel %vm2095, %v2060, 0
        %v2127 = vsel %vm2095, %v2061, 0
        %v2130 = vsel %vm2095, %v2062, 0
        %v2133 = vsel %vm2095, %v2063, 0
        %v2136 = vsel %vm2095, %v2064, 0
        %v2139 = vsel %vm2095, %v2065, 0
        %v2142 = vsel %vm2095, %v2066, 0
        %v2145 = vsel %vm2095, %v2067, 0
        %v2148 = vsel %vm2095, %v2068, 0
        %v2151 = vsel %vm2095, %v2069, 0
        %v2154 = vsel %vm2095, %v2070, 0
        %v2157 = vsel %vm2095, %v2071, 0
        %v2160 = vsel %vm2095, %v2072, 0
        %v2163 = vsel %vm2095, %v2073, 0
        %v2166 = vsel %vm2095, %v2074, 0
        %v2169 = vsel %vm2095, %v2075, 0
        %v2172 = vsel %vm2095, %v2076, 0
        %v2175 = vsel %vm2095, %v2077, 0
        %v2178 = vsel %vm2095, %v2078, 0
        %v2181 = vsel %vm2095, %v2079, 0
        %v2184 = vsel %vm2095, %v2080, 0
        %v2187 = vsel %vm2095, %v2081, 0
        %v2190 = vsel %vm2095, %v2082, 0
        %vm2192 = vcmask 1043456
        %v2194 = vsel %vm2192, %v2087, 0
        %2196 = vmatprep.subr.mxu0 0.0
        %2197 = vmatpush1.msra.mxu0 0.0
        %2198 = vmatprep.subr.mxu0 0.0
        %2199 = vmatpush1.msra.mxu0 0.0
        %2200 = vmatprep.subr.mxu0 0.0
        %2201 = vmatpush1.msra.mxu0 0.0
        %2202 = vmatprep.subr.mxu0 0.0
        %2203 = vmatpush1.msra.mxu0 0.0
        %2204 = vmatprep.subr.mxu0 0.0
        %2205 = vmatpush1.msra.mxu0 0.0
        %2206 = vmatprep.subr.mxu0 0.0
        %2207 = vmatpush1.msra.mxu0 0.0
        %2208 = vmatprep.subr.mxu0 0.0
        %2209 = vmatpush1.msra.mxu0 0.0
        %2210 = vmatprep.subr.mxu0 0.0
        %2211 = vmatpush1.msra.mxu0 0.0
        %2212 = vmatprep.subr.mxu0 0.0
        %2213 = vmatpush1.msra.mxu0 0.0
        %2214 = vmatprep.subr.mxu0 0.0
        %2215 = vmatpush1.msra.mxu0 0.0
        %2216 = vmatprep.subr.mxu0 0.0
        %2217 = vmatpush1.msra.mxu0 0.0
        %2218 = vmatprep.subr.mxu0 0.0
        %2219 = vmatpush1.msra.mxu0 %v2194
        %2220 = vmatprep.subr.mxu0 0.0
        %2221 = vmatpush1.msra.mxu0 %v2086
        %2222 = vmatprep.subr.mxu0 0.0
        %2223 = vmatpush1.msra.mxu0 %v2085
        %2224 = vmatprep.subr.mxu0 0.0
        %2225 = vmatpush1.msra.mxu0 %v2084
        %2226 = vmatprep.subr.mxu0 0.0
        %2227 = vmatpush1.msra.mxu0 %v2083
        %2228 = vmatprep.subr.mxu0 0.0
        %2229 = vmatpush2.msra.mxu0 0.0
        %2230 = vmatprep.subr.mxu0 0.0
        %2231 = vmatpush2.msra.mxu0 0.0
        %2232 = vmatprep.subr.mxu0 0.0
        %2233 = vmatpush2.msra.mxu0 0.0
        %2234 = vmatprep.subr.mxu0 0.0
        %2235 = vmatpush2.msra.mxu0 0.0
        %2236 = vmatprep.subr.mxu0 0.0
        %2237 = vmatpush2.msra.mxu0 0.0
        %2238 = vmatprep.subr.mxu0 0.0
        %2239 = vmatpush2.msra.mxu0 0.0
        %2240 = vmatprep.subr.mxu0 0.0
        %2241 = vmatpush2.msra.mxu0 0.0
        %2242 = vmatprep.subr.mxu0 0.0
        %2243 = vmatpush2.msra.mxu0 0.0
        %2244 = vmatprep.subr.mxu0 0.0
        %2245 = vmatpush2.msra.mxu0 0.0
        %2246 = vmatprep.subr.mxu0 0.0
        %2247 = vmatpush2.msra.mxu0 0.0
        %2248 = vmatprep.subr.mxu0 0.0
        %2249 = vmatpush2.msra.mxu0 0.0
        %2250 = vmatprep.subr.mxu0 0.0
        %2251 = vmatpush2.msra.mxu0 0.0
        %2252 = vmatprep.subr.mxu0 0.0
        %2253 = vmatpush2.msra.mxu0 0.0
        %2254 = vmatprep.subr.mxu0 0.0
        %2255 = vmatpush2.msra.mxu0 0.0
        %2256 = vmatprep.subr.mxu0 0.0
        %2257 = vmatpush2.msra.mxu0 0.0
        %2258 = vmatprep.subr.mxu0 0.0
        %2259 = vmatpush2.msra.mxu0 0.0
        %2260 = vmatprep.mubr.f32.mxu0 0.0
        %2261 = vmatmul.mubr.f32.gmra.mxu0 %v2097
        %v2262 = vpop.f32.mrf.mxu0
        %v2263 = vadd.f32 %v2093, %v2262
        %v2264 = vpop.f32.mrf.mxu0
        %2265 = vmatprep.mubr.f32.mxu0 0.0
        %2266 = vmatmul.mubr.f32.gmra.mxu0 %v2100
        %v2267 = vpop.f32.mrf.mxu0
        %v2268 = vadd.f32 %v2093, %v2267
        %v2269 = vpop.f32.mrf.mxu0
        %2270 = vmatprep.mubr.f32.mxu0 0.0
        %2271 = vmatmul.mubr.f32.gmra.mxu0 %v2103
        %v2272 = vpop.f32.mrf.mxu0
        %v2273 = vadd.f32 %v2093, %v2272
        %v2274 = vpop.f32.mrf.mxu0
        %2275 = vmatprep.mubr.f32.mxu0 0.0
        %2276 = vmatmul.mubr.f32.gmra.mxu0 %v2106
        %v2277 = vpop.f32.mrf.mxu0
        %v2278 = vadd.f32 %v2093, %v2277
        %v2279 = vpop.f32.mrf.mxu0
        %2280 = vmatprep.mubr.f32.mxu0 0.0
        %2281 = vmatmul.mubr.f32.gmra.mxu0 %v2109
        %v2282 = vpop.f32.mrf.mxu0
        %v2283 = vadd.f32 %v2093, %v2282
        %v2284 = vpop.f32.mrf.mxu0
        %2285 = vmatprep.mubr.f32.mxu0 0.0
        %2286 = vmatmul.mubr.f32.gmra.mxu0 %v2112
        %v2287 = vpop.f32.mrf.mxu0
        %v2288 = vadd.f32 %v2093, %v2287
        %v2289 = vpop.f32.mrf.mxu0
        %2290 = vmatprep.mubr.f32.mxu0 0.0
        %2291 = vmatmul.mubr.f32.gmra.mxu0 %v2115
        %v2292 = vpop.f32.mrf.mxu0
        %v2293 = vadd.f32 %v2093, %v2292
        %v2294 = vpop.f32.mrf.mxu0
        %2295 = vmatprep.mubr.f32.mxu0 0.0
        %2296 = vmatmul.mubr.f32.gmra.mxu0 %v2118
        %v2297 = vpop.f32.mrf.mxu0
        %v2298 = vadd.f32 %v2093, %v2297
        %v2299 = vpop.f32.mrf.mxu0
        %2300 = vmatprep.mubr.f32.mxu0 0.0
        %2301 = vmatmul.mubr.f32.gmra.mxu0 %v2121
        %v2302 = vpop.f32.mrf.mxu0
        %v2303 = vadd.f32 %v2093, %v2302
        %v2304 = vpop.f32.mrf.mxu0
        %2305 = vmatprep.mubr.f32.mxu0 0.0
        %2306 = vmatmul.mubr.f32.gmra.mxu0 %v2124
        %v2307 = vpop.f32.mrf.mxu0
        %v2308 = vadd.f32 %v2093, %v2307
        %v2309 = vpop.f32.mrf.mxu0
        %2310 = vmatprep.mubr.f32.mxu0 0.0
        %2311 = vmatmul.mubr.f32.gmra.mxu0 %v2127
        %v2312 = vpop.f32.mrf.mxu0
        %v2313 = vadd.f32 %v2093, %v2312
        %v2314 = vpop.f32.mrf.mxu0
        %2315 = vmatprep.mubr.f32.mxu0 0.0
        %2316 = vmatmul.mubr.f32.gmra.mxu0 %v2130
        %v2317 = vpop.f32.mrf.mxu0
        %v2318 = vadd.f32 %v2093, %v2317
        %v2319 = vpop.f32.mrf.mxu0
        %2320 = vmatprep.mubr.f32.mxu0 0.0
        %2321 = vmatmul.mubr.f32.gmra.mxu0 %v2133
        %v2322 = vpop.f32.mrf.mxu0
        %v2323 = vadd.f32 %v2093, %v2322
        %v2324 = vpop.f32.mrf.mxu0
        %2325 = vmatprep.mubr.f32.mxu0 0.0
        %2326 = vmatmul.mubr.f32.gmra.mxu0 %v2136
        %v2327 = vpop.f32.mrf.mxu0
        %v2328 = vadd.f32 %v2093, %v2327
        %v2329 = vpop.f32.mrf.mxu0
        %2330 = vmatprep.mubr.f32.mxu0 0.0
        %2331 = vmatmul.mubr.f32.gmra.mxu0 %v2139
        %v2332 = vpop.f32.mrf.mxu0
        %v2333 = vadd.f32 %v2093, %v2332
        %v2334 = vpop.f32.mrf.mxu0
        %2335 = vmatprep.mubr.f32.mxu0 0.0
        %2336 = vmatmul.mubr.f32.gmra.mxu0 %v2142
        %v2337 = vpop.f32.mrf.mxu0
        %v2338 = vadd.f32 %v2093, %v2337
        %v2339 = vpop.f32.mrf.mxu0
        %2340 = vmatprep.mubr.f32.mxu0 0.0
        %2341 = vmatmul.mubr.f32.gmra.mxu0 %v2145
        %v2342 = vpop.f32.mrf.mxu0
        %v2343 = vadd.f32 %v2093, %v2342
        %v2344 = vpop.f32.mrf.mxu0
        %2345 = vmatprep.mubr.f32.mxu0 0.0
        %2346 = vmatmul.mubr.f32.gmra.mxu0 %v2148
        %v2347 = vpop.f32.mrf.mxu0
        %v2348 = vadd.f32 %v2093, %v2347
        %v2349 = vpop.f32.mrf.mxu0
        %2350 = vmatprep.mubr.f32.mxu0 0.0
        %2351 = vmatmul.mubr.f32.gmra.mxu0 %v2151
        %v2352 = vpop.f32.mrf.mxu0
        %v2353 = vadd.f32 %v2093, %v2352
        %v2354 = vpop.f32.mrf.mxu0
        %2355 = vmatprep.mubr.f32.mxu0 0.0
        %2356 = vmatmul.mubr.f32.gmra.mxu0 %v2154
        %v2357 = vpop.f32.mrf.mxu0
        %v2358 = vadd.f32 %v2093, %v2357
        %v2359 = vpop.f32.mrf.mxu0
        %2360 = vmatprep.mubr.f32.mxu0 0.0
        %2361 = vmatmul.mubr.f32.gmra.mxu0 %v2157
        %v2362 = vpop.f32.mrf.mxu0
        %v2363 = vadd.f32 %v2093, %v2362
        %v2364 = vpop.f32.mrf.mxu0
        %2365 = vmatprep.mubr.f32.mxu0 0.0
        %2366 = vmatmul.mubr.f32.gmra.mxu0 %v2160
        %v2367 = vpop.f32.mrf.mxu0
        %v2368 = vadd.f32 %v2093, %v2367
        %v2369 = vpop.f32.mrf.mxu0
        %2370 = vmatprep.mubr.f32.mxu0 0.0
        %2371 = vmatmul.mubr.f32.gmra.mxu0 %v2163
        %v2372 = vpop.f32.mrf.mxu0
        %v2373 = vadd.f32 %v2093, %v2372
        %v2374 = vpop.f32.mrf.mxu0
        %2375 = vmatprep.mubr.f32.mxu0 0.0
        %2376 = vmatmul.mubr.f32.gmra.mxu0 %v2166
        %v2377 = vpop.f32.mrf.mxu0
        %v2378 = vadd.f32 %v2093, %v2377
        %v2379 = vpop.f32.mrf.mxu0
        %2380 = vmatprep.mubr.f32.mxu0 0.0
        %2381 = vmatmul.mubr.f32.gmra.mxu0 %v2169
        %v2382 = vpop.f32.mrf.mxu0
        %v2383 = vadd.f32 %v2093, %v2382
        %v2384 = vpop.f32.mrf.mxu0
        %2385 = vmatprep.mubr.f32.mxu0 0.0
        %2386 = vmatmul.mubr.f32.gmra.mxu0 %v2172
        %v2387 = vpop.f32.mrf.mxu0
        %v2388 = vadd.f32 %v2093, %v2387
        %v2389 = vpop.f32.mrf.mxu0
        %2390 = vmatprep.mubr.f32.mxu0 0.0
        %2391 = vmatmul.mubr.f32.gmra.mxu0 %v2175
        %v2392 = vpop.f32.mrf.mxu0
        %v2393 = vadd.f32 %v2093, %v2392
        %v2394 = vpop.f32.mrf.mxu0
        %2395 = vmatprep.mubr.f32.mxu0 0.0
        %2396 = vmatmul.mubr.f32.gmra.mxu0 %v2178
        %v2397 = vpop.f32.mrf.mxu0
        %v2398 = vadd.f32 %v2093, %v2397
        %v2399 = vpop.f32.mrf.mxu0
        %2400 = vmatprep.mubr.f32.mxu0 0.0
        %2401 = vmatmul.mubr.f32.gmra.mxu0 %v2181
        %v2402 = vpop.f32.mrf.mxu0
        %v2403 = vadd.f32 %v2093, %v2402
        %v2404 = vpop.f32.mrf.mxu0
        %2405 = vmatprep.mubr.f32.mxu0 0.0
        %2406 = vmatmul.mubr.f32.gmra.mxu0 %v2184
        %v2407 = vpop.f32.mrf.mxu0
        %v2408 = vadd.f32 %v2093, %v2407
        %v2409 = vpop.f32.mrf.mxu0
        %2410 = vmatprep.mubr.f32.mxu0 0.0
        %2411 = vmatmul.mubr.f32.gmra.mxu0 %v2187
        %v2412 = vpop.f32.mrf.mxu0
        %v2413 = vadd.f32 %v2093, %v2412
        %v2414 = vpop.f32.mrf.mxu0
        %2415 = vmatprep.mubr.f32.mxu0 0.0
        %2416 = vmatmul.mubr.f32.gmra.mxu0 %v2190
        %v2417 = vpop.f32.mrf.mxu0
        %v2418 = vadd.f32 %v2093, %v2417
        %v2419 = vpop.f32.mrf.mxu0
        %2420 = vdwg.mxu0
        %vm2421 = vcmp.gt.f32.partialorder %v2263, 0.0
        %vm2422 = vcmp.gt.f32.partialorder %v2268, 0.0
        %vm2423 = vcmp.gt.f32.partialorder %v2273, 0.0
        %vm2424 = vcmp.gt.f32.partialorder %v2278, 0.0
        %vm2425 = vcmp.gt.f32.partialorder %v2283, 0.0
        %vm2426 = vcmp.gt.f32.partialorder %v2288, 0.0
        %vm2427 = vcmp.gt.f32.partialorder %v2293, 0.0
        %vm2428 = vcmp.gt.f32.partialorder %v2298, 0.0
        %vm2429 = vcmp.gt.f32.partialorder %v2303, 0.0
        %vm2430 = vcmp.gt.f32.partialorder %v2308, 0.0
        %vm2431 = vcmp.gt.f32.partialorder %v2313, 0.0
        %vm2432 = vcmp.gt.f32.partialorder %v2318, 0.0
        %vm2433 = vcmp.gt.f32.partialorder %v2323, 0.0
        %vm2434 = vcmp.gt.f32.partialorder %v2328, 0.0
        %vm2435 = vcmp.gt.f32.partialorder %v2333, 0.0
        %vm2436 = vcmp.gt.f32.partialorder %v2338, 0.0
        %vm2437 = vcmp.gt.f32.partialorder %v2343, 0.0
        %vm2438 = vcmp.gt.f32.partialorder %v2348, 0.0
        %vm2439 = vcmp.gt.f32.partialorder %v2353, 0.0
        %vm2440 = vcmp.gt.f32.partialorder %v2358, 0.0
        %vm2441 = vcmp.gt.f32.partialorder %v2363, 0.0
        %vm2442 = vcmp.gt.f32.partialorder %v2368, 0.0
        %vm2443 = vcmp.gt.f32.partialorder %v2373, 0.0
        %vm2444 = vcmp.gt.f32.partialorder %v2378, 0.0
        %vm2445 = vcmp.gt.f32.partialorder %v2383, 0.0
        %vm2446 = vcmp.gt.f32.partialorder %v2388, 0.0
        %vm2447 = vcmp.gt.f32.partialorder %v2393, 0.0
        %vm2448 = vcmp.gt.f32.partialorder %v2398, 0.0
        %vm2449 = vcmp.gt.f32.partialorder %v2403, 0.0
        %vm2450 = vcmp.gt.f32.partialorder %v2408, 0.0
        %vm2451 = vcmp.gt.f32.partialorder %v2413, 0.0
        %vm2452 = vcmp.gt.f32.partialorder %v2418, 0.0
        %v2453 = vmul.f32 %v2263, 0.01
        %v2454 = vmul.f32 %v2268, 0.01
        %v2455 = vmul.f32 %v2273, 0.01
        %v2456 = vmul.f32 %v2278, 0.01
        %v2457 = vmul.f32 %v2283, 0.01
        %v2458 = vmul.f32 %v2288, 0.01
        %v2459 = vmul.f32 %v2293, 0.01
        %v2460 = vmul.f32 %v2298, 0.01
        %v2461 = vmul.f32 %v2303, 0.01
        %v2462 = vmul.f32 %v2308, 0.01
        %v2463 = vmul.f32 %v2313, 0.01
        %v2464 = vmul.f32 %v2318, 0.01
        %v2465 = vmul.f32 %v2323, 0.01
        %v2466 = vmul.f32 %v2328, 0.01
        %v2467 = vmul.f32 %v2333, 0.01
        %v2468 = vmul.f32 %v2338, 0.01
        %v2469 = vmul.f32 %v2343, 0.01
        %v2470 = vmul.f32 %v2348, 0.01
        %v2471 = vmul.f32 %v2353, 0.01
        %v2472 = vmul.f32 %v2358, 0.01
        %v2473 = vmul.f32 %v2363, 0.01
        %v2474 = vmul.f32 %v2368, 0.01
        %v2475 = vmul.f32 %v2373, 0.01
        %v2476 = vmul.f32 %v2378, 0.01
        %v2477 = vmul.f32 %v2383, 0.01
        %v2478 = vmul.f32 %v2388, 0.01
        %v2479 = vmul.f32 %v2393, 0.01
        %v2480 = vmul.f32 %v2398, 0.01
        %v2481 = vmul.f32 %v2403, 0.01
        %v2482 = vmul.f32 %v2408, 0.01
        %v2483 = vmul.f32 %v2413, 0.01
        %v2484 = vmul.f32 %v2418, 0.01
        %v2485 = vsel %vm2421, %v2263, %v2453
        %v2486 = vsel %vm2422, %v2268, %v2454
        %v2487 = vsel %vm2423, %v2273, %v2455
        %v2488 = vsel %vm2424, %v2278, %v2456
        %v2489 = vsel %vm2425, %v2283, %v2457
        %v2490 = vsel %vm2426, %v2288, %v2458
        %v2491 = vsel %vm2427, %v2293, %v2459
        %v2492 = vsel %vm2428, %v2298, %v2460
        %v2493 = vsel %vm2429, %v2303, %v2461
        %v2494 = vsel %vm2430, %v2308, %v2462
        %v2495 = vsel %vm2431, %v2313, %v2463
        %v2496 = vsel %vm2432, %v2318, %v2464
        %v2497 = vsel %vm2433, %v2323, %v2465
        %v2498 = vsel %vm2434, %v2328, %v2466
        %v2499 = vsel %vm2435, %v2333, %v2467
        %v2500 = vsel %vm2436, %v2338, %v2468
        %v2501 = vsel %vm2437, %v2343, %v2469
        %v2502 = vsel %vm2438, %v2348, %v2470
        %v2503 = vsel %vm2439, %v2353, %v2471
        %v2504 = vsel %vm2440, %v2358, %v2472
        %v2505 = vsel %vm2441, %v2363, %v2473
        %v2506 = vsel %vm2442, %v2368, %v2474
        %v2507 = vsel %vm2443, %v2373, %v2475
        %v2508 = vsel %vm2444, %v2378, %v2476
        %v2509 = vsel %vm2445, %v2383, %v2477
        %v2510 = vsel %vm2446, %v2388, %v2478
        %v2511 = vsel %vm2447, %v2393, %v2479
        %v2512 = vsel %vm2448, %v2398, %v2480
        %v2513 = vsel %vm2449, %v2403, %v2481
        %v2514 = vsel %vm2450, %v2408, %v2482
        %v2515 = vsel %vm2451, %v2413, %v2483
        %v2516 = vsel %vm2452, %v2418, %v2484
        %s2517 = scalar_lea.vmem [#allocation3], 24
        %2518 = vst.msk [vmem:[%s2517 + $0x1] sm:$0xff] %vm387, %v2485
        %2519 = vst.msk [vmem:[%s2517 + $0x9] sm:$0xff] %vm387, %v2486
        %2520 = vst.msk [vmem:[%s2517 + $0x19] sm:$0xff] %vm387, %v2487
        %2521 = vst.msk [vmem:[%s2517 + $0x21] sm:$0xff] %vm387, %v2488
        %2522 = vst.msk [vmem:[%s2517 + $0x31] sm:$0xff] %vm387, %v2489
        %2523 = vst.msk [vmem:[%s2517 + $0x39] sm:$0xff] %vm387, %v2490
        %2524 = vst.msk [vmem:[%s2517 + $0x49] sm:$0xff] %vm387, %v2491
        %2525 = vst.msk [vmem:[%s2517 + $0x51] sm:$0xff] %vm387, %v2492
        %2526 = vst.msk [vmem:[%s2517 + $0x61] sm:$0xff] %vm387, %v2493
        %2527 = vst.msk [vmem:[%s2517 + $0x69] sm:$0xff] %vm387, %v2494
        %2528 = vst.msk [vmem:[%s2517 + $0x79] sm:$0xff] %vm387, %v2495
        %2529 = vst.msk [vmem:[%s2517 + $0x81] sm:$0xff] %vm387, %v2496
        %2530 = vst.msk [vmem:[%s2517 + $0x91] sm:$0xff] %vm387, %v2497
        %2531 = vst.msk [vmem:[%s2517 + $0x99] sm:$0xff] %vm387, %v2498
        %2532 = vst.msk [vmem:[%s2517 + $0xa9] sm:$0xff] %vm387, %v2499
        %2533 = vst.msk [vmem:[%s2517 + $0xb1] sm:$0xff] %vm387, %v2500
        %2534 = vst.msk [vmem:[%s2517 + $0xc1] sm:$0xff] %vm387, %v2501
        %2535 = vst.msk [vmem:[%s2517 + $0xc9] sm:$0xff] %vm387, %v2502
        %2536 = vst.msk [vmem:[%s2517 + $0xd9] sm:$0xff] %vm387, %v2503
        %2537 = vst.msk [vmem:[%s2517 + $0xe1] sm:$0xff] %vm387, %v2504
        %2538 = vst.msk [vmem:[%s2517 + $0xf1] sm:$0xff] %vm387, %v2505
        %2539 = vst.msk [vmem:[%s2517 + $0xf9] sm:$0xff] %vm387, %v2506
        %2540 = vst.msk [vmem:[%s2517 + $0x109] sm:$0xff] %vm387, %v2507
        %2541 = vst.msk [vmem:[%s2517 + $0x111] sm:$0xff] %vm387, %v2508
        %2542 = vst.msk [vmem:[%s2517 + $0x121] sm:$0xff] %vm387, %v2509
        %2543 = vst.msk [vmem:[%s2517 + $0x129] sm:$0xff] %vm387, %v2510
        %2544 = vst.msk [vmem:[%s2517 + $0x139] sm:$0xff] %vm387, %v2511
        %2545 = vst.msk [vmem:[%s2517 + $0x141] sm:$0xff] %vm387, %v2512
        %2546 = vst.msk [vmem:[%s2517 + $0x151] sm:$0xff] %vm387, %v2513
        %2547 = vst.msk [vmem:[%s2517 + $0x159] sm:$0xff] %vm387, %v2514
        %2548 = vst.msk [vmem:[%s2517 + $0x169] sm:$0xff] %vm387, %v2515
        %2549 = vst.msk [vmem:[%s2517 + $0x171] sm:$0xff] %vm387, %v2516
        %v2550 = vld [vmem:[#allocation3] sm:$0xff]
        %v2551 = vld [vmem:[#allocation3 + $0x8] sm:$0xff]
        %v2552 = vld [vmem:[#allocation3 + $0x18] sm:$0xff]
        %v2553 = vld [vmem:[#allocation3 + $0x20] sm:$0xff]
        %v2554 = vld [vmem:[#allocation3 + $0x30] sm:$0xff]
        %v2555 = vld [vmem:[#allocation3 + $0x38] sm:$0xff]
        %v2556 = vld [vmem:[#allocation3 + $0x48] sm:$0xff]
        %v2557 = vld [vmem:[#allocation3 + $0x50] sm:$0xff]
        %v2558 = vld [vmem:[#allocation3 + $0x60] sm:$0xff]
        %v2559 = vld [vmem:[#allocation3 + $0x68] sm:$0xff]
        %v2560 = vld [vmem:[#allocation3 + $0x78] sm:$0xff]
        %v2561 = vld [vmem:[#allocation3 + $0x80] sm:$0xff]
        %v2562 = vld [vmem:[#allocation3 + $0x90] sm:$0xff]
        %v2563 = vld [vmem:[#allocation3 + $0x98] sm:$0xff]
        %v2564 = vld [vmem:[#allocation3 + $0xa8] sm:$0xff]
        %v2565 = vld [vmem:[#allocation3 + $0xb0] sm:$0xff]
        %v2566 = vld [vmem:[#allocation3 + $0xc0] sm:$0xff]
        %v2567 = vld [vmem:[#allocation3 + $0xc8] sm:$0xff]
        %v2568 = vld [vmem:[#allocation3 + $0xd8] sm:$0xff]
        %v2569 = vld [vmem:[#allocation3 + $0xe0] sm:$0xff]
        %v2570 = vld [vmem:[#allocation3 + $0xf0] sm:$0xff]
        %v2571 = vld [vmem:[#allocation3 + $0xf8] sm:$0xff]
        %v2572 = vld [vmem:[#allocation3 + $0x108] sm:$0xff]
        %v2573 = vld [vmem:[#allocation3 + $0x110] sm:$0xff]
        %v2574 = vld [vmem:[#allocation3 + $0x120] sm:$0xff]
        %v2575 = vld [vmem:[#allocation3 + $0x128] sm:$0xff]
        %v2576 = vld [vmem:[#allocation3 + $0x138] sm:$0xff]
        %v2577 = vld [vmem:[#allocation3 + $0x140] sm:$0xff]
        %v2578 = vld [vmem:[#allocation3 + $0x150] sm:$0xff]
        %v2579 = vld [vmem:[#allocation3 + $0x158] sm:$0xff]
        %v2580 = vld [vmem:[#allocation3 + $0x168] sm:$0xff]
        %v2581 = vld [vmem:[#allocation3 + $0x170] sm:$0xff]
        %v2582 = vld [vmem:[#allocation3 + $0x1] sm:$0xff]
        %v2583 = vld [vmem:[#allocation3 + $0x9] sm:$0xff]
        %v2584 = vld [vmem:[#allocation3 + $0x19] sm:$0xff]
        %v2585 = vld [vmem:[#allocation3 + $0x21] sm:$0xff]
        %v2586 = vld [vmem:[#allocation3 + $0x31] sm:$0xff]
        %v2587 = vld [vmem:[#allocation3 + $0x39] sm:$0xff]
        %v2588 = vld [vmem:[#allocation3 + $0x49] sm:$0xff]
        %v2589 = vld [vmem:[#allocation3 + $0x51] sm:$0xff]
        %v2590 = vld [vmem:[#allocation3 + $0x61] sm:$0xff]
        %v2591 = vld [vmem:[#allocation3 + $0x69] sm:$0xff]
        %v2592 = vld [vmem:[#allocation3 + $0x79] sm:$0xff]
        %v2593 = vld [vmem:[#allocation3 + $0x81] sm:$0xff]
        %v2594 = vld [vmem:[#allocation3 + $0x91] sm:$0xff]
        %v2595 = vld [vmem:[#allocation3 + $0x99] sm:$0xff]
        %v2596 = vld [vmem:[#allocation3 + $0xa9] sm:$0xff]
        %v2597 = vld [vmem:[#allocation3 + $0xb1] sm:$0xff]
        %v2598 = vld [vmem:[#allocation3 + $0xc1] sm:$0xff]
        %v2599 = vld [vmem:[#allocation3 + $0xc9] sm:$0xff]
        %v2600 = vld [vmem:[#allocation3 + $0xd9] sm:$0xff]
        %v2601 = vld [vmem:[#allocation3 + $0xe1] sm:$0xff]
        %v2602 = vld [vmem:[#allocation3 + $0xf1] sm:$0xff]
        %v2603 = vld [vmem:[#allocation3 + $0xf9] sm:$0xff]
        %v2604 = vld [vmem:[#allocation3 + $0x109] sm:$0xff]
        %v2605 = vld [vmem:[#allocation3 + $0x111] sm:$0xff]
        %v2606 = vld [vmem:[#allocation3 + $0x121] sm:$0xff]
        %v2607 = vld [vmem:[#allocation3 + $0x129] sm:$0xff]
        %v2608 = vld [vmem:[#allocation3 + $0x139] sm:$0xff]
        %v2609 = vld [vmem:[#allocation3 + $0x141] sm:$0xff]
        %v2610 = vld [vmem:[#allocation3 + $0x151] sm:$0xff]
        %v2611 = vld [vmem:[#allocation3 + $0x159] sm:$0xff]
        %v2612 = vld [vmem:[#allocation3 + $0x169] sm:$0xff]
        %v2613 = vld [vmem:[#allocation3 + $0x171] sm:$0xff]
        %v2614 = vld [vmem:[#allocation3 + $0x2] sm:$0xff]
        %v2615 = vld [vmem:[#allocation3 + $0xa] sm:$0xff]
        %v2616 = vld [vmem:[#allocation3 + $0x1a] sm:$0xff]
        %v2617 = vld [vmem:[#allocation3 + $0x22] sm:$0xff]
        %v2618 = vld [vmem:[#allocation3 + $0x32] sm:$0xff]
        %v2619 = vld [vmem:[#allocation3 + $0x3a] sm:$0xff]
        %v2620 = vld [vmem:[#allocation3 + $0x4a] sm:$0xff]
        %v2621 = vld [vmem:[#allocation3 + $0x52] sm:$0xff]
        %v2622 = vld [vmem:[#allocation3 + $0x62] sm:$0xff]
        %v2623 = vld [vmem:[#allocation3 + $0x6a] sm:$0xff]
        %v2624 = vld [vmem:[#allocation3 + $0x7a] sm:$0xff]
        %v2625 = vld [vmem:[#allocation3 + $0x82] sm:$0xff]
        %v2626 = vld [vmem:[#allocation3 + $0x92] sm:$0xff]
        %v2627 = vld [vmem:[#allocation3 + $0x9a] sm:$0xff]
        %v2628 = vld [vmem:[#allocation3 + $0xaa] sm:$0xff]
        %v2629 = vld [vmem:[#allocation3 + $0xb2] sm:$0xff]
        %v2630 = vld [vmem:[#allocation3 + $0xc2] sm:$0xff]
        %v2631 = vld [vmem:[#allocation3 + $0xca] sm:$0xff]
        %v2632 = vld [vmem:[#allocation3 + $0xda] sm:$0xff]
        %v2633 = vld [vmem:[#allocation3 + $0xe2] sm:$0xff]
        %v2634 = vld [vmem:[#allocation3 + $0xf2] sm:$0xff]
        %v2635 = vld [vmem:[#allocation3 + $0xfa] sm:$0xff]
        %v2636 = vld [vmem:[#allocation3 + $0x10a] sm:$0xff]
        %v2637 = vld [vmem:[#allocation3 + $0x112] sm:$0xff]
        %v2638 = vld [vmem:[#allocation3 + $0x122] sm:$0xff]
        %v2639 = vld [vmem:[#allocation3 + $0x12a] sm:$0xff]
        %v2640 = vld [vmem:[#allocation3 + $0x13a] sm:$0xff]
        %v2641 = vld [vmem:[#allocation3 + $0x142] sm:$0xff]
        %v2642 = vld [vmem:[#allocation3 + $0x152] sm:$0xff]
        %v2643 = vld [vmem:[#allocation3 + $0x15a] sm:$0xff]
        %v2644 = vld [vmem:[#allocation3 + $0x16a] sm:$0xff]
        %v2645 = vld [vmem:[#allocation3 + $0x172] sm:$0xff]
        %v2646 = vld [vmem:[%s2517] sm:$0xff]
        %v2647 = vld [vmem:[%s2517 + $0x8] sm:$0xff]
        %v2648 = vld [vmem:[%s2517 + $0x18] sm:$0xff]
        %v2649 = vld [vmem:[%s2517 + $0x20] sm:$0xff]
        %v2650 = vld [vmem:[%s2517 + $0x30] sm:$0xff]
        %v2651 = vld [vmem:[%s2517 + $0x38] sm:$0xff]
        %v2652 = vld [vmem:[%s2517 + $0x48] sm:$0xff]
        %v2653 = vld [vmem:[%s2517 + $0x50] sm:$0xff]
        %v2654 = vld [vmem:[%s2517 + $0x60] sm:$0xff]
        %v2655 = vld [vmem:[%s2517 + $0x68] sm:$0xff]
        %v2656 = vld [vmem:[%s2517 + $0x78] sm:$0xff]
        %v2657 = vld [vmem:[%s2517 + $0x80] sm:$0xff]
        %v2658 = vld [vmem:[%s2517 + $0x90] sm:$0xff]
        %v2659 = vld [vmem:[%s2517 + $0x98] sm:$0xff]
        %v2660 = vld [vmem:[%s2517 + $0xa8] sm:$0xff]
        %v2661 = vld [vmem:[%s2517 + $0xb0] sm:$0xff]
        %v2662 = vld [vmem:[%s2517 + $0xc0] sm:$0xff]
        %v2663 = vld [vmem:[%s2517 + $0xc8] sm:$0xff]
        %v2664 = vld [vmem:[%s2517 + $0xd8] sm:$0xff]
        %v2665 = vld [vmem:[%s2517 + $0xe0] sm:$0xff]
        %v2666 = vld [vmem:[%s2517 + $0xf0] sm:$0xff]
        %v2667 = vld [vmem:[%s2517 + $0xf8] sm:$0xff]
        %v2668 = vld [vmem:[%s2517 + $0x108] sm:$0xff]
        %v2669 = vld [vmem:[%s2517 + $0x110] sm:$0xff]
        %v2670 = vld [vmem:[%s2517 + $0x120] sm:$0xff]
        %v2671 = vld [vmem:[%s2517 + $0x128] sm:$0xff]
        %v2672 = vld [vmem:[%s2517 + $0x138] sm:$0xff]
        %v2673 = vld [vmem:[%s2517 + $0x140] sm:$0xff]
        %v2674 = vld [vmem:[%s2517 + $0x150] sm:$0xff]
        %v2675 = vld [vmem:[%s2517 + $0x158] sm:$0xff]
        %v2676 = vld [vmem:[%s2517 + $0x168] sm:$0xff]
        %v2677 = vld [vmem:[%s2517 + $0x170] sm:$0xff]
        %v2678 = vld [vmem:[%s2517 + $0x1] sm:$0xff]
        %v2679 = vld [vmem:[%s2517 + $0x9] sm:$0xff]
        %v2680 = vld [vmem:[%s2517 + $0x19] sm:$0xff]
        %v2681 = vld [vmem:[%s2517 + $0x21] sm:$0xff]
        %v2682 = vld [vmem:[%s2517 + $0x31] sm:$0xff]
        %v2683 = vld [vmem:[%s2517 + $0x39] sm:$0xff]
        %v2684 = vld [vmem:[%s2517 + $0x49] sm:$0xff]
        %v2685 = vld [vmem:[%s2517 + $0x51] sm:$0xff]
        %v2686 = vld [vmem:[%s2517 + $0x61] sm:$0xff]
        %v2687 = vld [vmem:[%s2517 + $0x69] sm:$0xff]
        %v2688 = vld [vmem:[%s2517 + $0x79] sm:$0xff]
        %v2689 = vld [vmem:[%s2517 + $0x81] sm:$0xff]
        %v2690 = vld [vmem:[%s2517 + $0x91] sm:$0xff]
        %v2691 = vld [vmem:[%s2517 + $0x99] sm:$0xff]
        %v2692 = vld [vmem:[%s2517 + $0xa9] sm:$0xff]
        %v2693 = vld [vmem:[%s2517 + $0xb1] sm:$0xff]
        %v2694 = vld [vmem:[%s2517 + $0xc1] sm:$0xff]
        %v2695 = vld [vmem:[%s2517 + $0xc9] sm:$0xff]
        %v2696 = vld [vmem:[%s2517 + $0xd9] sm:$0xff]
        %v2697 = vld [vmem:[%s2517 + $0xe1] sm:$0xff]
        %v2698 = vld [vmem:[%s2517 + $0xf1] sm:$0xff]
        %v2699 = vld [vmem:[%s2517 + $0xf9] sm:$0xff]
        %v2700 = vld [vmem:[%s2517 + $0x109] sm:$0xff]
        %v2701 = vld [vmem:[%s2517 + $0x111] sm:$0xff]
        %v2702 = vld [vmem:[%s2517 + $0x121] sm:$0xff]
        %v2703 = vld [vmem:[%s2517 + $0x129] sm:$0xff]
        %v2704 = vld [vmem:[%s2517 + $0x139] sm:$0xff]
        %v2705 = vld [vmem:[%s2517 + $0x141] sm:$0xff]
        %v2706 = vld [vmem:[%s2517 + $0x151] sm:$0xff]
        %v2707 = vld [vmem:[%s2517 + $0x159] sm:$0xff]
        %v2708 = vld [vmem:[%s2517 + $0x169] sm:$0xff]
        %v2709 = vld [vmem:[%s2517 + $0x171] sm:$0xff]
        %v2710 = vld [vmem:[%s2517 + $0x2] sm:$0xff]
        %v2711 = vld [vmem:[%s2517 + $0xa] sm:$0xff]
        %v2712 = vld [vmem:[%s2517 + $0x1a] sm:$0xff]
        %v2713 = vld [vmem:[%s2517 + $0x22] sm:$0xff]
        %v2714 = vld [vmem:[%s2517 + $0x32] sm:$0xff]
        %v2715 = vld [vmem:[%s2517 + $0x3a] sm:$0xff]
        %v2716 = vld [vmem:[%s2517 + $0x4a] sm:$0xff]
        %v2717 = vld [vmem:[%s2517 + $0x52] sm:$0xff]
        %v2718 = vld [vmem:[%s2517 + $0x62] sm:$0xff]
        %v2719 = vld [vmem:[%s2517 + $0x6a] sm:$0xff]
        %v2720 = vld [vmem:[%s2517 + $0x7a] sm:$0xff]
        %v2721 = vld [vmem:[%s2517 + $0x82] sm:$0xff]
        %v2722 = vld [vmem:[%s2517 + $0x92] sm:$0xff]
        %v2723 = vld [vmem:[%s2517 + $0x9a] sm:$0xff]
        %v2724 = vld [vmem:[%s2517 + $0xaa] sm:$0xff]
        %v2725 = vld [vmem:[%s2517 + $0xb2] sm:$0xff]
        %v2726 = vld [vmem:[%s2517 + $0xc2] sm:$0xff]
        %v2727 = vld [vmem:[%s2517 + $0xca] sm:$0xff]
        %v2728 = vld [vmem:[%s2517 + $0xda] sm:$0xff]
        %v2729 = vld [vmem:[%s2517 + $0xe2] sm:$0xff]
        %v2730 = vld [vmem:[%s2517 + $0xf2] sm:$0xff]
        %v2731 = vld [vmem:[%s2517 + $0xfa] sm:$0xff]
        %v2732 = vld [vmem:[%s2517 + $0x10a] sm:$0xff]
        %v2733 = vld [vmem:[%s2517 + $0x112] sm:$0xff]
        %v2734 = vld [vmem:[%s2517 + $0x122] sm:$0xff]
        %v2735 = vld [vmem:[%s2517 + $0x12a] sm:$0xff]
        %v2736 = vld [vmem:[%s2517 + $0x13a] sm:$0xff]
        %v2737 = vld [vmem:[%s2517 + $0x142] sm:$0xff]
        %v2738 = vld [vmem:[%s2517 + $0x152] sm:$0xff]
        %v2739 = vld [vmem:[%s2517 + $0x15a] sm:$0xff]
        %v2740 = vld [vmem:[%s2517 + $0x16a] sm:$0xff]
        %v2741 = vld [vmem:[%s2517 + $0x172] sm:$0xff]
        %s2742 = scalar_lea.vmem [#allocation3], 48
        %v2743 = vld [vmem:[%s2742] sm:$0xff]
        %v2744 = vld [vmem:[%s2742 + $0x8] sm:$0xff]
        %v2745 = vld [vmem:[%s2742 + $0x18] sm:$0xff]
        %v2746 = vld [vmem:[%s2742 + $0x20] sm:$0xff]
        %v2747 = vld [vmem:[%s2742 + $0x30] sm:$0xff]
        %v2748 = vld [vmem:[%s2742 + $0x38] sm:$0xff]
        %v2749 = vld [vmem:[%s2742 + $0x48] sm:$0xff]
        %v2750 = vld [vmem:[%s2742 + $0x50] sm:$0xff]
        %v2751 = vld [vmem:[%s2742 + $0x60] sm:$0xff]
        %v2752 = vld [vmem:[%s2742 + $0x68] sm:$0xff]
        %v2753 = vld [vmem:[%s2742 + $0x78] sm:$0xff]
        %v2754 = vld [vmem:[%s2742 + $0x80] sm:$0xff]
        %v2755 = vld [vmem:[%s2742 + $0x90] sm:$0xff]
        %v2756 = vld [vmem:[%s2742 + $0x98] sm:$0xff]
        %v2757 = vld [vmem:[%s2742 + $0xa8] sm:$0xff]
        %v2758 = vld [vmem:[%s2742 + $0xb0] sm:$0xff]
        %v2759 = vld [vmem:[%s2742 + $0xc0] sm:$0xff]
        %v2760 = vld [vmem:[%s2742 + $0xc8] sm:$0xff]
        %v2761 = vld [vmem:[%s2742 + $0xd8] sm:$0xff]
        %v2762 = vld [vmem:[%s2742 + $0xe0] sm:$0xff]
        %v2763 = vld [vmem:[%s2742 + $0xf0] sm:$0xff]
        %v2764 = vld [vmem:[%s2742 + $0xf8] sm:$0xff]
        %v2765 = vld [vmem:[%s2742 + $0x108] sm:$0xff]
        %v2766 = vld [vmem:[%s2742 + $0x110] sm:$0xff]
        %v2767 = vld [vmem:[%s2742 + $0x120] sm:$0xff]
        %v2768 = vld [vmem:[%s2742 + $0x128] sm:$0xff]
        %v2769 = vld [vmem:[%s2742 + $0x138] sm:$0xff]
        %v2770 = vld [vmem:[%s2742 + $0x140] sm:$0xff]
        %v2771 = vld [vmem:[%s2742 + $0x150] sm:$0xff]
        %v2772 = vld [vmem:[%s2742 + $0x158] sm:$0xff]
        %v2773 = vld [vmem:[%s2742 + $0x168] sm:$0xff]
        %v2774 = vld [vmem:[%s2742 + $0x170] sm:$0xff]
        %v2775 = vld [vmem:[%s2742 + $0x1] sm:$0xff]
        %v2776 = vld [vmem:[%s2742 + $0x9] sm:$0xff]
        %v2777 = vld [vmem:[%s2742 + $0x19] sm:$0xff]
        %v2778 = vld [vmem:[%s2742 + $0x21] sm:$0xff]
        %v2779 = vld [vmem:[%s2742 + $0x31] sm:$0xff]
        %v2780 = vld [vmem:[%s2742 + $0x39] sm:$0xff]
        %v2781 = vld [vmem:[%s2742 + $0x49] sm:$0xff]
        %v2782 = vld [vmem:[%s2742 + $0x51] sm:$0xff]
        %v2783 = vld [vmem:[%s2742 + $0x61] sm:$0xff]
        %v2784 = vld [vmem:[%s2742 + $0x69] sm:$0xff]
        %v2785 = vld [vmem:[%s2742 + $0x79] sm:$0xff]
        %v2786 = vld [vmem:[%s2742 + $0x81] sm:$0xff]
        %v2787 = vld [vmem:[%s2742 + $0x91] sm:$0xff]
        %v2788 = vld [vmem:[%s2742 + $0x99] sm:$0xff]
        %v2789 = vld [vmem:[%s2742 + $0xa9] sm:$0xff]
        %v2790 = vld [vmem:[%s2742 + $0xb1] sm:$0xff]
        %v2791 = vld [vmem:[%s2742 + $0xc1] sm:$0xff]
        %v2792 = vld [vmem:[%s2742 + $0xc9] sm:$0xff]
        %v2793 = vld [vmem:[%s2742 + $0xd9] sm:$0xff]
        %v2794 = vld [vmem:[%s2742 + $0xe1] sm:$0xff]
        %v2795 = vld [vmem:[%s2742 + $0xf1] sm:$0xff]
        %v2796 = vld [vmem:[%s2742 + $0xf9] sm:$0xff]
        %v2797 = vld [vmem:[%s2742 + $0x109] sm:$0xff]
        %v2798 = vld [vmem:[%s2742 + $0x111] sm:$0xff]
        %v2799 = vld [vmem:[%s2742 + $0x121] sm:$0xff]
        %v2800 = vld [vmem:[%s2742 + $0x129] sm:$0xff]
        %v2801 = vld [vmem:[%s2742 + $0x139] sm:$0xff]
        %v2802 = vld [vmem:[%s2742 + $0x141] sm:$0xff]
        %v2803 = vld [vmem:[%s2742 + $0x151] sm:$0xff]
        %v2804 = vld [vmem:[%s2742 + $0x159] sm:$0xff]
        %v2805 = vld [vmem:[%s2742 + $0x169] sm:$0xff]
        %v2806 = vld [vmem:[%s2742 + $0x171] sm:$0xff]
        %v2807 = vld [vmem:[%s2742 + $0x2] sm:$0xff]
        %v2808 = vld [vmem:[%s2742 + $0xa] sm:$0xff]
        %v2809 = vld [vmem:[%s2742 + $0x1a] sm:$0xff]
        %v2810 = vld [vmem:[%s2742 + $0x22] sm:$0xff]
        %v2811 = vld [vmem:[%s2742 + $0x32] sm:$0xff]
        %v2812 = vld [vmem:[%s2742 + $0x3a] sm:$0xff]
        %v2813 = vld [vmem:[%s2742 + $0x4a] sm:$0xff]
        %v2814 = vld [vmem:[%s2742 + $0x52] sm:$0xff]
        %v2815 = vld [vmem:[%s2742 + $0x62] sm:$0xff]
        %v2816 = vld [vmem:[%s2742 + $0x6a] sm:$0xff]
        %v2817 = vld [vmem:[%s2742 + $0x7a] sm:$0xff]
        %v2818 = vld [vmem:[%s2742 + $0x82] sm:$0xff]
        %v2819 = vld [vmem:[%s2742 + $0x92] sm:$0xff]
        %v2820 = vld [vmem:[%s2742 + $0x9a] sm:$0xff]
        %v2821 = vld [vmem:[%s2742 + $0xaa] sm:$0xff]
        %v2822 = vld [vmem:[%s2742 + $0xb2] sm:$0xff]
        %v2823 = vld [vmem:[%s2742 + $0xc2] sm:$0xff]
        %v2824 = vld [vmem:[%s2742 + $0xca] sm:$0xff]
        %v2825 = vld [vmem:[%s2742 + $0xda] sm:$0xff]
        %v2826 = vld [vmem:[%s2742 + $0xe2] sm:$0xff]
        %v2827 = vld [vmem:[%s2742 + $0xf2] sm:$0xff]
        %v2828 = vld [vmem:[%s2742 + $0xfa] sm:$0xff]
        %v2829 = vld [vmem:[%s2742 + $0x10a] sm:$0xff]
        %v2830 = vld [vmem:[%s2742 + $0x112] sm:$0xff]
        %v2831 = vld [vmem:[%s2742 + $0x122] sm:$0xff]
        %v2832 = vld [vmem:[%s2742 + $0x12a] sm:$0xff]
        %v2833 = vld [vmem:[%s2742 + $0x13a] sm:$0xff]
        %v2834 = vld [vmem:[%s2742 + $0x142] sm:$0xff]
        %v2835 = vld [vmem:[%s2742 + $0x152] sm:$0xff]
        %v2836 = vld [vmem:[%s2742 + $0x15a] sm:$0xff]
        %v2837 = vld [vmem:[%s2742 + $0x16a] sm:$0xff]
        %v2838 = vld [vmem:[%s2742 + $0x172] sm:$0xff]
        %2871 = vrot.lane.b32.xlu0 %v2582, 8
        %v2872 = vpop.permute.xlu0 %2871
        %2873 = vrot.lane.b32.xlu0 %v2583, 8
        %v2874 = vpop.permute.xlu0 %2873
        %2875 = vrot.lane.b32.xlu0 %v2584, 8
        %v2876 = vpop.permute.xlu0 %2875
        %2877 = vrot.lane.b32.xlu0 %v2585, 8
        %v2878 = vpop.permute.xlu0 %2877
        %2879 = vrot.lane.b32.xlu0 %v2586, 8
        %v2880 = vpop.permute.xlu0 %2879
        %2881 = vrot.lane.b32.xlu0 %v2587, 8
        %v2882 = vpop.permute.xlu0 %2881
        %2883 = vrot.lane.b32.xlu0 %v2588, 8
        %v2884 = vpop.permute.xlu0 %2883
        %2885 = vrot.lane.b32.xlu0 %v2589, 8
        %v2886 = vpop.permute.xlu0 %2885
        %2887 = vrot.lane.b32.xlu0 %v2590, 8
        %v2888 = vpop.permute.xlu0 %2887
        %2889 = vrot.lane.b32.xlu0 %v2591, 8
        %v2890 = vpop.permute.xlu0 %2889
        %2891 = vrot.lane.b32.xlu0 %v2592, 8
        %v2892 = vpop.permute.xlu0 %2891
        %2893 = vrot.lane.b32.xlu0 %v2593, 8
        %v2894 = vpop.permute.xlu0 %2893
        %2895 = vrot.lane.b32.xlu0 %v2594, 8
        %v2896 = vpop.permute.xlu0 %2895
        %2897 = vrot.lane.b32.xlu0 %v2595, 8
        %v2898 = vpop.permute.xlu0 %2897
        %2899 = vrot.lane.b32.xlu0 %v2596, 8
        %v2900 = vpop.permute.xlu0 %2899
        %2901 = vrot.lane.b32.xlu0 %v2597, 8
        %v2902 = vpop.permute.xlu0 %2901
        %2903 = vrot.lane.b32.xlu0 %v2598, 8
        %v2904 = vpop.permute.xlu0 %2903
        %2905 = vrot.lane.b32.xlu0 %v2599, 8
        %v2906 = vpop.permute.xlu0 %2905
        %2907 = vrot.lane.b32.xlu0 %v2600, 8
        %v2908 = vpop.permute.xlu0 %2907
        %2909 = vrot.lane.b32.xlu0 %v2601, 8
        %v2910 = vpop.permute.xlu0 %2909
        %2911 = vrot.lane.b32.xlu0 %v2602, 8
        %v2912 = vpop.permute.xlu0 %2911
        %2913 = vrot.lane.b32.xlu0 %v2603, 8
        %v2914 = vpop.permute.xlu0 %2913
        %2915 = vrot.lane.b32.xlu0 %v2604, 8
        %v2916 = vpop.permute.xlu0 %2915
        %2917 = vrot.lane.b32.xlu0 %v2605, 8
        %v2918 = vpop.permute.xlu0 %2917
        %2919 = vrot.lane.b32.xlu0 %v2606, 8
        %v2920 = vpop.permute.xlu0 %2919
        %2921 = vrot.lane.b32.xlu0 %v2607, 8
        %v2922 = vpop.permute.xlu0 %2921
        %2923 = vrot.lane.b32.xlu0 %v2608, 8
        %v2924 = vpop.permute.xlu0 %2923
        %2925 = vrot.lane.b32.xlu0 %v2609, 8
        %v2926 = vpop.permute.xlu0 %2925
        %2927 = vrot.lane.b32.xlu0 %v2610, 8
        %v2928 = vpop.permute.xlu0 %2927
        %2929 = vrot.lane.b32.xlu0 %v2611, 8
        %v2930 = vpop.permute.xlu0 %2929
        %2931 = vrot.lane.b32.xlu0 %v2612, 8
        %v2932 = vpop.permute.xlu0 %2931
        %2933 = vrot.lane.b32.xlu0 %v2613, 8
        %v2934 = vpop.permute.xlu0 %2933
        %2999 = vrot.lane.b32.xlu0 %v2614, 16
        %v3000 = vpop.permute.xlu0 %2999
        %3001 = vrot.lane.b32.xlu0 %v2615, 16
        %v3002 = vpop.permute.xlu0 %3001
        %3003 = vrot.lane.b32.xlu0 %v2616, 16
        %v3004 = vpop.permute.xlu0 %3003
        %3005 = vrot.lane.b32.xlu0 %v2617, 16
        %v3006 = vpop.permute.xlu0 %3005
        %3007 = vrot.lane.b32.xlu0 %v2618, 16
        %v3008 = vpop.permute.xlu0 %3007
        %3009 = vrot.lane.b32.xlu0 %v2619, 16
        %v3010 = vpop.permute.xlu0 %3009
        %3011 = vrot.lane.b32.xlu0 %v2620, 16
        %v3012 = vpop.permute.xlu0 %3011
        %3013 = vrot.lane.b32.xlu0 %v2621, 16
        %v3014 = vpop.permute.xlu0 %3013
        %3015 = vrot.lane.b32.xlu0 %v2622, 16
        %v3016 = vpop.permute.xlu0 %3015
        %3017 = vrot.lane.b32.xlu0 %v2623, 16
        %v3018 = vpop.permute.xlu0 %3017
        %3019 = vrot.lane.b32.xlu0 %v2624, 16
        %v3020 = vpop.permute.xlu0 %3019
        %3021 = vrot.lane.b32.xlu0 %v2625, 16
        %v3022 = vpop.permute.xlu0 %3021
        %3023 = vrot.lane.b32.xlu0 %v2626, 16
        %v3024 = vpop.permute.xlu0 %3023
        %3025 = vrot.lane.b32.xlu0 %v2627, 16
        %v3026 = vpop.permute.xlu0 %3025
        %3027 = vrot.lane.b32.xlu0 %v2628, 16
        %v3028 = vpop.permute.xlu0 %3027
        %3029 = vrot.lane.b32.xlu0 %v2629, 16
        %v3030 = vpop.permute.xlu0 %3029
        %3031 = vrot.lane.b32.xlu0 %v2630, 16
        %v3032 = vpop.permute.xlu0 %3031
        %3033 = vrot.lane.b32.xlu0 %v2631, 16
        %v3034 = vpop.permute.xlu0 %3033
        %3035 = vrot.lane.b32.xlu0 %v2632, 16
        %v3036 = vpop.permute.xlu0 %3035
        %3037 = vrot.lane.b32.xlu0 %v2633, 16
        %v3038 = vpop.permute.xlu0 %3037
        %3039 = vrot.lane.b32.xlu0 %v2634, 16
        %v3040 = vpop.permute.xlu0 %3039
        %3041 = vrot.lane.b32.xlu0 %v2635, 16
        %v3042 = vpop.permute.xlu0 %3041
        %3043 = vrot.lane.b32.xlu0 %v2636, 16
        %v3044 = vpop.permute.xlu0 %3043
        %3045 = vrot.lane.b32.xlu0 %v2637, 16
        %v3046 = vpop.permute.xlu0 %3045
        %3047 = vrot.lane.b32.xlu0 %v2638, 16
        %v3048 = vpop.permute.xlu0 %3047
        %3049 = vrot.lane.b32.xlu0 %v2639, 16
        %v3050 = vpop.permute.xlu0 %3049
        %3051 = vrot.lane.b32.xlu0 %v2640, 16
        %v3052 = vpop.permute.xlu0 %3051
        %3053 = vrot.lane.b32.xlu0 %v2641, 16
        %v3054 = vpop.permute.xlu0 %3053
        %3055 = vrot.lane.b32.xlu0 %v2642, 16
        %v3056 = vpop.permute.xlu0 %3055
        %3057 = vrot.lane.b32.xlu0 %v2643, 16
        %v3058 = vpop.permute.xlu0 %3057
        %3059 = vrot.lane.b32.xlu0 %v2644, 16
        %v3060 = vpop.permute.xlu0 %3059
        %3061 = vrot.lane.b32.xlu0 %v2645, 16
        %v3062 = vpop.permute.xlu0 %3061
        %3127 = vrot.lane.b32.xlu0 %v2646, 24
        %v3128 = vpop.permute.xlu0 %3127
        %3129 = vrot.lane.b32.xlu0 %v2647, 24
        %v3130 = vpop.permute.xlu0 %3129
        %3131 = vrot.lane.b32.xlu0 %v2648, 24
        %v3132 = vpop.permute.xlu0 %3131
        %3133 = vrot.lane.b32.xlu0 %v2649, 24
        %v3134 = vpop.permute.xlu0 %3133
        %3135 = vrot.lane.b32.xlu0 %v2650, 24
        %v3136 = vpop.permute.xlu0 %3135
        %3137 = vrot.lane.b32.xlu0 %v2651, 24
        %v3138 = vpop.permute.xlu0 %3137
        %3139 = vrot.lane.b32.xlu0 %v2652, 24
        %v3140 = vpop.permute.xlu0 %3139
        %3141 = vrot.lane.b32.xlu0 %v2653, 24
        %v3142 = vpop.permute.xlu0 %3141
        %3143 = vrot.lane.b32.xlu0 %v2654, 24
        %v3144 = vpop.permute.xlu0 %3143
        %3145 = vrot.lane.b32.xlu0 %v2655, 24
        %v3146 = vpop.permute.xlu0 %3145
        %3147 = vrot.lane.b32.xlu0 %v2656, 24
        %v3148 = vpop.permute.xlu0 %3147
        %3149 = vrot.lane.b32.xlu0 %v2657, 24
        %v3150 = vpop.permute.xlu0 %3149
        %3151 = vrot.lane.b32.xlu0 %v2658, 24
        %v3152 = vpop.permute.xlu0 %3151
        %3153 = vrot.lane.b32.xlu0 %v2659, 24
        %v3154 = vpop.permute.xlu0 %3153
        %3155 = vrot.lane.b32.xlu0 %v2660, 24
        %v3156 = vpop.permute.xlu0 %3155
        %3157 = vrot.lane.b32.xlu0 %v2661, 24
        %v3158 = vpop.permute.xlu0 %3157
        %3159 = vrot.lane.b32.xlu0 %v2662, 24
        %v3160 = vpop.permute.xlu0 %3159
        %3161 = vrot.lane.b32.xlu0 %v2663, 24
        %v3162 = vpop.permute.xlu0 %3161
        %3163 = vrot.lane.b32.xlu0 %v2664, 24
        %v3164 = vpop.permute.xlu0 %3163
        %3165 = vrot.lane.b32.xlu0 %v2665, 24
        %v3166 = vpop.permute.xlu0 %3165
        %3167 = vrot.lane.b32.xlu0 %v2666, 24
        %v3168 = vpop.permute.xlu0 %3167
        %3169 = vrot.lane.b32.xlu0 %v2667, 24
        %v3170 = vpop.permute.xlu0 %3169
        %3171 = vrot.lane.b32.xlu0 %v2668, 24
        %v3172 = vpop.permute.xlu0 %3171
        %3173 = vrot.lane.b32.xlu0 %v2669, 24
        %v3174 = vpop.permute.xlu0 %3173
        %3175 = vrot.lane.b32.xlu0 %v2670, 24
        %v3176 = vpop.permute.xlu0 %3175
        %3177 = vrot.lane.b32.xlu0 %v2671, 24
        %v3178 = vpop.permute.xlu0 %3177
        %3179 = vrot.lane.b32.xlu0 %v2672, 24
        %v3180 = vpop.permute.xlu0 %3179
        %3181 = vrot.lane.b32.xlu0 %v2673, 24
        %v3182 = vpop.permute.xlu0 %3181
        %3183 = vrot.lane.b32.xlu0 %v2674, 24
        %v3184 = vpop.permute.xlu0 %3183
        %3185 = vrot.lane.b32.xlu0 %v2675, 24
        %v3186 = vpop.permute.xlu0 %3185
        %3187 = vrot.lane.b32.xlu0 %v2676, 24
        %v3188 = vpop.permute.xlu0 %3187
        %3189 = vrot.lane.b32.xlu0 %v2677, 24
        %v3190 = vpop.permute.xlu0 %3189
        %3255 = vrot.lane.b32.xlu0 %v2678, 32
        %v3256 = vpop.permute.xlu0 %3255
        %3257 = vrot.lane.b32.xlu0 %v2679, 32
        %v3258 = vpop.permute.xlu0 %3257
        %3259 = vrot.lane.b32.xlu0 %v2680, 32
        %v3260 = vpop.permute.xlu0 %3259
        %3261 = vrot.lane.b32.xlu0 %v2681, 32
        %v3262 = vpop.permute.xlu0 %3261
        %3263 = vrot.lane.b32.xlu0 %v2682, 32
        %v3264 = vpop.permute.xlu0 %3263
        %3265 = vrot.lane.b32.xlu0 %v2683, 32
        %v3266 = vpop.permute.xlu0 %3265
        %3267 = vrot.lane.b32.xlu0 %v2684, 32
        %v3268 = vpop.permute.xlu0 %3267
        %3269 = vrot.lane.b32.xlu0 %v2685, 32
        %v3270 = vpop.permute.xlu0 %3269
        %3271 = vrot.lane.b32.xlu0 %v2686, 32
        %v3272 = vpop.permute.xlu0 %3271
        %3273 = vrot.lane.b32.xlu0 %v2687, 32
        %v3274 = vpop.permute.xlu0 %3273
        %3275 = vrot.lane.b32.xlu0 %v2688, 32
        %v3276 = vpop.permute.xlu0 %3275
        %3277 = vrot.lane.b32.xlu0 %v2689, 32
        %v3278 = vpop.permute.xlu0 %3277
        %3279 = vrot.lane.b32.xlu0 %v2690, 32
        %v3280 = vpop.permute.xlu0 %3279
        %3281 = vrot.lane.b32.xlu0 %v2691, 32
        %v3282 = vpop.permute.xlu0 %3281
        %3283 = vrot.lane.b32.xlu0 %v2692, 32
        %v3284 = vpop.permute.xlu0 %3283
        %3285 = vrot.lane.b32.xlu0 %v2693, 32
        %v3286 = vpop.permute.xlu0 %3285
        %3287 = vrot.lane.b32.xlu0 %v2694, 32
        %v3288 = vpop.permute.xlu0 %3287
        %3289 = vrot.lane.b32.xlu0 %v2695, 32
        %v3290 = vpop.permute.xlu0 %3289
        %3291 = vrot.lane.b32.xlu0 %v2696, 32
        %v3292 = vpop.permute.xlu0 %3291
        %3293 = vrot.lane.b32.xlu0 %v2697, 32
        %v3294 = vpop.permute.xlu0 %3293
        %3295 = vrot.lane.b32.xlu0 %v2698, 32
        %v3296 = vpop.permute.xlu0 %3295
        %3297 = vrot.lane.b32.xlu0 %v2699, 32
        %v3298 = vpop.permute.xlu0 %3297
        %3299 = vrot.lane.b32.xlu0 %v2700, 32
        %v3300 = vpop.permute.xlu0 %3299
        %3301 = vrot.lane.b32.xlu0 %v2701, 32
        %v3302 = vpop.permute.xlu0 %3301
        %3303 = vrot.lane.b32.xlu0 %v2702, 32
        %v3304 = vpop.permute.xlu0 %3303
        %3305 = vrot.lane.b32.xlu0 %v2703, 32
        %v3306 = vpop.permute.xlu0 %3305
        %3307 = vrot.lane.b32.xlu0 %v2704, 32
        %v3308 = vpop.permute.xlu0 %3307
        %3309 = vrot.lane.b32.xlu0 %v2705, 32
        %v3310 = vpop.permute.xlu0 %3309
        %3311 = vrot.lane.b32.xlu0 %v2706, 32
        %v3312 = vpop.permute.xlu0 %3311
        %3313 = vrot.lane.b32.xlu0 %v2707, 32
        %v3314 = vpop.permute.xlu0 %3313
        %3315 = vrot.lane.b32.xlu0 %v2708, 32
        %v3316 = vpop.permute.xlu0 %3315
        %3317 = vrot.lane.b32.xlu0 %v2709, 32
        %v3318 = vpop.permute.xlu0 %3317
        %3383 = vrot.lane.b32.xlu0 %v2710, 40
        %v3384 = vpop.permute.xlu0 %3383
        %3385 = vrot.lane.b32.xlu0 %v2711, 40
        %v3386 = vpop.permute.xlu0 %3385
        %3387 = vrot.lane.b32.xlu0 %v2712, 40
        %v3388 = vpop.permute.xlu0 %3387
        %3389 = vrot.lane.b32.xlu0 %v2713, 40
        %v3390 = vpop.permute.xlu0 %3389
        %3391 = vrot.lane.b32.xlu0 %v2714, 40
        %v3392 = vpop.permute.xlu0 %3391
        %3393 = vrot.lane.b32.xlu0 %v2715, 40
        %v3394 = vpop.permute.xlu0 %3393
        %3395 = vrot.lane.b32.xlu0 %v2716, 40
        %v3396 = vpop.permute.xlu0 %3395
        %3397 = vrot.lane.b32.xlu0 %v2717, 40
        %v3398 = vpop.permute.xlu0 %3397
        %3399 = vrot.lane.b32.xlu0 %v2718, 40
        %v3400 = vpop.permute.xlu0 %3399
        %3401 = vrot.lane.b32.xlu0 %v2719, 40
        %v3402 = vpop.permute.xlu0 %3401
        %3403 = vrot.lane.b32.xlu0 %v2720, 40
        %v3404 = vpop.permute.xlu0 %3403
        %3405 = vrot.lane.b32.xlu0 %v2721, 40
        %v3406 = vpop.permute.xlu0 %3405
        %3407 = vrot.lane.b32.xlu0 %v2722, 40
        %v3408 = vpop.permute.xlu0 %3407
        %3409 = vrot.lane.b32.xlu0 %v2723, 40
        %v3410 = vpop.permute.xlu0 %3409
        %3411 = vrot.lane.b32.xlu0 %v2724, 40
        %v3412 = vpop.permute.xlu0 %3411
        %3413 = vrot.lane.b32.xlu0 %v2725, 40
        %v3414 = vpop.permute.xlu0 %3413
        %3415 = vrot.lane.b32.xlu0 %v2726, 40
        %v3416 = vpop.permute.xlu0 %3415
        %3417 = vrot.lane.b32.xlu0 %v2727, 40
        %v3418 = vpop.permute.xlu0 %3417
        %3419 = vrot.lane.b32.xlu0 %v2728, 40
        %v3420 = vpop.permute.xlu0 %3419
        %3421 = vrot.lane.b32.xlu0 %v2729, 40
        %v3422 = vpop.permute.xlu0 %3421
        %3423 = vrot.lane.b32.xlu0 %v2730, 40
        %v3424 = vpop.permute.xlu0 %3423
        %3425 = vrot.lane.b32.xlu0 %v2731, 40
        %v3426 = vpop.permute.xlu0 %3425
        %3427 = vrot.lane.b32.xlu0 %v2732, 40
        %v3428 = vpop.permute.xlu0 %3427
        %3429 = vrot.lane.b32.xlu0 %v2733, 40
        %v3430 = vpop.permute.xlu0 %3429
        %3431 = vrot.lane.b32.xlu0 %v2734, 40
        %v3432 = vpop.permute.xlu0 %3431
        %3433 = vrot.lane.b32.xlu0 %v2735, 40
        %v3434 = vpop.permute.xlu0 %3433
        %3435 = vrot.lane.b32.xlu0 %v2736, 40
        %v3436 = vpop.permute.xlu0 %3435
        %3437 = vrot.lane.b32.xlu0 %v2737, 40
        %v3438 = vpop.permute.xlu0 %3437
        %3439 = vrot.lane.b32.xlu0 %v2738, 40
        %v3440 = vpop.permute.xlu0 %3439
        %3441 = vrot.lane.b32.xlu0 %v2739, 40
        %v3442 = vpop.permute.xlu0 %3441
        %3443 = vrot.lane.b32.xlu0 %v2740, 40
        %v3444 = vpop.permute.xlu0 %3443
        %3445 = vrot.lane.b32.xlu0 %v2741, 40
        %v3446 = vpop.permute.xlu0 %3445
        %3511 = vrot.lane.b32.xlu0 %v2743, 48
        %v3512 = vpop.permute.xlu0 %3511
        %3513 = vrot.lane.b32.xlu0 %v2744, 48
        %v3514 = vpop.permute.xlu0 %3513
        %3515 = vrot.lane.b32.xlu0 %v2745, 48
        %v3516 = vpop.permute.xlu0 %3515
        %3517 = vrot.lane.b32.xlu0 %v2746, 48
        %v3518 = vpop.permute.xlu0 %3517
        %3519 = vrot.lane.b32.xlu0 %v2747, 48
        %v3520 = vpop.permute.xlu0 %3519
        %3521 = vrot.lane.b32.xlu0 %v2748, 48
        %v3522 = vpop.permute.xlu0 %3521
        %3523 = vrot.lane.b32.xlu0 %v2749, 48
        %v3524 = vpop.permute.xlu0 %3523
        %3525 = vrot.lane.b32.xlu0 %v2750, 48
        %v3526 = vpop.permute.xlu0 %3525
        %3527 = vrot.lane.b32.xlu0 %v2751, 48
        %v3528 = vpop.permute.xlu0 %3527
        %3529 = vrot.lane.b32.xlu0 %v2752, 48
        %v3530 = vpop.permute.xlu0 %3529
        %3531 = vrot.lane.b32.xlu0 %v2753, 48
        %v3532 = vpop.permute.xlu0 %3531
        %3533 = vrot.lane.b32.xlu0 %v2754, 48
        %v3534 = vpop.permute.xlu0 %3533
        %3535 = vrot.lane.b32.xlu0 %v2755, 48
        %v3536 = vpop.permute.xlu0 %3535
        %3537 = vrot.lane.b32.xlu0 %v2756, 48
        %v3538 = vpop.permute.xlu0 %3537
        %3539 = vrot.lane.b32.xlu0 %v2757, 48
        %v3540 = vpop.permute.xlu0 %3539
        %3541 = vrot.lane.b32.xlu0 %v2758, 48
        %v3542 = vpop.permute.xlu0 %3541
        %3543 = vrot.lane.b32.xlu0 %v2759, 48
        %v3544 = vpop.permute.xlu0 %3543
        %3545 = vrot.lane.b32.xlu0 %v2760, 48
        %v3546 = vpop.permute.xlu0 %3545
        %3547 = vrot.lane.b32.xlu0 %v2761, 48
        %v3548 = vpop.permute.xlu0 %3547
        %3549 = vrot.lane.b32.xlu0 %v2762, 48
        %v3550 = vpop.permute.xlu0 %3549
        %3551 = vrot.lane.b32.xlu0 %v2763, 48
        %v3552 = vpop.permute.xlu0 %3551
        %3553 = vrot.lane.b32.xlu0 %v2764, 48
        %v3554 = vpop.permute.xlu0 %3553
        %3555 = vrot.lane.b32.xlu0 %v2765, 48
        %v3556 = vpop.permute.xlu0 %3555
        %3557 = vrot.lane.b32.xlu0 %v2766, 48
        %v3558 = vpop.permute.xlu0 %3557
        %3559 = vrot.lane.b32.xlu0 %v2767, 48
        %v3560 = vpop.permute.xlu0 %3559
        %3561 = vrot.lane.b32.xlu0 %v2768, 48
        %v3562 = vpop.permute.xlu0 %3561
        %3563 = vrot.lane.b32.xlu0 %v2769, 48
        %v3564 = vpop.permute.xlu0 %3563
        %3565 = vrot.lane.b32.xlu0 %v2770, 48
        %v3566 = vpop.permute.xlu0 %3565
        %3567 = vrot.lane.b32.xlu0 %v2771, 48
        %v3568 = vpop.permute.xlu0 %3567
        %3569 = vrot.lane.b32.xlu0 %v2772, 48
        %v3570 = vpop.permute.xlu0 %3569
        %3571 = vrot.lane.b32.xlu0 %v2773, 48
        %v3572 = vpop.permute.xlu0 %3571
        %3573 = vrot.lane.b32.xlu0 %v2774, 48
        %v3574 = vpop.permute.xlu0 %3573
        %3639 = vrot.lane.b32.xlu0 %v2775, 56
        %v3640 = vpop.permute.xlu0 %3639
        %3641 = vrot.lane.b32.xlu0 %v2776, 56
        %v3642 = vpop.permute.xlu0 %3641
        %3643 = vrot.lane.b32.xlu0 %v2777, 56
        %v3644 = vpop.permute.xlu0 %3643
        %3645 = vrot.lane.b32.xlu0 %v2778, 56
        %v3646 = vpop.permute.xlu0 %3645
        %3647 = vrot.lane.b32.xlu0 %v2779, 56
        %v3648 = vpop.permute.xlu0 %3647
        %3649 = vrot.lane.b32.xlu0 %v2780, 56
        %v3650 = vpop.permute.xlu0 %3649
        %3651 = vrot.lane.b32.xlu0 %v2781, 56
        %v3652 = vpop.permute.xlu0 %3651
        %3653 = vrot.lane.b32.xlu0 %v2782, 56
        %v3654 = vpop.permute.xlu0 %3653
        %3655 = vrot.lane.b32.xlu0 %v2783, 56
        %v3656 = vpop.permute.xlu0 %3655
        %3657 = vrot.lane.b32.xlu0 %v2784, 56
        %v3658 = vpop.permute.xlu0 %3657
        %3659 = vrot.lane.b32.xlu0 %v2785, 56
        %v3660 = vpop.permute.xlu0 %3659
        %3661 = vrot.lane.b32.xlu0 %v2786, 56
        %v3662 = vpop.permute.xlu0 %3661
        %3663 = vrot.lane.b32.xlu0 %v2787, 56
        %v3664 = vpop.permute.xlu0 %3663
        %3665 = vrot.lane.b32.xlu0 %v2788, 56
        %v3666 = vpop.permute.xlu0 %3665
        %3667 = vrot.lane.b32.xlu0 %v2789, 56
        %v3668 = vpop.permute.xlu0 %3667
        %3669 = vrot.lane.b32.xlu0 %v2790, 56
        %v3670 = vpop.permute.xlu0 %3669
        %3671 = vrot.lane.b32.xlu0 %v2791, 56
        %v3672 = vpop.permute.xlu0 %3671
        %3673 = vrot.lane.b32.xlu0 %v2792, 56
        %v3674 = vpop.permute.xlu0 %3673
        %3675 = vrot.lane.b32.xlu0 %v2793, 56
        %v3676 = vpop.permute.xlu0 %3675
        %3677 = vrot.lane.b32.xlu0 %v2794, 56
        %v3678 = vpop.permute.xlu0 %3677
        %3679 = vrot.lane.b32.xlu0 %v2795, 56
        %v3680 = vpop.permute.xlu0 %3679
        %3681 = vrot.lane.b32.xlu0 %v2796, 56
        %v3682 = vpop.permute.xlu0 %3681
        %3683 = vrot.lane.b32.xlu0 %v2797, 56
        %v3684 = vpop.permute.xlu0 %3683
        %3685 = vrot.lane.b32.xlu0 %v2798, 56
        %v3686 = vpop.permute.xlu0 %3685
        %3687 = vrot.lane.b32.xlu0 %v2799, 56
        %v3688 = vpop.permute.xlu0 %3687
        %3689 = vrot.lane.b32.xlu0 %v2800, 56
        %v3690 = vpop.permute.xlu0 %3689
        %3691 = vrot.lane.b32.xlu0 %v2801, 56
        %v3692 = vpop.permute.xlu0 %3691
        %3693 = vrot.lane.b32.xlu0 %v2802, 56
        %v3694 = vpop.permute.xlu0 %3693
        %3695 = vrot.lane.b32.xlu0 %v2803, 56
        %v3696 = vpop.permute.xlu0 %3695
        %3697 = vrot.lane.b32.xlu0 %v2804, 56
        %v3698 = vpop.permute.xlu0 %3697
        %3699 = vrot.lane.b32.xlu0 %v2805, 56
        %v3700 = vpop.permute.xlu0 %3699
        %3701 = vrot.lane.b32.xlu0 %v2806, 56
        %v3702 = vpop.permute.xlu0 %3701
        %3767 = vrot.lane.b32.xlu0 %v2807, 64
        %v3768 = vpop.permute.xlu0 %3767
        %3769 = vrot.lane.b32.xlu0 %v2808, 64
        %v3770 = vpop.permute.xlu0 %3769
        %3771 = vrot.lane.b32.xlu0 %v2809, 64
        %v3772 = vpop.permute.xlu0 %3771
        %3773 = vrot.lane.b32.xlu0 %v2810, 64
        %v3774 = vpop.permute.xlu0 %3773
        %3775 = vrot.lane.b32.xlu0 %v2811, 64
        %v3776 = vpop.permute.xlu0 %3775
        %3777 = vrot.lane.b32.xlu0 %v2812, 64
        %v3778 = vpop.permute.xlu0 %3777
        %3779 = vrot.lane.b32.xlu0 %v2813, 64
        %v3780 = vpop.permute.xlu0 %3779
        %3781 = vrot.lane.b32.xlu0 %v2814, 64
        %v3782 = vpop.permute.xlu0 %3781
        %3783 = vrot.lane.b32.xlu0 %v2815, 64
        %v3784 = vpop.permute.xlu0 %3783
        %3785 = vrot.lane.b32.xlu0 %v2816, 64
        %v3786 = vpop.permute.xlu0 %3785
        %3787 = vrot.lane.b32.xlu0 %v2817, 64
        %v3788 = vpop.permute.xlu0 %3787
        %3789 = vrot.lane.b32.xlu0 %v2818, 64
        %v3790 = vpop.permute.xlu0 %3789
        %3791 = vrot.lane.b32.xlu0 %v2819, 64
        %v3792 = vpop.permute.xlu0 %3791
        %3793 = vrot.lane.b32.xlu0 %v2820, 64
        %v3794 = vpop.permute.xlu0 %3793
        %3795 = vrot.lane.b32.xlu0 %v2821, 64
        %v3796 = vpop.permute.xlu0 %3795
        %3797 = vrot.lane.b32.xlu0 %v2822, 64
        %v3798 = vpop.permute.xlu0 %3797
        %3799 = vrot.lane.b32.xlu0 %v2823, 64
        %v3800 = vpop.permute.xlu0 %3799
        %3801 = vrot.lane.b32.xlu0 %v2824, 64
        %v3802 = vpop.permute.xlu0 %3801
        %3803 = vrot.lane.b32.xlu0 %v2825, 64
        %v3804 = vpop.permute.xlu0 %3803
        %3805 = vrot.lane.b32.xlu0 %v2826, 64
        %v3806 = vpop.permute.xlu0 %3805
        %3807 = vrot.lane.b32.xlu0 %v2827, 64
        %v3808 = vpop.permute.xlu0 %3807
        %3809 = vrot.lane.b32.xlu0 %v2828, 64
        %v3810 = vpop.permute.xlu0 %3809
        %3811 = vrot.lane.b32.xlu0 %v2829, 64
        %v3812 = vpop.permute.xlu0 %3811
        %3813 = vrot.lane.b32.xlu0 %v2830, 64
        %v3814 = vpop.permute.xlu0 %3813
        %3815 = vrot.lane.b32.xlu0 %v2831, 64
        %v3816 = vpop.permute.xlu0 %3815
        %3817 = vrot.lane.b32.xlu0 %v2832, 64
        %v3818 = vpop.permute.xlu0 %3817
        %3819 = vrot.lane.b32.xlu0 %v2833, 64
        %v3820 = vpop.permute.xlu0 %3819
        %3821 = vrot.lane.b32.xlu0 %v2834, 64
        %v3822 = vpop.permute.xlu0 %3821
        %3823 = vrot.lane.b32.xlu0 %v2835, 64
        %v3824 = vpop.permute.xlu0 %3823
        %3825 = vrot.lane.b32.xlu0 %v2836, 64
        %v3826 = vpop.permute.xlu0 %3825
        %3827 = vrot.lane.b32.xlu0 %v2837, 64
        %v3828 = vpop.permute.xlu0 %3827
        %3829 = vrot.lane.b32.xlu0 %v2838, 64
        %v3830 = vpop.permute.xlu0 %3829
        %v3863 = vsel %vm387, %v2550, %v2872
        %v3864 = vsel %vm387, %v2551, %v2874
        %v3865 = vsel %vm387, %v2552, %v2876
        %v3866 = vsel %vm387, %v2553, %v2878
        %v3867 = vsel %vm387, %v2554, %v2880
        %v3868 = vsel %vm387, %v2555, %v2882
        %v3869 = vsel %vm387, %v2556, %v2884
        %v3870 = vsel %vm387, %v2557, %v2886
        %v3871 = vsel %vm387, %v2558, %v2888
        %v3872 = vsel %vm387, %v2559, %v2890
        %v3873 = vsel %vm387, %v2560, %v2892
        %v3874 = vsel %vm387, %v2561, %v2894
        %v3875 = vsel %vm387, %v2562, %v2896
        %v3876 = vsel %vm387, %v2563, %v2898
        %v3877 = vsel %vm387, %v2564, %v2900
        %v3878 = vsel %vm387, %v2565, %v2902
        %v3879 = vsel %vm387, %v2566, %v2904
        %v3880 = vsel %vm387, %v2567, %v2906
        %v3881 = vsel %vm387, %v2568, %v2908
        %v3882 = vsel %vm387, %v2569, %v2910
        %v3883 = vsel %vm387, %v2570, %v2912
        %v3884 = vsel %vm387, %v2571, %v2914
        %v3885 = vsel %vm387, %v2572, %v2916
        %v3886 = vsel %vm387, %v2573, %v2918
        %v3887 = vsel %vm387, %v2574, %v2920
        %v3888 = vsel %vm387, %v2575, %v2922
        %v3889 = vsel %vm387, %v2576, %v2924
        %v3890 = vsel %vm387, %v2577, %v2926
        %v3891 = vsel %vm387, %v2578, %v2928
        %v3892 = vsel %vm387, %v2579, %v2930
        %v3893 = vsel %vm387, %v2580, %v2932
        %v3894 = vsel %vm387, %v2581, %v2934
        %v3895 = vsel %vm1918, %v3863, %v3000
        %v3896 = vsel %vm1918, %v3864, %v3002
        %v3897 = vsel %vm1918, %v3865, %v3004
        %v3898 = vsel %vm1918, %v3866, %v3006
        %v3899 = vsel %vm1918, %v3867, %v3008
        %v3900 = vsel %vm1918, %v3868, %v3010
        %v3901 = vsel %vm1918, %v3869, %v3012
        %v3902 = vsel %vm1918, %v3870, %v3014
        %v3903 = vsel %vm1918, %v3871, %v3016
        %v3904 = vsel %vm1918, %v3872, %v3018
        %v3905 = vsel %vm1918, %v3873, %v3020
        %v3906 = vsel %vm1918, %v3874, %v3022
        %v3907 = vsel %vm1918, %v3875, %v3024
        %v3908 = vsel %vm1918, %v3876, %v3026
        %v3909 = vsel %vm1918, %v3877, %v3028
        %v3910 = vsel %vm1918, %v3878, %v3030
        %v3911 = vsel %vm1918, %v3879, %v3032
        %v3912 = vsel %vm1918, %v3880, %v3034
        %v3913 = vsel %vm1918, %v3881, %v3036
        %v3914 = vsel %vm1918, %v3882, %v3038
        %v3915 = vsel %vm1918, %v3883, %v3040
        %v3916 = vsel %vm1918, %v3884, %v3042
        %v3917 = vsel %vm1918, %v3885, %v3044
        %v3918 = vsel %vm1918, %v3886, %v3046
        %v3919 = vsel %vm1918, %v3887, %v3048
        %v3920 = vsel %vm1918, %v3888, %v3050
        %v3921 = vsel %vm1918, %v3889, %v3052
        %v3922 = vsel %vm1918, %v3890, %v3054
        %v3923 = vsel %vm1918, %v3891, %v3056
        %v3924 = vsel %vm1918, %v3892, %v3058
        %v3925 = vsel %vm1918, %v3893, %v3060
        %v3926 = vsel %vm1918, %v3894, %v3062
        %v3927 = vsel %vm1984, %v3895, %v3128
        %v3928 = vsel %vm1984, %v3896, %v3130
        %v3929 = vsel %vm1984, %v3897, %v3132
        %v3930 = vsel %vm1984, %v3898, %v3134
        %v3931 = vsel %vm1984, %v3899, %v3136
        %v3932 = vsel %vm1984, %v3900, %v3138
        %v3933 = vsel %vm1984, %v3901, %v3140
        %v3934 = vsel %vm1984, %v3902, %v3142
        %v3935 = vsel %vm1984, %v3903, %v3144
        %v3936 = vsel %vm1984, %v3904, %v3146
        %v3937 = vsel %vm1984, %v3905, %v3148
        %v3938 = vsel %vm1984, %v3906, %v3150
        %v3939 = vsel %vm1984, %v3907, %v3152
        %v3940 = vsel %vm1984, %v3908, %v3154
        %v3941 = vsel %vm1984, %v3909, %v3156
        %v3942 = vsel %vm1984, %v3910, %v3158
        %v3943 = vsel %vm1984, %v3911, %v3160
        %v3944 = vsel %vm1984, %v3912, %v3162
        %v3945 = vsel %vm1984, %v3913, %v3164
        %v3946 = vsel %vm1984, %v3914, %v3166
        %v3947 = vsel %vm1984, %v3915, %v3168
        %v3948 = vsel %vm1984, %v3916, %v3170
        %v3949 = vsel %vm1984, %v3917, %v3172
        %v3950 = vsel %vm1984, %v3918, %v3174
        %v3951 = vsel %vm1984, %v3919, %v3176
        %v3952 = vsel %vm1984, %v3920, %v3178
        %v3953 = vsel %vm1984, %v3921, %v3180
        %v3954 = vsel %vm1984, %v3922, %v3182
        %v3955 = vsel %vm1984, %v3923, %v3184
        %v3956 = vsel %vm1984, %v3924, %v3186
        %v3957 = vsel %vm1984, %v3925, %v3188
        %v3958 = vsel %vm1984, %v3926, %v3190
        %v3959 = vsel %vm2050, %v3927, %v3256
        %v3960 = vsel %vm2050, %v3928, %v3258
        %v3961 = vsel %vm2050, %v3929, %v3260
        %v3962 = vsel %vm2050, %v3930, %v3262
        %v3963 = vsel %vm2050, %v3931, %v3264
        %v3964 = vsel %vm2050, %v3932, %v3266
        %v3965 = vsel %vm2050, %v3933, %v3268
        %v3966 = vsel %vm2050, %v3934, %v3270
        %v3967 = vsel %vm2050, %v3935, %v3272
        %v3968 = vsel %vm2050, %v3936, %v3274
        %v3969 = vsel %vm2050, %v3937, %v3276
        %v3970 = vsel %vm2050, %v3938, %v3278
        %v3971 = vsel %vm2050, %v3939, %v3280
        %v3972 = vsel %vm2050, %v3940, %v3282
        %v3973 = vsel %vm2050, %v3941, %v3284
        %v3974 = vsel %vm2050, %v3942, %v3286
        %v3975 = vsel %vm2050, %v3943, %v3288
        %v3976 = vsel %vm2050, %v3944, %v3290
        %v3977 = vsel %vm2050, %v3945, %v3292
        %v3978 = vsel %vm2050, %v3946, %v3294
        %v3979 = vsel %vm2050, %v3947, %v3296
        %v3980 = vsel %vm2050, %v3948, %v3298
        %v3981 = vsel %vm2050, %v3949, %v3300
        %v3982 = vsel %vm2050, %v3950, %v3302
        %v3983 = vsel %vm2050, %v3951, %v3304
        %v3984 = vsel %vm2050, %v3952, %v3306
        %v3985 = vsel %vm2050, %v3953, %v3308
        %v3986 = vsel %vm2050, %v3954, %v3310
        %v3987 = vsel %vm2050, %v3955, %v3312
        %v3988 = vsel %vm2050, %v3956, %v3314
        %v3989 = vsel %vm2050, %v3957, %v3316
        %v3990 = vsel %vm2050, %v3958, %v3318
        %vm3991 = vcmask 326656
        %v3992 = vsel %vm3991, %v3959, %v3384
        %v3993 = vsel %vm3991, %v3960, %v3386
        %v3994 = vsel %vm3991, %v3961, %v3388
        %v3995 = vsel %vm3991, %v3962, %v3390
        %v3996 = vsel %vm3991, %v3963, %v3392
        %v3997 = vsel %vm3991, %v3964, %v3394
        %v3998 = vsel %vm3991, %v3965, %v3396
        %v3999 = vsel %vm3991, %v3966, %v3398
        %v4000 = vsel %vm3991, %v3967, %v3400
        %v4001 = vsel %vm3991, %v3968, %v3402
        %v4002 = vsel %vm3991, %v3969, %v3404
        %v4003 = vsel %vm3991, %v3970, %v3406
        %v4004 = vsel %vm3991, %v3971, %v3408
        %v4005 = vsel %vm3991, %v3972, %v3410
        %v4006 = vsel %vm3991, %v3973, %v3412
        %v4007 = vsel %vm3991, %v3974, %v3414
        %v4008 = vsel %vm3991, %v3975, %v3416
        %v4009 = vsel %vm3991, %v3976, %v3418
        %v4010 = vsel %vm3991, %v3977, %v3420
        %v4011 = vsel %vm3991, %v3978, %v3422
        %v4012 = vsel %vm3991, %v3979, %v3424
        %v4013 = vsel %vm3991, %v3980, %v3426
        %v4014 = vsel %vm3991, %v3981, %v3428
        %v4015 = vsel %vm3991, %v3982, %v3430
        %v4016 = vsel %vm3991, %v3983, %v3432
        %v4017 = vsel %vm3991, %v3984, %v3434
        %v4018 = vsel %vm3991, %v3985, %v3436
        %v4019 = vsel %vm3991, %v3986, %v3438
        %v4020 = vsel %vm3991, %v3987, %v3440
        %v4021 = vsel %vm3991, %v3988, %v3442
        %v4022 = vsel %vm3991, %v3989, %v3444
        %v4023 = vsel %vm3991, %v3990, %v3446
        %vm4024 = vcmask 392192
        %v4025 = vsel %vm4024, %v3992, %v3512
        %v4026 = vsel %vm4024, %v3993, %v3514
        %v4027 = vsel %vm4024, %v3994, %v3516
        %v4028 = vsel %vm4024, %v3995, %v3518
        %v4029 = vsel %vm4024, %v3996, %v3520
        %v4030 = vsel %vm4024, %v3997, %v3522
        %v4031 = vsel %vm4024, %v3998, %v3524
        %v4032 = vsel %vm4024, %v3999, %v3526
        %v4033 = vsel %vm4024, %v4000, %v3528
        %v4034 = vsel %vm4024, %v4001, %v3530
        %v4035 = vsel %vm4024, %v4002, %v3532
        %v4036 = vsel %vm4024, %v4003, %v3534
        %v4037 = vsel %vm4024, %v4004, %v3536
        %v4038 = vsel %vm4024, %v4005, %v3538
        %v4039 = vsel %vm4024, %v4006, %v3540
        %v4040 = vsel %vm4024, %v4007, %v3542
        %v4041 = vsel %vm4024, %v4008, %v3544
        %v4042 = vsel %vm4024, %v4009, %v3546
        %v4043 = vsel %vm4024, %v4010, %v3548
        %v4044 = vsel %vm4024, %v4011, %v3550
        %v4045 = vsel %vm4024, %v4012, %v3552
        %v4046 = vsel %vm4024, %v4013, %v3554
        %v4047 = vsel %vm4024, %v4014, %v3556
        %v4048 = vsel %vm4024, %v4015, %v3558
        %v4049 = vsel %vm4024, %v4016, %v3560
        %v4050 = vsel %vm4024, %v4017, %v3562
        %v4051 = vsel %vm4024, %v4018, %v3564
        %v4052 = vsel %vm4024, %v4019, %v3566
        %v4053 = vsel %vm4024, %v4020, %v3568
        %v4054 = vsel %vm4024, %v4021, %v3570
        %v4055 = vsel %vm4024, %v4022, %v3572
        %v4056 = vsel %vm4024, %v4023, %v3574
        %vm4057 = vcmask 457728
        %v4058 = vsel %vm4057, %v4025, %v3640
        %v4059 = vsel %vm4057, %v4026, %v3642
        %v4060 = vsel %vm4057, %v4027, %v3644
        %v4061 = vsel %vm4057, %v4028, %v3646
        %v4062 = vsel %vm4057, %v4029, %v3648
        %v4063 = vsel %vm4057, %v4030, %v3650
        %v4064 = vsel %vm4057, %v4031, %v3652
        %v4065 = vsel %vm4057, %v4032, %v3654
        %v4066 = vsel %vm4057, %v4033, %v3656
        %v4067 = vsel %vm4057, %v4034, %v3658
        %v4068 = vsel %vm4057, %v4035, %v3660
        %v4069 = vsel %vm4057, %v4036, %v3662
        %v4070 = vsel %vm4057, %v4037, %v3664
        %v4071 = vsel %vm4057, %v4038, %v3666
        %v4072 = vsel %vm4057, %v4039, %v3668
        %v4073 = vsel %vm4057, %v4040, %v3670
        %v4074 = vsel %vm4057, %v4041, %v3672
        %v4075 = vsel %vm4057, %v4042, %v3674
        %v4076 = vsel %vm4057, %v4043, %v3676
        %v4077 = vsel %vm4057, %v4044, %v3678
        %v4078 = vsel %vm4057, %v4045, %v3680
        %v4079 = vsel %vm4057, %v4046, %v3682
        %v4080 = vsel %vm4057, %v4047, %v3684
        %v4081 = vsel %vm4057, %v4048, %v3686
        %v4082 = vsel %vm4057, %v4049, %v3688
        %v4083 = vsel %vm4057, %v4050, %v3690
        %v4084 = vsel %vm4057, %v4051, %v3692
        %v4085 = vsel %vm4057, %v4052, %v3694
        %v4086 = vsel %vm4057, %v4053, %v3696
        %v4087 = vsel %vm4057, %v4054, %v3698
        %v4088 = vsel %vm4057, %v4055, %v3700
        %v4089 = vsel %vm4057, %v4056, %v3702
        %vm4090 = vcmask 523264
        %v4091 = vsel %vm4090, %v4058, %v3768
        %v4092 = vsel %vm4090, %v4059, %v3770
        %v4093 = vsel %vm4090, %v4060, %v3772
        %v4094 = vsel %vm4090, %v4061, %v3774
        %v4095 = vsel %vm4090, %v4062, %v3776
        %v4096 = vsel %vm4090, %v4063, %v3778
        %v4097 = vsel %vm4090, %v4064, %v3780
        %v4098 = vsel %vm4090, %v4065, %v3782
        %v4099 = vsel %vm4090, %v4066, %v3784
        %v4100 = vsel %vm4090, %v4067, %v3786
        %v4101 = vsel %vm4090, %v4068, %v3788
        %v4102 = vsel %vm4090, %v4069, %v3790
        %v4103 = vsel %vm4090, %v4070, %v3792
        %v4104 = vsel %vm4090, %v4071, %v3794
        %v4105 = vsel %vm4090, %v4072, %v3796
        %v4106 = vsel %vm4090, %v4073, %v3798
        %v4107 = vsel %vm4090, %v4074, %v3800
        %v4108 = vsel %vm4090, %v4075, %v3802
        %v4109 = vsel %vm4090, %v4076, %v3804
        %v4110 = vsel %vm4090, %v4077, %v3806
        %v4111 = vsel %vm4090, %v4078, %v3808
        %v4112 = vsel %vm4090, %v4079, %v3810
        %v4113 = vsel %vm4090, %v4080, %v3812
        %v4114 = vsel %vm4090, %v4081, %v3814
        %v4115 = vsel %vm4090, %v4082, %v3816
        %v4116 = vsel %vm4090, %v4083, %v3818
        %v4117 = vsel %vm4090, %v4084, %v3820
        %v4118 = vsel %vm4090, %v4085, %v3822
        %v4119 = vsel %vm4090, %v4086, %v3824
        %v4120 = vsel %vm4090, %v4087, %v3826
        %v4121 = vsel %vm4090, %v4088, %v3828
        %v4122 = vsel %vm4090, %v4089, %v3830
        %v4123 = vld [vmem:[%s3] sm:$0xff]
        %v4124 = vld [vmem:[%s3 + $0x8] sm:$0xff]
        %v4125 = vld [vmem:[%s3 + $0x10] sm:$0xff]
        %v4126 = vld [vmem:[%s3 + $0x18] sm:$0xff]
        %v4127 = vld [vmem:[%s3 + $0x20] sm:$0xff]
        %v4128 = vld [vmem:[%s3 + $0x28] sm:$0xff]
        %v4129 = vld [vmem:[%s3 + $0x30] sm:$0xff]
        %v4130 = vld [vmem:[%s3 + $0x38] sm:$0xff]
        %v4131 = vld [vmem:[%s3 + $0x40] sm:$0xff]
        %v4132 = vld [vmem:[%s4] sm:$0x1]
        %v4134 = vlaneseq
        %v4135 = vshrl.u32 %v4134, 7
        %v4136 = vsub.s32 0, %v4135
        %v4137 = vrot.slane %v4132, %v4136
        %vm4139 = vcmask 588800
        %v4141 = vsel %vm4139, %v4091, 0
        %v4144 = vsel %vm4139, %v4092, 0
        %v4147 = vsel %vm4139, %v4093, 0
        %v4150 = vsel %vm4139, %v4094, 0
        %v4153 = vsel %vm4139, %v4095, 0
        %v4156 = vsel %vm4139, %v4096, 0
        %v4159 = vsel %vm4139, %v4097, 0
        %v4162 = vsel %vm4139, %v4098, 0
        %v4165 = vsel %vm4139, %v4099, 0
        %v4168 = vsel %vm4139, %v4100, 0
        %v4171 = vsel %vm4139, %v4101, 0
        %v4174 = vsel %vm4139, %v4102, 0
        %v4177 = vsel %vm4139, %v4103, 0
        %v4180 = vsel %vm4139, %v4104, 0
        %v4183 = vsel %vm4139, %v4105, 0
        %v4186 = vsel %vm4139, %v4106, 0
        %v4189 = vsel %vm4139, %v4107, 0
        %v4192 = vsel %vm4139, %v4108, 0
        %v4195 = vsel %vm4139, %v4109, 0
        %v4198 = vsel %vm4139, %v4110, 0
        %v4201 = vsel %vm4139, %v4111, 0
        %v4204 = vsel %vm4139, %v4112, 0
        %v4207 = vsel %vm4139, %v4113, 0
        %v4210 = vsel %vm4139, %v4114, 0
        %v4213 = vsel %vm4139, %v4115, 0
        %v4216 = vsel %vm4139, %v4116, 0
        %v4219 = vsel %vm4139, %v4117, 0
        %v4222 = vsel %vm4139, %v4118, 0
        %v4225 = vsel %vm4139, %v4119, 0
        %v4228 = vsel %vm4139, %v4120, 0
        %v4231 = vsel %vm4139, %v4121, 0
        %v4234 = vsel %vm4139, %v4122, 0
        %4236 = vmatprep.subr.mxu0 0.0
        %4237 = vmatpush1.msra.mxu0 0.0
        %4238 = vmatprep.subr.mxu0 0.0
        %4239 = vmatpush1.msra.mxu0 0.0
        %4240 = vmatprep.subr.mxu0 0.0
        %4241 = vmatpush1.msra.mxu0 0.0
        %4242 = vmatprep.subr.mxu0 0.0
        %4243 = vmatpush1.msra.mxu0 0.0
        %4244 = vmatprep.subr.mxu0 0.0
        %4245 = vmatpush1.msra.mxu0 0.0
        %4246 = vmatprep.subr.mxu0 0.0
        %4247 = vmatpush1.msra.mxu0 0.0
        %4248 = vmatprep.subr.mxu0 0.0
        %4249 = vmatpush1.msra.mxu0 0.0
        %4250 = vmatprep.subr.mxu0 0.0
        %4251 = vmatpush1.msra.mxu0 %v4131
        %4252 = vmatprep.subr.mxu0 0.0
        %4253 = vmatpush1.msra.mxu0 %v4130
        %4254 = vmatprep.subr.mxu0 0.0
        %4255 = vmatpush1.msra.mxu0 %v4129
        %4256 = vmatprep.subr.mxu0 0.0
        %4257 = vmatpush1.msra.mxu0 %v4128
        %4258 = vmatprep.subr.mxu0 0.0
        %4259 = vmatpush1.msra.mxu0 %v4127
        %4260 = vmatprep.subr.mxu0 0.0
        %4261 = vmatpush1.msra.mxu0 %v4126
        %4262 = vmatprep.subr.mxu0 0.0
        %4263 = vmatpush1.msra.mxu0 %v4125
        %4264 = vmatprep.subr.mxu0 0.0
        %4265 = vmatpush1.msra.mxu0 %v4124
        %4266 = vmatprep.subr.mxu0 0.0
        %4267 = vmatpush1.msra.mxu0 %v4123
        %4268 = vmatprep.subr.mxu0 0.0
        %4269 = vmatpush2.msra.mxu0 0.0
        %4270 = vmatprep.subr.mxu0 0.0
        %4271 = vmatpush2.msra.mxu0 0.0
        %4272 = vmatprep.subr.mxu0 0.0
        %4273 = vmatpush2.msra.mxu0 0.0
        %4274 = vmatprep.subr.mxu0 0.0
        %4275 = vmatpush2.msra.mxu0 0.0
        %4276 = vmatprep.subr.mxu0 0.0
        %4277 = vmatpush2.msra.mxu0 0.0
        %4278 = vmatprep.subr.mxu0 0.0
        %4279 = vmatpush2.msra.mxu0 0.0
        %4280 = vmatprep.subr.mxu0 0.0
        %4281 = vmatpush2.msra.mxu0 0.0
        %4282 = vmatprep.subr.mxu0 0.0
        %4283 = vmatpush2.msra.mxu0 0.0
        %4284 = vmatprep.subr.mxu0 0.0
        %4285 = vmatpush2.msra.mxu0 0.0
        %4286 = vmatprep.subr.mxu0 0.0
        %4287 = vmatpush2.msra.mxu0 0.0
        %4288 = vmatprep.subr.mxu0 0.0
        %4289 = vmatpush2.msra.mxu0 0.0
        %4290 = vmatprep.subr.mxu0 0.0
        %4291 = vmatpush2.msra.mxu0 0.0
        %4292 = vmatprep.subr.mxu0 0.0
        %4293 = vmatpush2.msra.mxu0 0.0
        %4294 = vmatprep.subr.mxu0 0.0
        %4295 = vmatpush2.msra.mxu0 0.0
        %4296 = vmatprep.subr.mxu0 0.0
        %4297 = vmatpush2.msra.mxu0 0.0
        %4298 = vmatprep.subr.mxu0 0.0
        %4299 = vmatpush2.msra.mxu0 0.0
        %4300 = vmatprep.mubr.f32.mxu0 0.0
        %4301 = vmatmul.mubr.f32.gmra.mxu0 %v4141
        %v4302 = vpop.f32.mrf.mxu0
        %v4303 = vadd.f32 %v4137, %v4302
        %v4304 = vpop.f32.mrf.mxu0
        %4305 = vmatprep.mubr.f32.mxu0 0.0
        %4306 = vmatmul.mubr.f32.gmra.mxu0 %v4144
        %v4307 = vpop.f32.mrf.mxu0
        %v4308 = vadd.f32 %v4137, %v4307
        %v4309 = vpop.f32.mrf.mxu0
        %4310 = vmatprep.mubr.f32.mxu0 0.0
        %4311 = vmatmul.mubr.f32.gmra.mxu0 %v4147
        %v4312 = vpop.f32.mrf.mxu0
        %v4313 = vadd.f32 %v4137, %v4312
        %v4314 = vpop.f32.mrf.mxu0
        %4315 = vmatprep.mubr.f32.mxu0 0.0
        %4316 = vmatmul.mubr.f32.gmra.mxu0 %v4150
        %v4317 = vpop.f32.mrf.mxu0
        %v4318 = vadd.f32 %v4137, %v4317
        %v4319 = vpop.f32.mrf.mxu0
        %4320 = vmatprep.mubr.f32.mxu0 0.0
        %4321 = vmatmul.mubr.f32.gmra.mxu0 %v4153
        %v4322 = vpop.f32.mrf.mxu0
        %v4323 = vadd.f32 %v4137, %v4322
        %v4324 = vpop.f32.mrf.mxu0
        %4325 = vmatprep.mubr.f32.mxu0 0.0
        %4326 = vmatmul.mubr.f32.gmra.mxu0 %v4156
        %v4327 = vpop.f32.mrf.mxu0
        %v4328 = vadd.f32 %v4137, %v4327
        %v4329 = vpop.f32.mrf.mxu0
        %4330 = vmatprep.mubr.f32.mxu0 0.0
        %4331 = vmatmul.mubr.f32.gmra.mxu0 %v4159
        %v4332 = vpop.f32.mrf.mxu0
        %v4333 = vadd.f32 %v4137, %v4332
        %v4334 = vpop.f32.mrf.mxu0
        %4335 = vmatprep.mubr.f32.mxu0 0.0
        %4336 = vmatmul.mubr.f32.gmra.mxu0 %v4162
        %v4337 = vpop.f32.mrf.mxu0
        %v4338 = vadd.f32 %v4137, %v4337
        %v4339 = vpop.f32.mrf.mxu0
        %4340 = vmatprep.mubr.f32.mxu0 0.0
        %4341 = vmatmul.mubr.f32.gmra.mxu0 %v4165
        %v4342 = vpop.f32.mrf.mxu0
        %v4343 = vadd.f32 %v4137, %v4342
        %v4344 = vpop.f32.mrf.mxu0
        %4345 = vmatprep.mubr.f32.mxu0 0.0
        %4346 = vmatmul.mubr.f32.gmra.mxu0 %v4168
        %v4347 = vpop.f32.mrf.mxu0
        %v4348 = vadd.f32 %v4137, %v4347
        %v4349 = vpop.f32.mrf.mxu0
        %4350 = vmatprep.mubr.f32.mxu0 0.0
        %4351 = vmatmul.mubr.f32.gmra.mxu0 %v4171
        %v4352 = vpop.f32.mrf.mxu0
        %v4353 = vadd.f32 %v4137, %v4352
        %v4354 = vpop.f32.mrf.mxu0
        %4355 = vmatprep.mubr.f32.mxu0 0.0
        %4356 = vmatmul.mubr.f32.gmra.mxu0 %v4174
        %v4357 = vpop.f32.mrf.mxu0
        %v4358 = vadd.f32 %v4137, %v4357
        %v4359 = vpop.f32.mrf.mxu0
        %4360 = vmatprep.mubr.f32.mxu0 0.0
        %4361 = vmatmul.mubr.f32.gmra.mxu0 %v4177
        %v4362 = vpop.f32.mrf.mxu0
        %v4363 = vadd.f32 %v4137, %v4362
        %v4364 = vpop.f32.mrf.mxu0
        %4365 = vmatprep.mubr.f32.mxu0 0.0
        %4366 = vmatmul.mubr.f32.gmra.mxu0 %v4180
        %v4367 = vpop.f32.mrf.mxu0
        %v4368 = vadd.f32 %v4137, %v4367
        %v4369 = vpop.f32.mrf.mxu0
        %4370 = vmatprep.mubr.f32.mxu0 0.0
        %4371 = vmatmul.mubr.f32.gmra.mxu0 %v4183
        %v4372 = vpop.f32.mrf.mxu0
        %v4373 = vadd.f32 %v4137, %v4372
        %v4374 = vpop.f32.mrf.mxu0
        %4375 = vmatprep.mubr.f32.mxu0 0.0
        %4376 = vmatmul.mubr.f32.gmra.mxu0 %v4186
        %v4377 = vpop.f32.mrf.mxu0
        %v4378 = vadd.f32 %v4137, %v4377
        %v4379 = vpop.f32.mrf.mxu0
        %4380 = vmatprep.mubr.f32.mxu0 0.0
        %4381 = vmatmul.mubr.f32.gmra.mxu0 %v4189
        %v4382 = vpop.f32.mrf.mxu0
        %v4383 = vadd.f32 %v4137, %v4382
        %v4384 = vpop.f32.mrf.mxu0
        %4385 = vmatprep.mubr.f32.mxu0 0.0
        %4386 = vmatmul.mubr.f32.gmra.mxu0 %v4192
        %v4387 = vpop.f32.mrf.mxu0
        %v4388 = vadd.f32 %v4137, %v4387
        %v4389 = vpop.f32.mrf.mxu0
        %4390 = vmatprep.mubr.f32.mxu0 0.0
        %4391 = vmatmul.mubr.f32.gmra.mxu0 %v4195
        %v4392 = vpop.f32.mrf.mxu0
        %v4393 = vadd.f32 %v4137, %v4392
        %v4394 = vpop.f32.mrf.mxu0
        %4395 = vmatprep.mubr.f32.mxu0 0.0
        %4396 = vmatmul.mubr.f32.gmra.mxu0 %v4198
        %v4397 = vpop.f32.mrf.mxu0
        %v4398 = vadd.f32 %v4137, %v4397
        %v4399 = vpop.f32.mrf.mxu0
        %4400 = vmatprep.mubr.f32.mxu0 0.0
        %4401 = vmatmul.mubr.f32.gmra.mxu0 %v4201
        %v4402 = vpop.f32.mrf.mxu0
        %v4403 = vadd.f32 %v4137, %v4402
        %v4404 = vpop.f32.mrf.mxu0
        %4405 = vmatprep.mubr.f32.mxu0 0.0
        %4406 = vmatmul.mubr.f32.gmra.mxu0 %v4204
        %v4407 = vpop.f32.mrf.mxu0
        %v4408 = vadd.f32 %v4137, %v4407
        %v4409 = vpop.f32.mrf.mxu0
        %4410 = vmatprep.mubr.f32.mxu0 0.0
        %4411 = vmatmul.mubr.f32.gmra.mxu0 %v4207
        %v4412 = vpop.f32.mrf.mxu0
        %v4413 = vadd.f32 %v4137, %v4412
        %v4414 = vpop.f32.mrf.mxu0
        %4415 = vmatprep.mubr.f32.mxu0 0.0
        %4416 = vmatmul.mubr.f32.gmra.mxu0 %v4210
        %v4417 = vpop.f32.mrf.mxu0
        %v4418 = vadd.f32 %v4137, %v4417
        %v4419 = vpop.f32.mrf.mxu0
        %4420 = vmatprep.mubr.f32.mxu0 0.0
        %4421 = vmatmul.mubr.f32.gmra.mxu0 %v4213
        %v4422 = vpop.f32.mrf.mxu0
        %v4423 = vadd.f32 %v4137, %v4422
        %v4424 = vpop.f32.mrf.mxu0
        %4425 = vmatprep.mubr.f32.mxu0 0.0
        %4426 = vmatmul.mubr.f32.gmra.mxu0 %v4216
        %v4427 = vpop.f32.mrf.mxu0
        %v4428 = vadd.f32 %v4137, %v4427
        %v4429 = vpop.f32.mrf.mxu0
        %4430 = vmatprep.mubr.f32.mxu0 0.0
        %4431 = vmatmul.mubr.f32.gmra.mxu0 %v4219
        %v4432 = vpop.f32.mrf.mxu0
        %v4433 = vadd.f32 %v4137, %v4432
        %v4434 = vpop.f32.mrf.mxu0
        %4435 = vmatprep.mubr.f32.mxu0 0.0
        %4436 = vmatmul.mubr.f32.gmra.mxu0 %v4222
        %v4437 = vpop.f32.mrf.mxu0
        %v4438 = vadd.f32 %v4137, %v4437
        %v4439 = vpop.f32.mrf.mxu0
        %4440 = vmatprep.mubr.f32.mxu0 0.0
        %4441 = vmatmul.mubr.f32.gmra.mxu0 %v4225
        %v4442 = vpop.f32.mrf.mxu0
        %v4443 = vadd.f32 %v4137, %v4442
        %v4444 = vpop.f32.mrf.mxu0
        %4445 = vmatprep.mubr.f32.mxu0 0.0
        %4446 = vmatmul.mubr.f32.gmra.mxu0 %v4228
        %v4447 = vpop.f32.mrf.mxu0
        %v4448 = vadd.f32 %v4137, %v4447
        %v4449 = vpop.f32.mrf.mxu0
        %4450 = vmatprep.mubr.f32.mxu0 0.0
        %4451 = vmatmul.mubr.f32.gmra.mxu0 %v4231
        %v4452 = vpop.f32.mrf.mxu0
        %v4453 = vadd.f32 %v4137, %v4452
        %v4454 = vpop.f32.mrf.mxu0
        %4455 = vmatprep.mubr.f32.mxu0 0.0
        %4456 = vmatmul.mubr.f32.gmra.mxu0 %v4234
        %v4457 = vpop.f32.mrf.mxu0
        %v4458 = vadd.f32 %v4137, %v4457
        %v4459 = vpop.f32.mrf.mxu0
        %4460 = vdwg.mxu0
        %vm4461 = vcmp.gt.f32.partialorder %v4303, 0.0
        %vm4462 = vcmp.gt.f32.partialorder %v4308, 0.0
        %vm4463 = vcmp.gt.f32.partialorder %v4313, 0.0
        %vm4464 = vcmp.gt.f32.partialorder %v4318, 0.0
        %vm4465 = vcmp.gt.f32.partialorder %v4323, 0.0
        %vm4466 = vcmp.gt.f32.partialorder %v4328, 0.0
        %vm4467 = vcmp.gt.f32.partialorder %v4333, 0.0
        %vm4468 = vcmp.gt.f32.partialorder %v4338, 0.0
        %vm4469 = vcmp.gt.f32.partialorder %v4343, 0.0
        %vm4470 = vcmp.gt.f32.partialorder %v4348, 0.0
        %vm4471 = vcmp.gt.f32.partialorder %v4353, 0.0
        %vm4472 = vcmp.gt.f32.partialorder %v4358, 0.0
        %vm4473 = vcmp.gt.f32.partialorder %v4363, 0.0
        %vm4474 = vcmp.gt.f32.partialorder %v4368, 0.0
        %vm4475 = vcmp.gt.f32.partialorder %v4373, 0.0
        %vm4476 = vcmp.gt.f32.partialorder %v4378, 0.0
        %vm4477 = vcmp.gt.f32.partialorder %v4383, 0.0
        %vm4478 = vcmp.gt.f32.partialorder %v4388, 0.0
        %vm4479 = vcmp.gt.f32.partialorder %v4393, 0.0
        %vm4480 = vcmp.gt.f32.partialorder %v4398, 0.0
        %vm4481 = vcmp.gt.f32.partialorder %v4403, 0.0
        %vm4482 = vcmp.gt.f32.partialorder %v4408, 0.0
        %vm4483 = vcmp.gt.f32.partialorder %v4413, 0.0
        %vm4484 = vcmp.gt.f32.partialorder %v4418, 0.0
        %vm4485 = vcmp.gt.f32.partialorder %v4423, 0.0
        %vm4486 = vcmp.gt.f32.partialorder %v4428, 0.0
        %vm4487 = vcmp.gt.f32.partialorder %v4433, 0.0
        %vm4488 = vcmp.gt.f32.partialorder %v4438, 0.0
        %vm4489 = vcmp.gt.f32.partialorder %v4443, 0.0
        %vm4490 = vcmp.gt.f32.partialorder %v4448, 0.0
        %vm4491 = vcmp.gt.f32.partialorder %v4453, 0.0
        %vm4492 = vcmp.gt.f32.partialorder %v4458, 0.0
        %v4493 = vmul.f32 %v4303, 0.01
        %v4494 = vmul.f32 %v4308, 0.01
        %v4495 = vmul.f32 %v4313, 0.01
        %v4496 = vmul.f32 %v4318, 0.01
        %v4497 = vmul.f32 %v4323, 0.01
        %v4498 = vmul.f32 %v4328, 0.01
        %v4499 = vmul.f32 %v4333, 0.01
        %v4500 = vmul.f32 %v4338, 0.01
        %v4501 = vmul.f32 %v4343, 0.01
        %v4502 = vmul.f32 %v4348, 0.01
        %v4503 = vmul.f32 %v4353, 0.01
        %v4504 = vmul.f32 %v4358, 0.01
        %v4505 = vmul.f32 %v4363, 0.01
        %v4506 = vmul.f32 %v4368, 0.01
        %v4507 = vmul.f32 %v4373, 0.01
        %v4508 = vmul.f32 %v4378, 0.01
        %v4509 = vmul.f32 %v4383, 0.01
        %v4510 = vmul.f32 %v4388, 0.01
        %v4511 = vmul.f32 %v4393, 0.01
        %v4512 = vmul.f32 %v4398, 0.01
        %v4513 = vmul.f32 %v4403, 0.01
        %v4514 = vmul.f32 %v4408, 0.01
        %v4515 = vmul.f32 %v4413, 0.01
        %v4516 = vmul.f32 %v4418, 0.01
        %v4517 = vmul.f32 %v4423, 0.01
        %v4518 = vmul.f32 %v4428, 0.01
        %v4519 = vmul.f32 %v4433, 0.01
        %v4520 = vmul.f32 %v4438, 0.01
        %v4521 = vmul.f32 %v4443, 0.01
        %v4522 = vmul.f32 %v4448, 0.01
        %v4523 = vmul.f32 %v4453, 0.01
        %v4524 = vmul.f32 %v4458, 0.01
        %v4525 = vsel %vm4461, %v4303, %v4493
        %v4526 = vsel %vm4462, %v4308, %v4494
        %v4527 = vsel %vm4463, %v4313, %v4495
        %v4528 = vsel %vm4464, %v4318, %v4496
        %v4529 = vsel %vm4465, %v4323, %v4497
        %v4530 = vsel %vm4466, %v4328, %v4498
        %v4531 = vsel %vm4467, %v4333, %v4499
        %v4532 = vsel %vm4468, %v4338, %v4500
        %v4533 = vsel %vm4469, %v4343, %v4501
        %v4534 = vsel %vm4470, %v4348, %v4502
        %v4535 = vsel %vm4471, %v4353, %v4503
        %v4536 = vsel %vm4472, %v4358, %v4504
        %v4537 = vsel %vm4473, %v4363, %v4505
        %v4538 = vsel %vm4474, %v4368, %v4506
        %v4539 = vsel %vm4475, %v4373, %v4507
        %v4540 = vsel %vm4476, %v4378, %v4508
        %v4541 = vsel %vm4477, %v4383, %v4509
        %v4542 = vsel %vm4478, %v4388, %v4510
        %v4543 = vsel %vm4479, %v4393, %v4511
        %v4544 = vsel %vm4480, %v4398, %v4512
        %v4545 = vsel %vm4481, %v4403, %v4513
        %v4546 = vsel %vm4482, %v4408, %v4514
        %v4547 = vsel %vm4483, %v4413, %v4515
        %v4548 = vsel %vm4484, %v4418, %v4516
        %v4549 = vsel %vm4485, %v4423, %v4517
        %v4550 = vsel %vm4486, %v4428, %v4518
        %v4551 = vsel %vm4487, %v4433, %v4519
        %v4552 = vsel %vm4488, %v4438, %v4520
        %v4553 = vsel %vm4489, %v4443, %v4521
        %v4554 = vsel %vm4490, %v4448, %v4522
        %v4555 = vsel %vm4491, %v4453, %v4523
        %v4556 = vsel %vm4492, %v4458, %v4524
        %4557 = vst.msk [vmem:[%s2517 + $0x1] sm:$0xff] %vm387, %v4525
        %4558 = vst.msk [vmem:[%s2517 + $0x9] sm:$0xff] %vm387, %v4526
        %4559 = vst.msk [vmem:[%s2517 + $0x19] sm:$0xff] %vm387, %v4527
        %4560 = vst.msk [vmem:[%s2517 + $0x21] sm:$0xff] %vm387, %v4528
        %4561 = vst.msk [vmem:[%s2517 + $0x31] sm:$0xff] %vm387, %v4529
        %4562 = vst.msk [vmem:[%s2517 + $0x39] sm:$0xff] %vm387, %v4530
        %4563 = vst.msk [vmem:[%s2517 + $0x49] sm:$0xff] %vm387, %v4531
        %4564 = vst.msk [vmem:[%s2517 + $0x51] sm:$0xff] %vm387, %v4532
        %4565 = vst.msk [vmem:[%s2517 + $0x61] sm:$0xff] %vm387, %v4533
        %4566 = vst.msk [vmem:[%s2517 + $0x69] sm:$0xff] %vm387, %v4534
        %4567 = vst.msk [vmem:[%s2517 + $0x79] sm:$0xff] %vm387, %v4535
        %4568 = vst.msk [vmem:[%s2517 + $0x81] sm:$0xff] %vm387, %v4536
        %4569 = vst.msk [vmem:[%s2517 + $0x91] sm:$0xff] %vm387, %v4537
        %4570 = vst.msk [vmem:[%s2517 + $0x99] sm:$0xff] %vm387, %v4538
        %4571 = vst.msk [vmem:[%s2517 + $0xa9] sm:$0xff] %vm387, %v4539
        %4572 = vst.msk [vmem:[%s2517 + $0xb1] sm:$0xff] %vm387, %v4540
        %4573 = vst.msk [vmem:[%s2517 + $0xc1] sm:$0xff] %vm387, %v4541
        %4574 = vst.msk [vmem:[%s2517 + $0xc9] sm:$0xff] %vm387, %v4542
        %4575 = vst.msk [vmem:[%s2517 + $0xd9] sm:$0xff] %vm387, %v4543
        %4576 = vst.msk [vmem:[%s2517 + $0xe1] sm:$0xff] %vm387, %v4544
        %4577 = vst.msk [vmem:[%s2517 + $0xf1] sm:$0xff] %vm387, %v4545
        %4578 = vst.msk [vmem:[%s2517 + $0xf9] sm:$0xff] %vm387, %v4546
        %4579 = vst.msk [vmem:[%s2517 + $0x109] sm:$0xff] %vm387, %v4547
        %4580 = vst.msk [vmem:[%s2517 + $0x111] sm:$0xff] %vm387, %v4548
        %4581 = vst.msk [vmem:[%s2517 + $0x121] sm:$0xff] %vm387, %v4549
        %4582 = vst.msk [vmem:[%s2517 + $0x129] sm:$0xff] %vm387, %v4550
        %4583 = vst.msk [vmem:[%s2517 + $0x139] sm:$0xff] %vm387, %v4551
        %4584 = vst.msk [vmem:[%s2517 + $0x141] sm:$0xff] %vm387, %v4552
        %4585 = vst.msk [vmem:[%s2517 + $0x151] sm:$0xff] %vm387, %v4553
        %4586 = vst.msk [vmem:[%s2517 + $0x159] sm:$0xff] %vm387, %v4554
        %4587 = vst.msk [vmem:[%s2517 + $0x169] sm:$0xff] %vm387, %v4555
        %4588 = vst.msk [vmem:[%s2517 + $0x171] sm:$0xff] %vm387, %v4556
        %v4589 = vld [vmem:[#allocation3] ss:$2 sm:$0xff]
        %s4590 = scalar_lea.vmem [#allocation3], 48
        %v4591 = vld [vmem:[%s4590] ss:$2 sm:$0xff]
        %s4592 = scalar_lea.vmem [#allocation3], 96
        %v4593 = vld [vmem:[%s4592] ss:$2 sm:$0xff]
        %s4594 = scalar_lea.vmem [#allocation3], 144
        %v4595 = vld [vmem:[%s4594] ss:$2 sm:$0xff]
        %s4596 = scalar_lea.vmem [#allocation3], 192
        %v4597 = vld [vmem:[%s4596] ss:$2 sm:$0xff]
        %s4598 = scalar_lea.vmem [#allocation3], 240
        %v4599 = vld [vmem:[%s4598] ss:$2 sm:$0xff]
        %s4600 = scalar_lea.vmem [#allocation3], 288
        %v4601 = vld [vmem:[%s4600] ss:$2 sm:$0xff]
        %s4602 = scalar_lea.vmem [#allocation3], 336
        %v4603 = vld [vmem:[%s4602] ss:$2 sm:$0xff]
        %s4604 = scalar_lea.vmem [#allocation3], 1
        %v4605 = vld [vmem:[%s4604] ss:$2 sm:$0xff]
        %s4606 = scalar_lea.vmem [#allocation3], 49
        %v4607 = vld [vmem:[%s4606] ss:$2 sm:$0xff]
        %s4608 = scalar_lea.vmem [#allocation3], 97
        %v4609 = vld [vmem:[%s4608] ss:$2 sm:$0xff]
        %s4610 = scalar_lea.vmem [#allocation3], 145
        %v4611 = vld [vmem:[%s4610] ss:$2 sm:$0xff]
        %s4612 = scalar_lea.vmem [#allocation3], 193
        %v4613 = vld [vmem:[%s4612] ss:$2 sm:$0xff]
        %s4614 = scalar_lea.vmem [#allocation3], 241
        %v4615 = vld [vmem:[%s4614] ss:$2 sm:$0xff]
        %s4616 = scalar_lea.vmem [#allocation3], 289
        %v4617 = vld [vmem:[%s4616] ss:$2 sm:$0xff]
        %s4618 = scalar_lea.vmem [#allocation3], 337
        %v4619 = vld [vmem:[%s4618] ss:$2 sm:$0xff]
        %s4620 = scalar_lea.vmem [#allocation3], 2
        %v4621 = vld [vmem:[%s4620] ss:$2 sm:$0xff]
        %s4622 = scalar_lea.vmem [#allocation3], 50
        %v4623 = vld [vmem:[%s4622] ss:$2 sm:$0xff]
        %s4624 = scalar_lea.vmem [#allocation3], 98
        %v4625 = vld [vmem:[%s4624] ss:$2 sm:$0xff]
        %s4626 = scalar_lea.vmem [#allocation3], 146
        %v4627 = vld [vmem:[%s4626] ss:$2 sm:$0xff]
        %s4628 = scalar_lea.vmem [#allocation3], 194
        %v4629 = vld [vmem:[%s4628] ss:$2 sm:$0xff]
        %s4630 = scalar_lea.vmem [#allocation3], 242
        %v4631 = vld [vmem:[%s4630] ss:$2 sm:$0xff]
        %s4632 = scalar_lea.vmem [#allocation3], 290
        %v4633 = vld [vmem:[%s4632] ss:$2 sm:$0xff]
        %s4634 = scalar_lea.vmem [#allocation3], 338
        %v4635 = vld [vmem:[%s4634] ss:$2 sm:$0xff]
        %v4636 = vld [vmem:[%s2517] ss:$2 sm:$0xff]
        %s4637 = scalar_lea.vmem %s2517, 48 [#allocation3]
        %v4638 = vld [vmem:[%s4637] ss:$2 sm:$0xff]
        %s4639 = scalar_lea.vmem %s2517, 96 [#allocation3]
        %v4640 = vld [vmem:[%s4639] ss:$2 sm:$0xff]
        %s4641 = scalar_lea.vmem %s2517, 144 [#allocation3]
        %v4642 = vld [vmem:[%s4641] ss:$2 sm:$0xff]
        %s4643 = scalar_lea.vmem %s2517, 192 [#allocation3]
        %v4644 = vld [vmem:[%s4643] ss:$2 sm:$0xff]
        %s4645 = scalar_lea.vmem %s2517, 240 [#allocation3]
        %v4646 = vld [vmem:[%s4645] ss:$2 sm:$0xff]
        %s4647 = scalar_lea.vmem %s2517, 288 [#allocation3]
        %v4648 = vld [vmem:[%s4647] ss:$2 sm:$0xff]
        %s4649 = scalar_lea.vmem %s2517, 336 [#allocation3]
        %v4650 = vld [vmem:[%s4649] ss:$2 sm:$0xff]
        %s4651 = scalar_lea.vmem %s2517, 1 [#allocation3]
        %v4652 = vld [vmem:[%s4651] ss:$2 sm:$0xff]
        %s4653 = scalar_lea.vmem %s2517, 49 [#allocation3]
        %v4654 = vld [vmem:[%s4653] ss:$2 sm:$0xff]
        %s4655 = scalar_lea.vmem %s2517, 97 [#allocation3]
        %v4656 = vld [vmem:[%s4655] ss:$2 sm:$0xff]
        %s4657 = scalar_lea.vmem %s2517, 145 [#allocation3]
        %v4658 = vld [vmem:[%s4657] ss:$2 sm:$0xff]
        %s4659 = scalar_lea.vmem %s2517, 193 [#allocation3]
        %v4660 = vld [vmem:[%s4659] ss:$2 sm:$0xff]
        %s4661 = scalar_lea.vmem %s2517, 241 [#allocation3]
        %v4662 = vld [vmem:[%s4661] ss:$2 sm:$0xff]
        %s4663 = scalar_lea.vmem %s2517, 289 [#allocation3]
        %v4664 = vld [vmem:[%s4663] ss:$2 sm:$0xff]
        %s4665 = scalar_lea.vmem %s2517, 337 [#allocation3]
        %v4666 = vld [vmem:[%s4665] ss:$2 sm:$0xff]
        %s4667 = scalar_lea.vmem %s2517, 2 [#allocation3]
        %v4668 = vld [vmem:[%s4667] ss:$2 sm:$0xff]
        %s4669 = scalar_lea.vmem %s2517, 50 [#allocation3]
        %v4670 = vld [vmem:[%s4669] ss:$2 sm:$0xff]
        %s4671 = scalar_lea.vmem %s2517, 98 [#allocation3]
        %v4672 = vld [vmem:[%s4671] ss:$2 sm:$0xff]
        %s4673 = scalar_lea.vmem %s2517, 146 [#allocation3]
        %v4674 = vld [vmem:[%s4673] ss:$2 sm:$0xff]
        %s4675 = scalar_lea.vmem %s2517, 194 [#allocation3]
        %v4676 = vld [vmem:[%s4675] ss:$2 sm:$0xff]
        %s4677 = scalar_lea.vmem %s2517, 242 [#allocation3]
        %v4678 = vld [vmem:[%s4677] ss:$2 sm:$0xff]
        %s4679 = scalar_lea.vmem %s2517, 290 [#allocation3]
        %v4680 = vld [vmem:[%s4679] ss:$2 sm:$0xff]
        %s4681 = scalar_lea.vmem %s2517, 338 [#allocation3]
        %v4682 = vld [vmem:[%s4681] ss:$2 sm:$0xff]
        %v4683 = vld [vmem:[%s2742] ss:$2 sm:$0xff]
        %s4684 = scalar_lea.vmem %s2742, 48 [#allocation3]
        %v4685 = vld [vmem:[%s4684] ss:$2 sm:$0xff]
        %s4686 = scalar_lea.vmem %s2742, 96 [#allocation3]
        %v4687 = vld [vmem:[%s4686] ss:$2 sm:$0xff]
        %s4688 = scalar_lea.vmem %s2742, 144 [#allocation3]
        %v4689 = vld [vmem:[%s4688] ss:$2 sm:$0xff]
        %s4690 = scalar_lea.vmem %s2742, 192 [#allocation3]
        %v4691 = vld [vmem:[%s4690] ss:$2 sm:$0xff]
        %s4692 = scalar_lea.vmem %s2742, 240 [#allocation3]
        %v4693 = vld [vmem:[%s4692] ss:$2 sm:$0xff]
        %s4694 = scalar_lea.vmem %s2742, 288 [#allocation3]
        %v4695 = vld [vmem:[%s4694] ss:$2 sm:$0xff]
        %s4696 = scalar_lea.vmem %s2742, 336 [#allocation3]
        %v4697 = vld [vmem:[%s4696] ss:$2 sm:$0xff]
        %s4698 = scalar_lea.vmem %s2742, 1 [#allocation3]
        %v4699 = vld [vmem:[%s4698] ss:$2 sm:$0xff]
        %s4700 = scalar_lea.vmem %s2742, 49 [#allocation3]
        %v4701 = vld [vmem:[%s4700] ss:$2 sm:$0xff]
        %s4702 = scalar_lea.vmem %s2742, 97 [#allocation3]
        %v4703 = vld [vmem:[%s4702] ss:$2 sm:$0xff]
        %s4704 = scalar_lea.vmem %s2742, 145 [#allocation3]
        %v4705 = vld [vmem:[%s4704] ss:$2 sm:$0xff]
        %s4706 = scalar_lea.vmem %s2742, 193 [#allocation3]
        %v4707 = vld [vmem:[%s4706] ss:$2 sm:$0xff]
        %s4708 = scalar_lea.vmem %s2742, 241 [#allocation3]
        %v4709 = vld [vmem:[%s4708] ss:$2 sm:$0xff]
        %s4710 = scalar_lea.vmem %s2742, 289 [#allocation3]
        %v4711 = vld [vmem:[%s4710] ss:$2 sm:$0xff]
        %s4712 = scalar_lea.vmem %s2742, 337 [#allocation3]
        %v4713 = vld [vmem:[%s4712] ss:$2 sm:$0xff]
        %s4714 = scalar_lea.vmem %s2742, 2 [#allocation3]
        %v4715 = vld [vmem:[%s4714] ss:$2 sm:$0xff]
        %s4716 = scalar_lea.vmem %s2742, 50 [#allocation3]
        %v4717 = vld [vmem:[%s4716] ss:$2 sm:$0xff]
        %s4718 = scalar_lea.vmem %s2742, 98 [#allocation3]
        %v4719 = vld [vmem:[%s4718] ss:$2 sm:$0xff]
        %s4720 = scalar_lea.vmem %s2742, 146 [#allocation3]
        %v4721 = vld [vmem:[%s4720] ss:$2 sm:$0xff]
        %s4722 = scalar_lea.vmem %s2742, 194 [#allocation3]
        %v4723 = vld [vmem:[%s4722] ss:$2 sm:$0xff]
        %s4724 = scalar_lea.vmem %s2742, 242 [#allocation3]
        %v4725 = vld [vmem:[%s4724] ss:$2 sm:$0xff]
        %s4726 = scalar_lea.vmem %s2742, 290 [#allocation3]
        %v4727 = vld [vmem:[%s4726] ss:$2 sm:$0xff]
        %s4728 = scalar_lea.vmem %s2742, 338 [#allocation3]
        %v4729 = vld [vmem:[%s4728] ss:$2 sm:$0xff]
        %4738 = vrot.lane.b32.xlu0 %v4605, 8
        %v4739 = vpop.permute.xlu0 %4738
        %4740 = vrot.lane.b32.xlu0 %v4607, 8
        %v4741 = vpop.permute.xlu0 %4740
        %4742 = vrot.lane.b32.xlu0 %v4609, 8
        %v4743 = vpop.permute.xlu0 %4742
        %4744 = vrot.lane.b32.xlu0 %v4611, 8
        %v4745 = vpop.permute.xlu0 %4744
        %4746 = vrot.lane.b32.xlu0 %v4613, 8
        %v4747 = vpop.permute.xlu0 %4746
        %4748 = vrot.lane.b32.xlu0 %v4615, 8
        %v4749 = vpop.permute.xlu0 %4748
        %4750 = vrot.lane.b32.xlu0 %v4617, 8
        %v4751 = vpop.permute.xlu0 %4750
        %4752 = vrot.lane.b32.xlu0 %v4619, 8
        %v4753 = vpop.permute.xlu0 %4752
        %4770 = vrot.lane.b32.xlu0 %v4621, 16
        %v4771 = vpop.permute.xlu0 %4770
        %4772 = vrot.lane.b32.xlu0 %v4623, 16
        %v4773 = vpop.permute.xlu0 %4772
        %4774 = vrot.lane.b32.xlu0 %v4625, 16
        %v4775 = vpop.permute.xlu0 %4774
        %4776 = vrot.lane.b32.xlu0 %v4627, 16
        %v4777 = vpop.permute.xlu0 %4776
        %4778 = vrot.lane.b32.xlu0 %v4629, 16
        %v4779 = vpop.permute.xlu0 %4778
        %4780 = vrot.lane.b32.xlu0 %v4631, 16
        %v4781 = vpop.permute.xlu0 %4780
        %4782 = vrot.lane.b32.xlu0 %v4633, 16
        %v4783 = vpop.permute.xlu0 %4782
        %4784 = vrot.lane.b32.xlu0 %v4635, 16
        %v4785 = vpop.permute.xlu0 %4784
        %4802 = vrot.lane.b32.xlu0 %v4636, 24
        %v4803 = vpop.permute.xlu0 %4802
        %4804 = vrot.lane.b32.xlu0 %v4638, 24
        %v4805 = vpop.permute.xlu0 %4804
        %4806 = vrot.lane.b32.xlu0 %v4640, 24
        %v4807 = vpop.permute.xlu0 %4806
        %4808 = vrot.lane.b32.xlu0 %v4642, 24
        %v4809 = vpop.permute.xlu0 %4808
        %4810 = vrot.lane.b32.xlu0 %v4644, 24
        %v4811 = vpop.permute.xlu0 %4810
        %4812 = vrot.lane.b32.xlu0 %v4646, 24
        %v4813 = vpop.permute.xlu0 %4812
        %4814 = vrot.lane.b32.xlu0 %v4648, 24
        %v4815 = vpop.permute.xlu0 %4814
        %4816 = vrot.lane.b32.xlu0 %v4650, 24
        %v4817 = vpop.permute.xlu0 %4816
        %4834 = vrot.lane.b32.xlu0 %v4652, 32
        %v4835 = vpop.permute.xlu0 %4834
        %4836 = vrot.lane.b32.xlu0 %v4654, 32
        %v4837 = vpop.permute.xlu0 %4836
        %4838 = vrot.lane.b32.xlu0 %v4656, 32
        %v4839 = vpop.permute.xlu0 %4838
        %4840 = vrot.lane.b32.xlu0 %v4658, 32
        %v4841 = vpop.permute.xlu0 %4840
        %4842 = vrot.lane.b32.xlu0 %v4660, 32
        %v4843 = vpop.permute.xlu0 %4842
        %4844 = vrot.lane.b32.xlu0 %v4662, 32
        %v4845 = vpop.permute.xlu0 %4844
        %4846 = vrot.lane.b32.xlu0 %v4664, 32
        %v4847 = vpop.permute.xlu0 %4846
        %4848 = vrot.lane.b32.xlu0 %v4666, 32
        %v4849 = vpop.permute.xlu0 %4848
        %4866 = vrot.lane.b32.xlu0 %v4668, 40
        %v4867 = vpop.permute.xlu0 %4866
        %4868 = vrot.lane.b32.xlu0 %v4670, 40
        %v4869 = vpop.permute.xlu0 %4868
        %4870 = vrot.lane.b32.xlu0 %v4672, 40
        %v4871 = vpop.permute.xlu0 %4870
        %4872 = vrot.lane.b32.xlu0 %v4674, 40
        %v4873 = vpop.permute.xlu0 %4872
        %4874 = vrot.lane.b32.xlu0 %v4676, 40
        %v4875 = vpop.permute.xlu0 %4874
        %4876 = vrot.lane.b32.xlu0 %v4678, 40
        %v4877 = vpop.permute.xlu0 %4876
        %4878 = vrot.lane.b32.xlu0 %v4680, 40
        %v4879 = vpop.permute.xlu0 %4878
        %4880 = vrot.lane.b32.xlu0 %v4682, 40
        %v4881 = vpop.permute.xlu0 %4880
        %4898 = vrot.lane.b32.xlu0 %v4683, 48
        %v4899 = vpop.permute.xlu0 %4898
        %4900 = vrot.lane.b32.xlu0 %v4685, 48
        %v4901 = vpop.permute.xlu0 %4900
        %4902 = vrot.lane.b32.xlu0 %v4687, 48
        %v4903 = vpop.permute.xlu0 %4902
        %4904 = vrot.lane.b32.xlu0 %v4689, 48
        %v4905 = vpop.permute.xlu0 %4904
        %4906 = vrot.lane.b32.xlu0 %v4691, 48
        %v4907 = vpop.permute.xlu0 %4906
        %4908 = vrot.lane.b32.xlu0 %v4693, 48
        %v4909 = vpop.permute.xlu0 %4908
        %4910 = vrot.lane.b32.xlu0 %v4695, 48
        %v4911 = vpop.permute.xlu0 %4910
        %4912 = vrot.lane.b32.xlu0 %v4697, 48
        %v4913 = vpop.permute.xlu0 %4912
        %4930 = vrot.lane.b32.xlu0 %v4699, 56
        %v4931 = vpop.permute.xlu0 %4930
        %4932 = vrot.lane.b32.xlu0 %v4701, 56
        %v4933 = vpop.permute.xlu0 %4932
        %4934 = vrot.lane.b32.xlu0 %v4703, 56
        %v4935 = vpop.permute.xlu0 %4934
        %4936 = vrot.lane.b32.xlu0 %v4705, 56
        %v4937 = vpop.permute.xlu0 %4936
        %4938 = vrot.lane.b32.xlu0 %v4707, 56
        %v4939 = vpop.permute.xlu0 %4938
        %4940 = vrot.lane.b32.xlu0 %v4709, 56
        %v4941 = vpop.permute.xlu0 %4940
        %4942 = vrot.lane.b32.xlu0 %v4711, 56
        %v4943 = vpop.permute.xlu0 %4942
        %4944 = vrot.lane.b32.xlu0 %v4713, 56
        %v4945 = vpop.permute.xlu0 %4944
        %4962 = vrot.lane.b32.xlu0 %v4715, 64
        %v4963 = vpop.permute.xlu0 %4962
        %4964 = vrot.lane.b32.xlu0 %v4717, 64
        %v4965 = vpop.permute.xlu0 %4964
        %4966 = vrot.lane.b32.xlu0 %v4719, 64
        %v4967 = vpop.permute.xlu0 %4966
        %4968 = vrot.lane.b32.xlu0 %v4721, 64
        %v4969 = vpop.permute.xlu0 %4968
        %4970 = vrot.lane.b32.xlu0 %v4723, 64
        %v4971 = vpop.permute.xlu0 %4970
        %4972 = vrot.lane.b32.xlu0 %v4725, 64
        %v4973 = vpop.permute.xlu0 %4972
        %4974 = vrot.lane.b32.xlu0 %v4727, 64
        %v4975 = vpop.permute.xlu0 %4974
        %4976 = vrot.lane.b32.xlu0 %v4729, 64
        %v4977 = vpop.permute.xlu0 %4976
        %v4986 = vsel %vm387, %v4589, %v4739
        %v4987 = vsel %vm387, %v4591, %v4741
        %v4988 = vsel %vm387, %v4593, %v4743
        %v4989 = vsel %vm387, %v4595, %v4745
        %v4990 = vsel %vm387, %v4597, %v4747
        %v4991 = vsel %vm387, %v4599, %v4749
        %v4992 = vsel %vm387, %v4601, %v4751
        %v4993 = vsel %vm387, %v4603, %v4753
        %v4994 = vsel %vm1918, %v4986, %v4771
        %v4995 = vsel %vm1918, %v4987, %v4773
        %v4996 = vsel %vm1918, %v4988, %v4775
        %v4997 = vsel %vm1918, %v4989, %v4777
        %v4998 = vsel %vm1918, %v4990, %v4779
        %v4999 = vsel %vm1918, %v4991, %v4781
        %v5000 = vsel %vm1918, %v4992, %v4783
        %v5001 = vsel %vm1918, %v4993, %v4785
        %v5002 = vsel %vm1984, %v4994, %v4803
        %v5003 = vsel %vm1984, %v4995, %v4805
        %v5004 = vsel %vm1984, %v4996, %v4807
        %v5005 = vsel %vm1984, %v4997, %v4809
        %v5006 = vsel %vm1984, %v4998, %v4811
        %v5007 = vsel %vm1984, %v4999, %v4813
        %v5008 = vsel %vm1984, %v5000, %v4815
        %v5009 = vsel %vm1984, %v5001, %v4817
        %v5010 = vsel %vm2050, %v5002, %v4835
        %v5011 = vsel %vm2050, %v5003, %v4837
        %v5012 = vsel %vm2050, %v5004, %v4839
        %v5013 = vsel %vm2050, %v5005, %v4841
        %v5014 = vsel %vm2050, %v5006, %v4843
        %v5015 = vsel %vm2050, %v5007, %v4845
        %v5016 = vsel %vm2050, %v5008, %v4847
        %v5017 = vsel %vm2050, %v5009, %v4849
        %v5018 = vsel %vm3991, %v5010, %v4867
        %v5019 = vsel %vm3991, %v5011, %v4869
        %v5020 = vsel %vm3991, %v5012, %v4871
        %v5021 = vsel %vm3991, %v5013, %v4873
        %v5022 = vsel %vm3991, %v5014, %v4875
        %v5023 = vsel %vm3991, %v5015, %v4877
        %v5024 = vsel %vm3991, %v5016, %v4879
        %v5025 = vsel %vm3991, %v5017, %v4881
        %v5026 = vsel %vm4024, %v5018, %v4899
        %v5027 = vsel %vm4024, %v5019, %v4901
        %v5028 = vsel %vm4024, %v5020, %v4903
        %v5029 = vsel %vm4024, %v5021, %v4905
        %v5030 = vsel %vm4024, %v5022, %v4907
        %v5031 = vsel %vm4024, %v5023, %v4909
        %v5032 = vsel %vm4024, %v5024, %v4911
        %v5033 = vsel %vm4024, %v5025, %v4913
        %v5034 = vsel %vm4057, %v5026, %v4931
        %v5035 = vsel %vm4057, %v5027, %v4933
        %v5036 = vsel %vm4057, %v5028, %v4935
        %v5037 = vsel %vm4057, %v5029, %v4937
        %v5038 = vsel %vm4057, %v5030, %v4939
        %v5039 = vsel %vm4057, %v5031, %v4941
        %v5040 = vsel %vm4057, %v5032, %v4943
        %v5041 = vsel %vm4057, %v5033, %v4945
        %v5042 = vsel %vm4090, %v5034, %v4963
        %v5043 = vsel %vm4090, %v5035, %v4965
        %v5044 = vsel %vm4090, %v5036, %v4967
        %v5045 = vsel %vm4090, %v5037, %v4969
        %v5046 = vsel %vm4090, %v5038, %v4971
        %v5047 = vsel %vm4090, %v5039, %v4973
        %v5048 = vsel %vm4090, %v5040, %v4975
        %v5049 = vsel %vm4090, %v5041, %v4977
        %v5050 = vld [vmem:[%s5] sm:$0xff]
        %v5051 = vld [vmem:[%s5 + $0x8] sm:$0xff]
        %v5052 = vld [vmem:[%s5 + $0x10] sm:$0xff]
        %v5053 = vld [vmem:[%s5 + $0x18] sm:$0xff]
        %v5054 = vld [vmem:[%s5 + $0x20] sm:$0xff]
        %v5055 = vld [vmem:[%s5 + $0x28] sm:$0xff]
        %v5056 = vld [vmem:[%s5 + $0x30] sm:$0xff]
        %v5057 = vld [vmem:[%s5 + $0x38] sm:$0xff]
        %v5058 = vld [vmem:[%s5 + $0x40] sm:$0xff]
        %v5059 = vld [vmem:[%s6] sm:$0x1]
        %v5061 = vlaneseq
        %v5062 = vshrl.u32 %v5061, 7
        %v5063 = vsub.s32 0, %v5062
        %v5064 = vrot.slane %v5059, %v5063
        %v5067 = vsel %vm4139, %v5042, 0
        %v5070 = vsel %vm4139, %v5043, 0
        %v5073 = vsel %vm4139, %v5044, 0
        %v5076 = vsel %vm4139, %v5045, 0
        %v5079 = vsel %vm4139, %v5046, 0
        %v5082 = vsel %vm4139, %v5047, 0
        %v5085 = vsel %vm4139, %v5048, 0
        %v5088 = vsel %vm4139, %v5049, 0
        %5090 = vmatprep.subr.mxu0 0.0
        %5091 = vmatpush1.msra.mxu0 0.0
        %5092 = vmatprep.subr.mxu0 0.0
        %5093 = vmatpush1.msra.mxu0 0.0
        %5094 = vmatprep.subr.mxu0 0.0
        %5095 = vmatpush1.msra.mxu0 0.0
        %5096 = vmatprep.subr.mxu0 0.0
        %5097 = vmatpush1.msra.mxu0 0.0
        %5098 = vmatprep.subr.mxu0 0.0
        %5099 = vmatpush1.msra.mxu0 0.0
        %5100 = vmatprep.subr.mxu0 0.0
        %5101 = vmatpush1.msra.mxu0 0.0
        %5102 = vmatprep.subr.mxu0 0.0
        %5103 = vmatpush1.msra.mxu0 0.0
        %5104 = vmatprep.subr.mxu0 0.0
        %5105 = vmatpush1.msra.mxu0 %v5058
        %5106 = vmatprep.subr.mxu0 0.0
        %5107 = vmatpush1.msra.mxu0 %v5057
        %5108 = vmatprep.subr.mxu0 0.0
        %5109 = vmatpush1.msra.mxu0 %v5056
        %5110 = vmatprep.subr.mxu0 0.0
        %5111 = vmatpush1.msra.mxu0 %v5055
        %5112 = vmatprep.subr.mxu0 0.0
        %5113 = vmatpush1.msra.mxu0 %v5054
        %5114 = vmatprep.subr.mxu0 0.0
        %5115 = vmatpush1.msra.mxu0 %v5053
        %5116 = vmatprep.subr.mxu0 0.0
        %5117 = vmatpush1.msra.mxu0 %v5052
        %5118 = vmatprep.subr.mxu0 0.0
        %5119 = vmatpush1.msra.mxu0 %v5051
        %5120 = vmatprep.subr.mxu0 0.0
        %5121 = vmatpush1.msra.mxu0 %v5050
        %5122 = vmatprep.subr.mxu0 0.0
        %5123 = vmatpush2.msra.mxu0 0.0
        %5124 = vmatprep.subr.mxu0 0.0
        %5125 = vmatpush2.msra.mxu0 0.0
        %5126 = vmatprep.subr.mxu0 0.0
        %5127 = vmatpush2.msra.mxu0 0.0
        %5128 = vmatprep.subr.mxu0 0.0
        %5129 = vmatpush2.msra.mxu0 0.0
        %5130 = vmatprep.subr.mxu0 0.0
        %5131 = vmatpush2.msra.mxu0 0.0
        %5132 = vmatprep.subr.mxu0 0.0
        %5133 = vmatpush2.msra.mxu0 0.0
        %5134 = vmatprep.subr.mxu0 0.0
        %5135 = vmatpush2.msra.mxu0 0.0
        %5136 = vmatprep.subr.mxu0 0.0
        %5137 = vmatpush2.msra.mxu0 0.0
        %5138 = vmatprep.subr.mxu0 0.0
        %5139 = vmatpush2.msra.mxu0 0.0
        %5140 = vmatprep.subr.mxu0 0.0
        %5141 = vmatpush2.msra.mxu0 0.0
        %5142 = vmatprep.subr.mxu0 0.0
        %5143 = vmatpush2.msra.mxu0 0.0
        %5144 = vmatprep.subr.mxu0 0.0
        %5145 = vmatpush2.msra.mxu0 0.0
        %5146 = vmatprep.subr.mxu0 0.0
        %5147 = vmatpush2.msra.mxu0 0.0
        %5148 = vmatprep.subr.mxu0 0.0
        %5149 = vmatpush2.msra.mxu0 0.0
        %5150 = vmatprep.subr.mxu0 0.0
        %5151 = vmatpush2.msra.mxu0 0.0
        %5152 = vmatprep.subr.mxu0 0.0
        %5153 = vmatpush2.msra.mxu0 0.0
        %5154 = vmatprep.mubr.f32.mxu0 0.0
        %5155 = vmatmul.mubr.f32.gmra.mxu0 %v5067
        %v5156 = vpop.f32.mrf.mxu0
        %v5157 = vadd.f32 %v5064, %v5156
        %v5158 = vpop.f32.mrf.mxu0
        %5159 = vmatprep.mubr.f32.mxu0 0.0
        %5160 = vmatmul.mubr.f32.gmra.mxu0 %v5070
        %v5161 = vpop.f32.mrf.mxu0
        %v5162 = vadd.f32 %v5064, %v5161
        %v5163 = vpop.f32.mrf.mxu0
        %5164 = vmatprep.mubr.f32.mxu0 0.0
        %5165 = vmatmul.mubr.f32.gmra.mxu0 %v5073
        %v5166 = vpop.f32.mrf.mxu0
        %v5167 = vadd.f32 %v5064, %v5166
        %v5168 = vpop.f32.mrf.mxu0
        %5169 = vmatprep.mubr.f32.mxu0 0.0
        %5170 = vmatmul.mubr.f32.gmra.mxu0 %v5076
        %v5171 = vpop.f32.mrf.mxu0
        %v5172 = vadd.f32 %v5064, %v5171
        %v5173 = vpop.f32.mrf.mxu0
        %5174 = vmatprep.mubr.f32.mxu0 0.0
        %5175 = vmatmul.mubr.f32.gmra.mxu0 %v5079
        %v5176 = vpop.f32.mrf.mxu0
        %v5177 = vadd.f32 %v5064, %v5176
        %v5178 = vpop.f32.mrf.mxu0
        %5179 = vmatprep.mubr.f32.mxu0 0.0
        %5180 = vmatmul.mubr.f32.gmra.mxu0 %v5082
        %v5181 = vpop.f32.mrf.mxu0
        %v5182 = vadd.f32 %v5064, %v5181
        %v5183 = vpop.f32.mrf.mxu0
        %5184 = vmatprep.mubr.f32.mxu0 0.0
        %5185 = vmatmul.mubr.f32.gmra.mxu0 %v5085
        %v5186 = vpop.f32.mrf.mxu0
        %v5187 = vadd.f32 %v5064, %v5186
        %v5188 = vpop.f32.mrf.mxu0
        %5189 = vmatprep.mubr.f32.mxu0 0.0
        %5190 = vmatmul.mubr.f32.gmra.mxu0 %v5088
        %v5191 = vpop.f32.mrf.mxu0
        %v5192 = vadd.f32 %v5064, %v5191
        %v5193 = vpop.f32.mrf.mxu0
        %5194 = vdwg.mxu0
        %vm5195 = vcmp.gt.f32.partialorder %v5157, 0.0
        %vm5196 = vcmp.gt.f32.partialorder %v5162, 0.0
        %vm5197 = vcmp.gt.f32.partialorder %v5167, 0.0
        %vm5198 = vcmp.gt.f32.partialorder %v5172, 0.0
        %vm5199 = vcmp.gt.f32.partialorder %v5177, 0.0
        %vm5200 = vcmp.gt.f32.partialorder %v5182, 0.0
        %vm5201 = vcmp.gt.f32.partialorder %v5187, 0.0
        %vm5202 = vcmp.gt.f32.partialorder %v5192, 0.0
        %v5203 = vmul.f32 %v5157, 0.01
        %v5204 = vmul.f32 %v5162, 0.01
        %v5205 = vmul.f32 %v5167, 0.01
        %v5206 = vmul.f32 %v5172, 0.01
        %v5207 = vmul.f32 %v5177, 0.01
        %v5208 = vmul.f32 %v5182, 0.01
        %v5209 = vmul.f32 %v5187, 0.01
        %v5210 = vmul.f32 %v5192, 0.01
        %v5211 = vsel %vm5195, %v5157, %v5203
        %v5212 = vsel %vm5196, %v5162, %v5204
        %v5213 = vsel %vm5197, %v5167, %v5205
        %v5214 = vsel %vm5198, %v5172, %v5206
        %v5215 = vsel %vm5199, %v5177, %v5207
        %v5216 = vsel %vm5200, %v5182, %v5208
        %v5217 = vsel %vm5201, %v5187, %v5209
        %v5218 = vsel %vm5202, %v5192, %v5210
        %s5219 = scalar_lea.vmem %s475, 1 [#allocation2]
        %v5220 = vld [vmem:[%s5219] ss:$2 sm:$0xff]
        %s5221 = scalar_lea.vmem %s475, 49 [#allocation2]
        %v5222 = vld [vmem:[%s5221] ss:$2 sm:$0xff]
        %s5223 = scalar_lea.vmem %s475, 97 [#allocation2]
        %v5224 = vld [vmem:[%s5223] ss:$2 sm:$0xff]
        %s5225 = scalar_lea.vmem %s475, 145 [#allocation2]
        %v5226 = vld [vmem:[%s5225] ss:$2 sm:$0xff]
        %s5227 = scalar_lea.vmem %s475, 193 [#allocation2]
        %v5228 = vld [vmem:[%s5227] ss:$2 sm:$0xff]
        %s5229 = scalar_lea.vmem %s475, 241 [#allocation2]
        %v5230 = vld [vmem:[%s5229] ss:$2 sm:$0xff]
        %s5231 = scalar_lea.vmem %s475, 289 [#allocation2]
        %v5232 = vld [vmem:[%s5231] ss:$2 sm:$0xff]
        %s5233 = scalar_lea.vmem %s475, 337 [#allocation2]
        %v5234 = vld [vmem:[%s5233] ss:$2 sm:$0xff]
        %v5235 = vld [vmem:[%s7] sm:$0xf]
        %v5236 = vld [vmem:[%s8] sm:$0x1]
        %v5238 = vlaneseq
        %v5239 = vshrl.u32 %v5238, 7
        %v5240 = vsub.s32 0, %v5239
        %v5241 = vrot.slane %v5236, %v5240
        %v5244 = vsel %vm331, %v5220, 0
        %v5247 = vsel %vm331, %v5222, 0
        %v5250 = vsel %vm331, %v5224, 0
        %v5253 = vsel %vm331, %v5226, 0
        %v5256 = vsel %vm331, %v5228, 0
        %v5259 = vsel %vm331, %v5230, 0
        %v5262 = vsel %vm331, %v5232, 0
        %v5265 = vsel %vm331, %v5234, 0
        %v5268 = vsel %vm2192, %v5235, 0
        %5270 = vmatprep.subr.mxu0 0.0
        %5271 = vmatpush1.msra.mxu0 0.0
        %5272 = vmatprep.subr.mxu0 0.0
        %5273 = vmatpush1.msra.mxu0 0.0
        %5274 = vmatprep.subr.mxu0 0.0
        %5275 = vmatpush1.msra.mxu0 0.0
        %5276 = vmatprep.subr.mxu0 0.0
        %5277 = vmatpush1.msra.mxu0 0.0
        %5278 = vmatprep.subr.mxu0 0.0
        %5279 = vmatpush1.msra.mxu0 0.0
        %5280 = vmatprep.subr.mxu0 0.0
        %5281 = vmatpush1.msra.mxu0 0.0
        %5282 = vmatprep.subr.mxu0 0.0
        %5283 = vmatpush1.msra.mxu0 0.0
        %5284 = vmatprep.subr.mxu0 0.0
        %5285 = vmatpush1.msra.mxu0 0.0
        %5286 = vmatprep.subr.mxu0 0.0
        %5287 = vmatpush1.msra.mxu0 0.0
        %5288 = vmatprep.subr.mxu0 0.0
        %5289 = vmatpush1.msra.mxu0 0.0
        %5290 = vmatprep.subr.mxu0 0.0
        %5291 = vmatpush1.msra.mxu0 0.0
        %5292 = vmatprep.subr.mxu0 0.0
        %5293 = vmatpush1.msra.mxu0 0.0
        %5294 = vmatprep.subr.mxu0 0.0
        %5295 = vmatpush1.msra.mxu0 0.0
        %5296 = vmatprep.subr.mxu0 0.0
        %5297 = vmatpush1.msra.mxu0 0.0
        %5298 = vmatprep.subr.mxu0 0.0
        %5299 = vmatpush1.msra.mxu0 0.0
        %5300 = vmatprep.subr.mxu0 0.0
        %5301 = vmatpush1.msra.mxu0 %v5268
        %5302 = vmatprep.subr.mxu0 0.0
        %5303 = vmatpush2.msra.mxu0 0.0
        %5304 = vmatprep.subr.mxu0 0.0
        %5305 = vmatpush2.msra.mxu0 0.0
        %5306 = vmatprep.subr.mxu0 0.0
        %5307 = vmatpush2.msra.mxu0 0.0
        %5308 = vmatprep.subr.mxu0 0.0
        %5309 = vmatpush2.msra.mxu0 0.0
        %5310 = vmatprep.subr.mxu0 0.0
        %5311 = vmatpush2.msra.mxu0 0.0
        %5312 = vmatprep.subr.mxu0 0.0
        %5313 = vmatpush2.msra.mxu0 0.0
        %5314 = vmatprep.subr.mxu0 0.0
        %5315 = vmatpush2.msra.mxu0 0.0
        %5316 = vmatprep.subr.mxu0 0.0
        %5317 = vmatpush2.msra.mxu0 0.0
        %5318 = vmatprep.subr.mxu0 0.0
        %5319 = vmatpush2.msra.mxu0 0.0
        %5320 = vmatprep.subr.mxu0 0.0
        %5321 = vmatpush2.msra.mxu0 0.0
        %5322 = vmatprep.subr.mxu0 0.0
        %5323 = vmatpush2.msra.mxu0 0.0
        %5324 = vmatprep.subr.mxu0 0.0
        %5325 = vmatpush2.msra.mxu0 0.0
        %5326 = vmatprep.subr.mxu0 0.0
        %5327 = vmatpush2.msra.mxu0 0.0
        %5328 = vmatprep.subr.mxu0 0.0
        %5329 = vmatpush2.msra.mxu0 0.0
        %5330 = vmatprep.subr.mxu0 0.0
        %5331 = vmatpush2.msra.mxu0 0.0
        %5332 = vmatprep.subr.mxu0 0.0
        %5333 = vmatpush2.msra.mxu0 0.0
        %5334 = vmatprep.mubr.f32.mxu0 0.0
        %5335 = vmatmul.mubr.f32.gmra.mxu0 %v5244
        %v5336 = vpop.f32.mrf.mxu0
        %v5337 = vadd.f32 %v5241, %v5336
        %v5338 = vpop.f32.mrf.mxu0
        %5339 = vmatprep.mubr.f32.mxu0 0.0
        %5340 = vmatmul.mubr.f32.gmra.mxu0 %v5247
        %v5341 = vpop.f32.mrf.mxu0
        %v5342 = vadd.f32 %v5241, %v5341
        %v5343 = vpop.f32.mrf.mxu0
        %5344 = vmatprep.mubr.f32.mxu0 0.0
        %5345 = vmatmul.mubr.f32.gmra.mxu0 %v5250
        %v5346 = vpop.f32.mrf.mxu0
        %v5347 = vadd.f32 %v5241, %v5346
        %v5348 = vpop.f32.mrf.mxu0
        %5349 = vmatprep.mubr.f32.mxu0 0.0
        %5350 = vmatmul.mubr.f32.gmra.mxu0 %v5253
        %v5351 = vpop.f32.mrf.mxu0
        %v5352 = vadd.f32 %v5241, %v5351
        %v5353 = vpop.f32.mrf.mxu0
        %5354 = vmatprep.mubr.f32.mxu0 0.0
        %5355 = vmatmul.mubr.f32.gmra.mxu0 %v5256
        %v5356 = vpop.f32.mrf.mxu0
        %v5357 = vadd.f32 %v5241, %v5356
        %v5358 = vpop.f32.mrf.mxu0
        %5359 = vmatprep.mubr.f32.mxu0 0.0
        %5360 = vmatmul.mubr.f32.gmra.mxu0 %v5259
        %v5361 = vpop.f32.mrf.mxu0
        %v5362 = vadd.f32 %v5241, %v5361
        %v5363 = vpop.f32.mrf.mxu0
        %5364 = vmatprep.mubr.f32.mxu0 0.0
        %5365 = vmatmul.mubr.f32.gmra.mxu0 %v5262
        %v5366 = vpop.f32.mrf.mxu0
        %v5367 = vadd.f32 %v5241, %v5366
        %v5368 = vpop.f32.mrf.mxu0
        %5369 = vmatprep.mubr.f32.mxu0 0.0
        %5370 = vmatmul.mubr.f32.gmra.mxu0 %v5265
        %v5371 = vpop.f32.mrf.mxu0
        %v5372 = vadd.f32 %v5241, %v5371
        %v5373 = vpop.f32.mrf.mxu0
        %5374 = vdwg.mxu0
        %v5375 = vadd.f32 %v5211, %v5337
        %v5376 = vadd.f32 %v5212, %v5342
        %v5377 = vadd.f32 %v5213, %v5347
        %v5378 = vadd.f32 %v5214, %v5352
        %v5379 = vadd.f32 %v5215, %v5357
        %v5380 = vadd.f32 %v5216, %v5362
        %v5381 = vadd.f32 %v5217, %v5367
        %v5382 = vadd.f32 %v5218, %v5372
        %5383 = vst.msk [vmem:[%s325] sm:$0xff] %vm387, %v5375
        %5384 = vst.msk [vmem:[%s325 + $0x8] sm:$0xff] %vm387, %v5376
        %5385 = vst.msk [vmem:[%s325 + $0x10] sm:$0xff] %vm387, %v5377
        %5386 = vst.msk [vmem:[%s325 + $0x18] sm:$0xff] %vm387, %v5378
        %5387 = vst.msk [vmem:[%s325 + $0x20] sm:$0xff] %vm387, %v5379
        %5388 = vst.msk [vmem:[%s325 + $0x28] sm:$0xff] %vm387, %v5380
        %5389 = vst.msk [vmem:[%s325 + $0x30] sm:$0xff] %vm387, %v5381
        %5390 = vst.msk [vmem:[%s325 + $0x38] sm:$0xff] %vm387, %v5382
        %s5391 = sand.u32 %s225, 1
        %s5392 = scalar_lea.sflag [#allocation5], %s5391
        %s5393 = sand.u32 %s225, 1
        %s5394 = smul.addr %s5393, 64
        %s5395 = scalar_lea.vmem [#allocation4], %s5394
        // Predicated region
        $region57: #{tpu_custom_call.1} parent=55 // pred_check
          %p5396 = pneg %p235
        $region58: #{tpu_custom_call.1} parent=55 // pred_check_branch
          %5398 = sbr.rel (%p5396) target = $region60
        $region59: #{tpu_custom_call.1} parent=55 // pred_region
          %s5400 = ssub.s32 1024, 1024
          %5401 = vsyncadd %s5392, %s5400
          %s5402 = smul.addr %s23, 8
          %s5403 = smul.addr %s5402, 128
          %s5404 = scalar_lea.hbm %s9, %s5403
          %s5405 = sshll.u32 %s5395, 4
          %s5406 = int_to_ptr.vmem [resolvable:$true] %s5405
          %5411 = dma.vmem_to_hbm [thread:$0]  %s5406, 1024, %s5404, %s5392, 128, 128, 8
        $region60: #{tpu_custom_call.1} parent=55 // pred_fallthru
          _
      $region56: #{tpu_custom_call.1} parent=5 // pred_fallthru
        _
      %p5412 = scmp.le.s32.totalorder 2, %s18
      // Predicated region
      $region61: #{tpu_custom_call.1} parent=5 // pred_check
        %p5413 = pneg %p5412
      $region62: #{tpu_custom_call.1} parent=5 // pred_check_branch
        %5415 = sbr.rel (%p5413) target = $region64
      $region63: #{tpu_custom_call.1} parent=5 // pred_region
        %s5416 = ssub.s32 %s18, 2
        // Predicated region
        $region65: #{tpu_custom_call.1} parent=63 // pred_check
          %p5417 = pneg %p241
        $region66: #{tpu_custom_call.1} parent=63 // pred_check_branch
          %5419 = sbr.rel (%p5417) target = $region68
        $region67: #{tpu_custom_call.1} parent=63 // pred_region
          %s5420 = sand.u32 %s226, 1
          %s5421 = scalar_lea.sflag [#allocation5], %s5420
          %s5422 = sand.u32 %s226, 1
          %s5423 = smul.addr %s5422, 64
          %s5424 = scalar_lea.vmem [#allocation4], %s5423
          %5425 = dma.done %s5421, 1024
        $region68: #{tpu_custom_call.1} parent=63 // pred_fallthru
          _
      $region64: #{tpu_custom_call.1} parent=5 // pred_fallthru
        _
    $region6: #{tpu_custom_call.1} parent=1 // loop_footer
      %s22 = sadd.s32 1, %s18
    $region7: #{tpu_custom_call.1} parent=1 // loop_footer_branch
      %17 = sbr.rel target = $region3
    $region8: #{tpu_custom_call.1} parent=1 // loop_exit
      _
    %5426 = vsyncpa [#allocation5], 1
    %s5427 = scalar_lea.sflag [#allocation5], 1
    %5428 = vsyncpa %s5427, 1

</llo_original>
